<compile_context>
chip_gen: v7x
topology: tpu7x:2x2x1
jax: 0.10.0
libtpu: 0.0.40
codegen_flags: <defaults>
</compile_context>

<pallas_src>
import jax
import jax.numpy as jnp
from jax.experimental import pallas as pl
from jax.experimental.pallas import tpu as pltpu

# ----- scaled-down ViT config (real model: depth=40, D=1408, heads=16, img=224, patch=14) -----
B = 2                    # batch
C = 3                    # input channels
IMG = 16                 # image height/width
PATCH = 4                # patch size
N = (IMG // PATCH) ** 2  # 16 patch tokens
S = N + 1                # 17 = patches + CLS
SP = 24                  # padded sequence length (multiple of 8 sublanes)
P = C * PATCH * PATCH    # 48 flattened patch dim
D = 32                   # hidden dim
NH = 4                   # heads
HD = D // NH             # head dim (8)
DM = 4 * D               # mlp hidden (128)
DEPTH = 2                # transformer blocks
T = B * SP               # fused token rows (48)
ATTN_SCALE = 1.0 / (HD ** 0.5)
NEG_INF = -1e30

# ----- packed small-vector slab layout: (VEC_ROWS, 128) f32, static row indexing in-kernel -----
VEC_LANES = 128
ROW_POS = 0              # rows 0..SP-1 : positional embedding (CLS position at row N)
ROW_CLS = SP             # 24
ROW_PATCH_B = SP + 1     # 25
ROW_NPRE_G = SP + 2      # 26
ROW_NPRE_B = SP + 3      # 27
ROW_NF_G = SP + 4        # 28
ROW_NF_B = SP + 5        # 29
ROW_LAYER0 = 32          # per-layer blocks of 8 rows (8-aligned)
L_LN1_G, L_LN1_B, L_LN2_G, L_LN2_B, L_PROJ_B, L_FC2_B, L_QKV_B, L_FC1_B = range(8)
VEC_ROWS = ROW_LAYER0 + 8 * DEPTH   # 48


def _layernorm(x, g, b, eps=1e-6):
    mu = jnp.mean(x, axis=-1, keepdims=True)
    var = jnp.mean((x - mu) ** 2, axis=-1, keepdims=True)
    return (x - mu) * jax.lax.rsqrt(var + eps) * g + b


def vit_kernel(patches_ref, vecs_ref, wpatch_ref, wqkv_ref, wproj_ref,
               wfc1_ref, wfc2_ref, out_ref):
    f32 = jnp.float32
    bf16 = jnp.bfloat16

    V = vecs_ref[...]                                   # (48, 128) f32: all small vectors

    def vrow(r, width=D):
        return V[r:r + 1, :width]                       # (1, width), static slice

    # ---- patch embedding: one (B*N, P) @ (P, D) matmul for the whole batch ----
    xp = jnp.dot(patches_ref[...], wpatch_ref[...],
                 preferred_element_type=f32) + vrow(ROW_PATCH_B)        # (B*N, D)
    xp3 = xp.reshape(B, N, D)

    # aligned CLS / padding tail: tail row 0 is CLS, rows 1..SP-N-1 are zero padding
    tail_rows = jax.lax.broadcasted_iota(jnp.int32, (B, SP - N, D), 1)
    tail = jnp.where(tail_rows == 0, vrow(ROW_CLS), 0.0)                # (B, 8, D)
    x = jnp.concatenate([xp3, tail], axis=1) + V[ROW_POS:ROW_POS + SP, :D]
    x = x.reshape(T, D)                                                 # fused (48, 32)
    x = _layernorm(x, vrow(ROW_NPRE_G), vrow(ROW_NPRE_B))               # norm_pre (CLIP ViT)

    # additive key mask: padded key columns (>= S) get -inf; same for every (batch, head)
    key_col = jax.lax.broadcasted_iota(jnp.int32, (1, SP, SP), 2)
    mask_bias = jnp.where(key_col < S, 0.0, NEG_INF).astype(f32)        # (1, SP, SP)

    # ---- transformer blocks (pre-LN: x += attn(ln1(x)); x += mlp(ln2(x))) ----
    for d in range(DEPTH):
        base = ROW_LAYER0 + 8 * d

        # attention: single fused QKV matmul (attn scale already folded into Q weight/bias)
        h = _layernorm(x, vrow(base + L_LN1_G), vrow(base + L_LN1_B)).astype(bf16)
        qkv = jnp.dot(h, wqkv_ref[d], preferred_element_type=f32) \
            + vrow(base + L_QKV_B, 3 * D)                               # (T, 3D) f32

        head_outs = []
        for n in range(NH):
            qn = qkv[:, n * HD:(n + 1) * HD].reshape(B, SP, HD).astype(bf16)
            kn = qkv[:, D + n * HD:D + (n + 1) * HD].reshape(B, SP, HD).astype(bf16)
            vn = qkv[:, 2 * D + n * HD:2 * D + (n + 1) * HD].reshape(B, SP, HD).astype(bf16)
            sc = jnp.einsum('bqh,bkh->bqk', qn, kn,
                            preferred_element_type=f32) + mask_bias     # (B, SP, SP)
            sc = sc - jnp.max(sc, axis=-1, keepdims=True)
            e = jnp.exp(sc)
            p = e * pl.reciprocal(jnp.sum(e, axis=-1, keepdims=True), approx=True)
            on = jnp.einsum('bqk,bkh->bqh', p.astype(bf16), vn,
                            preferred_element_type=f32)                 # (B, SP, HD)
            head_outs.append(on.reshape(T, HD))

        o = jnp.concatenate(head_outs, axis=-1).astype(bf16)            # (T, D) lane concat
        x = x + jnp.dot(o, wproj_ref[d], preferred_element_type=f32) \
              + vrow(base + L_PROJ_B)                                   # single fused proj

        # MLP
        h2 = _layernorm(x, vrow(base + L_LN2_G), vrow(base + L_LN2_B)).astype(bf16)
        h2 = jnp.dot(h2, wfc1_ref[d], preferred_element_type=f32) + vrow(base + L_FC1_B, DM)
        # TODO(synk): torch nn.GELU default is exact (erf); tanh-approx used for robust Mosaic lowering.
        h2 = jax.nn.gelu(h2, approximate=True).astype(bf16)
        x = x + jnp.dot(h2, wfc2_ref[d], preferred_element_type=f32) + vrow(base + L_FC2_B)

    # final LayerNorm; store the flat padded (T, D) slab (depad + CLS drop in the wrapper)
    x = _layernorm(x, vrow(ROW_NF_G), vrow(ROW_NF_B))
    out_ref[...] = x


def init_params(key):
    ks = jax.random.split(key, 8)

    def nrm(k, shape, std=0.02):
        return jax.random.normal(k, shape, jnp.float32) * std

    # NOTE: CLS position row lives at index N here (timm puts it at row 0); permute pos rows in
    # the wrapper if real pretrained weights are ever loaded.
    return {
        "cls": nrm(ks[0], (1, D)),
        "pos": nrm(ks[1], (S, D)),
        "patch_w": nrm(ks[2], (P, D)),
        "patch_b": jnp.zeros((1, D), jnp.float32),
        "npre_g": jnp.ones((1, D), jnp.float32),
        "npre_b": jnp.zeros((1, D), jnp.float32),
        "ln1_g": jnp.ones((DEPTH, D), jnp.float32),
        "ln1_b": jnp.zeros((DEPTH, D), jnp.float32),
        "qkv_w": nrm(ks[3], (DEPTH, D, 3 * D)),      # columns ordered [Q(nh,hd) | K | V]
        "qkv_b": jnp.zeros((DEPTH, 3 * D), jnp.float32),
        "proj_w": nrm(ks[4], (DEPTH, D, D)),         # input rows ordered head-major (nh, hd)
        "proj_b": jnp.zeros((DEPTH, D), jnp.float32),
        "ln2_g": jnp.ones((DEPTH, D), jnp.float32),
        "ln2_b": jnp.zeros((DEPTH, D), jnp.float32),
        "fc1_w": nrm(ks[5], (DEPTH, D, DM)),
        "fc1_b": jnp.zeros((DEPTH, DM), jnp.float32),
        "fc2_w": nrm(ks[6], (DEPTH, DM, D)),
        "fc2_b": jnp.zeros((DEPTH, D), jnp.float32),
        "nf_g": jnp.ones((1, D), jnp.float32),
        "nf_b": jnp.zeros((1, D), jnp.float32),
    }


def _pack_small_vectors(p):
    """All 1-row parameters packed into one lane-dense (VEC_ROWS, 128) f32 slab."""
    vecs = jnp.zeros((VEC_ROWS, VEC_LANES), jnp.float32)
    pos = jnp.concatenate([p["pos"], jnp.zeros((SP - S, D), jnp.float32)], axis=0)
    vecs = vecs.at[ROW_POS:ROW_POS + SP, :D].set(pos)
    vecs = vecs.at[ROW_CLS, :D].set(p["cls"][0])
    vecs = vecs.at[ROW_PATCH_B, :D].set(p["patch_b"][0])
    vecs = vecs.at[ROW_NPRE_G, :D].set(p["npre_g"][0])
    vecs = vecs.at[ROW_NPRE_B, :D].set(p["npre_b"][0])
    vecs = vecs.at[ROW_NF_G, :D].set(p["nf_g"][0])
    vecs = vecs.at[ROW_NF_B, :D].set(p["nf_b"][0])
    for d in range(DEPTH):
        base = ROW_LAYER0 + 8 * d
        qkv_b = p["qkv_b"][d].at[:D].multiply(ATTN_SCALE)   # fold attention scale into Q bias
        vecs = vecs.at[base + L_LN1_G, :D].set(p["ln1_g"][d])
        vecs = vecs.at[base + L_LN1_B, :D].set(p["ln1_b"][d])
        vecs = vecs.at[base + L_LN2_G, :D].set(p["ln2_g"][d])
        vecs = vecs.at[base + L_LN2_B, :D].set(p["ln2_b"][d])
        vecs = vecs.at[base + L_PROJ_B, :D].set(p["proj_b"][d])
        vecs = vecs.at[base + L_FC2_B, :D].set(p["fc2_b"][d])
        vecs = vecs.at[base + L_QKV_B, :3 * D].set(qkv_b)
        vecs = vecs.at[base + L_FC1_B, :DM].set(p["fc1_b"][d])
    return vecs


@jax.jit
def encoder_forward(x, params):
    """x: (B, C, IMG, IMG) float32 (NCHW, like the PyTorch module).
    Returns (B, N, D): forward_features with the CLS token dropped."""
    Bx, Cx, H, W = x.shape
    gh, gw = H // PATCH, W // PATCH
    # glue: extract patches, flatten in (C, ph, pw) order (== Conv2d weight flattening)
    patches = x.reshape(Bx, Cx, gh, PATCH, gw, PATCH)
    patches = patches.transpose(0, 2, 4, 1, 3, 5).reshape(Bx * gh * gw, Cx * PATCH * PATCH)
    patches = patches.astype(jnp.bfloat16)              # bf16 MXU operand (halves the DMA)

    vecs = _pack_small_vectors(params)
    qkv_w = params["qkv_w"].at[:, :, :D].multiply(ATTN_SCALE)   # fold attention scale into Q weight
    operands = (
        patches,
        vecs,
        params["patch_w"].astype(jnp.bfloat16),
        qkv_w.astype(jnp.bfloat16),
        params["proj_w"].astype(jnp.bfloat16),
        params["fc1_w"].astype(jnp.bfloat16),
        params["fc2_w"].astype(jnp.bfloat16),
    )

    vmem = pl.BlockSpec(memory_space=pltpu.MemorySpace.VMEM)
    out = pl.pallas_call(
        vit_kernel,
        out_shape=jax.ShapeDtypeStruct((T, D), jnp.float32),
        in_specs=[vmem] * len(operands),
        out_specs=vmem,
    )(*operands)

    # drop padding rows and the CLS token (kept at the aligned row N) outside the kernel
    return out.reshape(Bx, SP, D)[:, :N, :]


if __name__ == "__main__":
    key = jax.random.PRNGKey(0)
    kx, kp = jax.random.split(key)
    x = jax.random.normal(kx, (B, C, IMG, IMG), jnp.float32)
    params = init_params(kp)

    out = encoder_forward(x, params)
    out = jax.block_until_ready(out)
    assert out.shape == (B, N, D), out.shape
    assert bool(jnp.all(jnp.isfinite(out)))
    print("KERNEL_OK")
</pallas_src>

<mosaic_0001>
module attributes {stable_mosaic.version = 11 : i64} {
  func.func @vit_kernel(%arg0: memref<32x48xbf16, #tpu.memory_space<vmem>>, %arg1: memref<48x128xf32, #tpu.memory_space<vmem>>, %arg2: memref<48x32xbf16, #tpu.memory_space<vmem>>, %arg3: memref<2x32x96xbf16, #tpu.memory_space<vmem>>, %arg4: memref<2x32x32xbf16, #tpu.memory_space<vmem>>, %arg5: memref<2x32x128xbf16, #tpu.memory_space<vmem>>, %arg6: memref<2x128x32xbf16, #tpu.memory_space<vmem>>, %arg7: memref<48x32xf32, #tpu.memory_space<vmem>>) attributes {dimension_semantics = [], scalar_prefetch = 0 : i64, scratch_operands = 0 : i64, tpu.core_type = #tpu.core_type<tc>} {
    %c0 = arith.constant 0 : index
    %c0_0 = arith.constant 0 : index
    %0 = vector.load %arg1[%c0, %c0_0] : memref<48x128xf32, #tpu.memory_space<vmem>>, vector<48x128xf32>
    %c0_1 = arith.constant 0 : index
    %c0_2 = arith.constant 0 : index
    %1 = vector.load %arg0[%c0_1, %c0_2] : memref<32x48xbf16, #tpu.memory_space<vmem>>, vector<32x48xbf16>
    %c0_3 = arith.constant 0 : index
    %c0_4 = arith.constant 0 : index
    %2 = vector.load %arg2[%c0_3, %c0_4] : memref<48x32xbf16, #tpu.memory_space<vmem>>, vector<48x32xbf16>
    %cst = arith.constant dense<0.000000e+00> : vector<32x32xf32>
    %3 = tpu.matmul %1, %2, %cst {dimension_numbers = #tpu.dot_dimension_numbers<[1], [0], [0], [1], [0, 0, 1, 1], [], []>} : vector<32x48xbf16>, vector<48x32xbf16>, vector<32x32xf32> -> vector<32x32xf32>
    %4 = vector.extract_strided_slice %0 {offsets = [25, 0], sizes = [1, 32], strides = [1, 1]} : vector<48x128xf32> to vector<1x32xf32>
    %5 = vector.broadcast %4 : vector<1x32xf32> to vector<32x32xf32>
    %6 = arith.addf %3, %5 : vector<32x32xf32>
    %7 = vector.shape_cast %6 : vector<32x32xf32> to vector<2x16x32xf32>
    %8 = tpu.iota {dimensions = array<i32: 1>} : vector<2x8x32xi32>
    %c0_i32 = arith.constant 0 : i32
    %9 = vector.broadcast %c0_i32 : i32 to vector<2x8x32xi32>
    %10 = arith.cmpi eq, %8, %9 : vector<2x8x32xi32>
    %11 = vector.extract_strided_slice %0 {offsets = [24, 0], sizes = [1, 32], strides = [1, 1]} : vector<48x128xf32> to vector<1x32xf32>
    %cst_5 = arith.constant 0.000000e+00 : f32
    %12 = vector.shape_cast %11 : vector<1x32xf32> to vector<1x1x32xf32>
    %13 = vector.broadcast %12 : vector<1x1x32xf32> to vector<2x8x32xf32>
    %14 = vector.broadcast %cst_5 : f32 to vector<2x8x32xf32>
    %15 = arith.select %10, %13, %14 : vector<2x8x32xi1>, vector<2x8x32xf32>
    %16 = tpu.concatenate %7, %15 in 1 : vector<2x16x32xf32>, vector<2x8x32xf32> -> vector<2x24x32xf32>
    %17 = vector.extract_strided_slice %0 {offsets = [0, 0], sizes = [24, 32], strides = [1, 1]} : vector<48x128xf32> to vector<24x32xf32>
    %18 = vector.shape_cast %17 : vector<24x32xf32> to vector<1x24x32xf32>
    %19 = vector.broadcast %18 : vector<1x24x32xf32> to vector<2x24x32xf32>
    %20 = arith.addf %16, %19 : vector<2x24x32xf32>
    %21 = vector.shape_cast %20 : vector<2x24x32xf32> to vector<48x32xf32>
    %22 = vector.extract_strided_slice %0 {offsets = [26, 0], sizes = [1, 32], strides = [1, 1]} : vector<48x128xf32> to vector<1x32xf32>
    %23 = vector.extract_strided_slice %0 {offsets = [27, 0], sizes = [1, 32], strides = [1, 1]} : vector<48x128xf32> to vector<1x32xf32>
    %cst_6 = arith.constant dense<0.000000e+00> : vector<48xf32>
    %24 = vector.multi_reduction <add>, %21, %cst_6 [1] : vector<48x32xf32> to vector<48xf32>
    %25 = vector.shape_cast %24 : vector<48xf32> to vector<48x1xf32>
    %cst_7 = arith.constant 3.200000e+01 : f32
    %26 = vector.broadcast %cst_7 : f32 to vector<48x1xf32>
    %27 = arith.divf %25, %26 : vector<48x1xf32>
    %28 = vector.broadcast %27 : vector<48x1xf32> to vector<48x32xf32>
    %29 = arith.subf %21, %28 : vector<48x32xf32>
    %30 = arith.mulf %29, %29 : vector<48x32xf32>
    %cst_8 = arith.constant dense<0.000000e+00> : vector<48xf32>
    %31 = vector.multi_reduction <add>, %30, %cst_8 [1] : vector<48x32xf32> to vector<48xf32>
    %32 = vector.shape_cast %31 : vector<48xf32> to vector<48x1xf32>
    %cst_9 = arith.constant 3.200000e+01 : f32
    %33 = vector.broadcast %cst_9 : f32 to vector<48x1xf32>
    %34 = arith.divf %32, %33 : vector<48x1xf32>
    %35 = vector.broadcast %27 : vector<48x1xf32> to vector<48x32xf32>
    %36 = arith.subf %21, %35 : vector<48x32xf32>
    %cst_10 = arith.constant 9.99999997E-7 : f32
    %37 = vector.broadcast %cst_10 : f32 to vector<48x1xf32>
    %38 = arith.addf %34, %37 : vector<48x1xf32>
    %39 = math.rsqrt %38 : vector<48x1xf32>
    %40 = vector.broadcast %39 : vector<48x1xf32> to vector<48x32xf32>
    %41 = arith.mulf %36, %40 : vector<48x32xf32>
    %42 = vector.broadcast %22 : vector<1x32xf32> to vector<48x32xf32>
    %43 = arith.mulf %41, %42 : vector<48x32xf32>
    %44 = vector.broadcast %23 : vector<1x32xf32> to vector<48x32xf32>
    %45 = arith.addf %43, %44 : vector<48x32xf32>
    %46 = tpu.iota {dimensions = array<i32: 2>} : vector<1x24x24xi32>
    %c17_i32 = arith.constant 17 : i32
    %47 = vector.broadcast %c17_i32 : i32 to vector<1x24x24xi32>
    %48 = arith.cmpi slt, %46, %47 : vector<1x24x24xi32>
    %cst_11 = arith.constant 0.000000e+00 : f32
    %cst_12 = arith.constant -1.000000e+30 : f32
    %49 = vector.broadcast %cst_11 : f32 to vector<1x24x24xf32>
    %50 = vector.broadcast %cst_12 : f32 to vector<1x24x24xf32>
    %51 = arith.select %48, %49, %50 : vector<1x24x24xi1>, vector<1x24x24xf32>
    %52 = vector.extract_strided_slice %0 {offsets = [32, 0], sizes = [1, 32], strides = [1, 1]} : vector<48x128xf32> to vector<1x32xf32>
    %53 = vector.extract_strided_slice %0 {offsets = [33, 0], sizes = [1, 32], strides = [1, 1]} : vector<48x128xf32> to vector<1x32xf32>
    %cst_13 = arith.constant dense<0.000000e+00> : vector<48xf32>
    %54 = vector.multi_reduction <add>, %45, %cst_13 [1] : vector<48x32xf32> to vector<48xf32>
    %55 = vector.shape_cast %54 : vector<48xf32> to vector<48x1xf32>
    %cst_14 = arith.constant 3.200000e+01 : f32
    %56 = vector.broadcast %cst_14 : f32 to vector<48x1xf32>
    %57 = arith.divf %55, %56 : vector<48x1xf32>
    %58 = vector.broadcast %57 : vector<48x1xf32> to vector<48x32xf32>
    %59 = arith.subf %45, %58 : vector<48x32xf32>
    %60 = arith.mulf %59, %59 : vector<48x32xf32>
    %cst_15 = arith.constant dense<0.000000e+00> : vector<48xf32>
    %61 = vector.multi_reduction <add>, %60, %cst_15 [1] : vector<48x32xf32> to vector<48xf32>
    %62 = vector.shape_cast %61 : vector<48xf32> to vector<48x1xf32>
    %cst_16 = arith.constant 3.200000e+01 : f32
    %63 = vector.broadcast %cst_16 : f32 to vector<48x1xf32>
    %64 = arith.divf %62, %63 : vector<48x1xf32>
    %65 = vector.broadcast %57 : vector<48x1xf32> to vector<48x32xf32>
    %66 = arith.subf %45, %65 : vector<48x32xf32>
    %cst_17 = arith.constant 9.99999997E-7 : f32
    %67 = vector.broadcast %cst_17 : f32 to vector<48x1xf32>
    %68 = arith.addf %64, %67 : vector<48x1xf32>
    %69 = math.rsqrt %68 : vector<48x1xf32>
    %70 = vector.broadcast %69 : vector<48x1xf32> to vector<48x32xf32>
    %71 = arith.mulf %66, %70 : vector<48x32xf32>
    %72 = vector.broadcast %52 : vector<1x32xf32> to vector<48x32xf32>
    %73 = arith.mulf %71, %72 : vector<48x32xf32>
    %74 = vector.broadcast %53 : vector<1x32xf32> to vector<48x32xf32>
    %75 = arith.addf %73, %74 : vector<48x32xf32>
    %76 = arith.truncf %75 : vector<48x32xf32> to vector<48x32xbf16>
    %c0_18 = arith.constant 0 : index
    %c0_19 = arith.constant 0 : index
    %c0_20 = arith.constant 0 : index
    %77 = vector.load %arg3[%c0_18, %c0_19, %c0_20] : memref<2x32x96xbf16, #tpu.memory_space<vmem>>, vector<1x32x96xbf16>
    %78 = vector.shape_cast %77 : vector<1x32x96xbf16> to vector<32x96xbf16>
    %cst_21 = arith.constant dense<0.000000e+00> : vector<48x96xf32>
    %79 = tpu.matmul %76, %78, %cst_21 {dimension_numbers = #tpu.dot_dimension_numbers<[1], [0], [0], [1], [0, 0, 1, 1], [], []>} : vector<48x32xbf16>, vector<32x96xbf16>, vector<48x96xf32> -> vector<48x96xf32>
    %80 = vector.extract_strided_slice %0 {offsets = [38, 0], sizes = [1, 96], strides = [1, 1]} : vector<48x128xf32> to vector<1x96xf32>
    %81 = vector.broadcast %80 : vector<1x96xf32> to vector<48x96xf32>
    %82 = arith.addf %79, %81 : vector<48x96xf32>
    %83 = vector.extract_strided_slice %82 {offsets = [0, 0], sizes = [48, 8], strides = [1, 1]} : vector<48x96xf32> to vector<48x8xf32>
    %84 = vector.shape_cast %83 : vector<48x8xf32> to vector<2x24x8xf32>
    %85 = arith.truncf %84 : vector<2x24x8xf32> to vector<2x24x8xbf16>
    %86 = vector.extract_strided_slice %82 {offsets = [0, 32], sizes = [48, 8], strides = [1, 1]} : vector<48x96xf32> to vector<48x8xf32>
    %87 = vector.shape_cast %86 : vector<48x8xf32> to vector<2x24x8xf32>
    %88 = arith.truncf %87 : vector<2x24x8xf32> to vector<2x24x8xbf16>
    %89 = vector.extract_strided_slice %82 {offsets = [0, 64], sizes = [48, 8], strides = [1, 1]} : vector<48x96xf32> to vector<48x8xf32>
    %90 = vector.shape_cast %89 : vector<48x8xf32> to vector<2x24x8xf32>
    %91 = arith.truncf %90 : vector<2x24x8xf32> to vector<2x24x8xbf16>
    "tpu.trace_start"() <{level = 10 : i32, message = "bqh,bkh->bqk"}> : () -> ()
    %cst_22 = arith.constant dense<0.000000e+00> : vector<2x24x24xf32>
    %92 = tpu.matmul %85, %88, %cst_22 {dimension_numbers = #tpu.dot_dimension_numbers<[2], [2], [1], [1], [0, 0, 0, 1, 1, 1], [0], [0]>} : vector<2x24x8xbf16>, vector<2x24x8xbf16>, vector<2x24x24xf32> -> vector<2x24x24xf32>
    "tpu.trace_stop"() : () -> ()
    %93 = vector.broadcast %51 : vector<1x24x24xf32> to vector<2x24x24xf32>
    %94 = arith.addf %92, %93 : vector<2x24x24xf32>
    %cst_23 = arith.constant dense<0xFF800000> : vector<2x24xf32>
    %95 = vector.multi_reduction <maximumf>, %94, %cst_23 [2] : vector<2x24x24xf32> to vector<2x24xf32>
    %96 = vector.shape_cast %95 : vector<2x24xf32> to vector<2x24x1xf32>
    %97 = vector.broadcast %96 : vector<2x24x1xf32> to vector<2x24x24xf32>
    %98 = arith.subf %94, %97 : vector<2x24x24xf32>
    %99 = math.exp %98 : vector<2x24x24xf32>
    %cst_24 = arith.constant dense<0.000000e+00> : vector<2x24xf32>
    %100 = vector.multi_reduction <add>, %99, %cst_24 [2] : vector<2x24x24xf32> to vector<2x24xf32>
    %101 = vector.shape_cast %100 : vector<2x24xf32> to vector<2x24x1xf32>
    %102 = tpu.reciprocal %101 {approx = true} : vector<2x24x1xf32> -> vector<2x24x1xf32>
    %103 = vector.broadcast %102 : vector<2x24x1xf32> to vector<2x24x24xf32>
    %104 = arith.mulf %99, %103 : vector<2x24x24xf32>
    %105 = arith.truncf %104 : vector<2x24x24xf32> to vector<2x24x24xbf16>
    "tpu.trace_start"() <{level = 10 : i32, message = "bqk,bkh->bqh"}> : () -> ()
    %cst_25 = arith.constant dense<0.000000e+00> : vector<2x24x8xf32>
    %106 = tpu.matmul %105, %91, %cst_25 {dimension_numbers = #tpu.dot_dimension_numbers<[2], [1], [1], [2], [0, 0, 0, 1, 1, 2], [0], [0]>} : vector<2x24x24xbf16>, vector<2x24x8xbf16>, vector<2x24x8xf32> -> vector<2x24x8xf32>
    "tpu.trace_stop"() : () -> ()
    %107 = vector.shape_cast %106 : vector<2x24x8xf32> to vector<48x8xf32>
    %108 = vector.extract_strided_slice %82 {offsets = [0, 8], sizes = [48, 8], strides = [1, 1]} : vector<48x96xf32> to vector<48x8xf32>
    %109 = vector.shape_cast %108 : vector<48x8xf32> to vector<2x24x8xf32>
    %110 = arith.truncf %109 : vector<2x24x8xf32> to vector<2x24x8xbf16>
    %111 = vector.extract_strided_slice %82 {offsets = [0, 40], sizes = [48, 8], strides = [1, 1]} : vector<48x96xf32> to vector<48x8xf32>
    %112 = vector.shape_cast %111 : vector<48x8xf32> to vector<2x24x8xf32>
    %113 = arith.truncf %112 : vector<2x24x8xf32> to vector<2x24x8xbf16>
    %114 = vector.extract_strided_slice %82 {offsets = [0, 72], sizes = [48, 8], strides = [1, 1]} : vector<48x96xf32> to vector<48x8xf32>
    %115 = vector.shape_cast %114 : vector<48x8xf32> to vector<2x24x8xf32>
    %116 = arith.truncf %115 : vector<2x24x8xf32> to vector<2x24x8xbf16>
    "tpu.trace_start"() <{level = 10 : i32, message = "bqh,bkh->bqk"}> : () -> ()
    %cst_26 = arith.constant dense<0.000000e+00> : vector<2x24x24xf32>
    %117 = tpu.matmul %110, %113, %cst_26 {dimension_numbers = #tpu.dot_dimension_numbers<[2], [2], [1], [1], [0, 0, 0, 1, 1, 1], [0], [0]>} : vector<2x24x8xbf16>, vector<2x24x8xbf16>, vector<2x24x24xf32> -> vector<2x24x24xf32>
    "tpu.trace_stop"() : () -> ()
    %118 = vector.broadcast %51 : vector<1x24x24xf32> to vector<2x24x24xf32>
    %119 = arith.addf %117, %118 : vector<2x24x24xf32>
    %cst_27 = arith.constant dense<0xFF800000> : vector<2x24xf32>
    %120 = vector.multi_reduction <maximumf>, %119, %cst_27 [2] : vector<2x24x24xf32> to vector<2x24xf32>
    %121 = vector.shape_cast %120 : vector<2x24xf32> to vector<2x24x1xf32>
    %122 = vector.broadcast %121 : vector<2x24x1xf32> to vector<2x24x24xf32>
    %123 = arith.subf %119, %122 : vector<2x24x24xf32>
    %124 = math.exp %123 : vector<2x24x24xf32>
    %cst_28 = arith.constant dense<0.000000e+00> : vector<2x24xf32>
    %125 = vector.multi_reduction <add>, %124, %cst_28 [2] : vector<2x24x24xf32> to vector<2x24xf32>
    %126 = vector.shape_cast %125 : vector<2x24xf32> to vector<2x24x1xf32>
    %127 = tpu.reciprocal %126 {approx = true} : vector<2x24x1xf32> -> vector<2x24x1xf32>
    %128 = vector.broadcast %127 : vector<2x24x1xf32> to vector<2x24x24xf32>
    %129 = arith.mulf %124, %128 : vector<2x24x24xf32>
    %130 = arith.truncf %129 : vector<2x24x24xf32> to vector<2x24x24xbf16>
    "tpu.trace_start"() <{level = 10 : i32, message = "bqk,bkh->bqh"}> : () -> ()
    %cst_29 = arith.constant dense<0.000000e+00> : vector<2x24x8xf32>
    %131 = tpu.matmul %130, %116, %cst_29 {dimension_numbers = #tpu.dot_dimension_numbers<[2], [1], [1], [2], [0, 0, 0, 1, 1, 2], [0], [0]>} : vector<2x24x24xbf16>, vector<2x24x8xbf16>, vector<2x24x8xf32> -> vector<2x24x8xf32>
    "tpu.trace_stop"() : () -> ()
    %132 = vector.shape_cast %131 : vector<2x24x8xf32> to vector<48x8xf32>
    %133 = vector.extract_strided_slice %82 {offsets = [0, 16], sizes = [48, 8], strides = [1, 1]} : vector<48x96xf32> to vector<48x8xf32>
    %134 = vector.shape_cast %133 : vector<48x8xf32> to vector<2x24x8xf32>
    %135 = arith.truncf %134 : vector<2x24x8xf32> to vector<2x24x8xbf16>
    %136 = vector.extract_strided_slice %82 {offsets = [0, 48], sizes = [48, 8], strides = [1, 1]} : vector<48x96xf32> to vector<48x8xf32>
    %137 = vector.shape_cast %136 : vector<48x8xf32> to vector<2x24x8xf32>
    %138 = arith.truncf %137 : vector<2x24x8xf32> to vector<2x24x8xbf16>
    %139 = vector.extract_strided_slice %82 {offsets = [0, 80], sizes = [48, 8], strides = [1, 1]} : vector<48x96xf32> to vector<48x8xf32>
    %140 = vector.shape_cast %139 : vector<48x8xf32> to vector<2x24x8xf32>
    %141 = arith.truncf %140 : vector<2x24x8xf32> to vector<2x24x8xbf16>
    "tpu.trace_start"() <{level = 10 : i32, message = "bqh,bkh->bqk"}> : () -> ()
    %cst_30 = arith.constant dense<0.000000e+00> : vector<2x24x24xf32>
    %142 = tpu.matmul %135, %138, %cst_30 {dimension_numbers = #tpu.dot_dimension_numbers<[2], [2], [1], [1], [0, 0, 0, 1, 1, 1], [0], [0]>} : vector<2x24x8xbf16>, vector<2x24x8xbf16>, vector<2x24x24xf32> -> vector<2x24x24xf32>
    "tpu.trace_stop"() : () -> ()
    %143 = vector.broadcast %51 : vector<1x24x24xf32> to vector<2x24x24xf32>
    %144 = arith.addf %142, %143 : vector<2x24x24xf32>
    %cst_31 = arith.constant dense<0xFF800000> : vector<2x24xf32>
    %145 = vector.multi_reduction <maximumf>, %144, %cst_31 [2] : vector<2x24x24xf32> to vector<2x24xf32>
    %146 = vector.shape_cast %145 : vector<2x24xf32> to vector<2x24x1xf32>
    %147 = vector.broadcast %146 : vector<2x24x1xf32> to vector<2x24x24xf32>
    %148 = arith.subf %144, %147 : vector<2x24x24xf32>
    %149 = math.exp %148 : vector<2x24x24xf32>
    %cst_32 = arith.constant dense<0.000000e+00> : vector<2x24xf32>
    %150 = vector.multi_reduction <add>, %149, %cst_32 [2] : vector<2x24x24xf32> to vector<2x24xf32>
    %151 = vector.shape_cast %150 : vector<2x24xf32> to vector<2x24x1xf32>
    %152 = tpu.reciprocal %151 {approx = true} : vector<2x24x1xf32> -> vector<2x24x1xf32>
    %153 = vector.broadcast %152 : vector<2x24x1xf32> to vector<2x24x24xf32>
    %154 = arith.mulf %149, %153 : vector<2x24x24xf32>
    %155 = arith.truncf %154 : vector<2x24x24xf32> to vector<2x24x24xbf16>
    "tpu.trace_start"() <{level = 10 : i32, message = "bqk,bkh->bqh"}> : () -> ()
    %cst_33 = arith.constant dense<0.000000e+00> : vector<2x24x8xf32>
    %156 = tpu.matmul %155, %141, %cst_33 {dimension_numbers = #tpu.dot_dimension_numbers<[2], [1], [1], [2], [0, 0, 0, 1, 1, 2], [0], [0]>} : vector<2x24x24xbf16>, vector<2x24x8xbf16>, vector<2x24x8xf32> -> vector<2x24x8xf32>
    "tpu.trace_stop"() : () -> ()
    %157 = vector.shape_cast %156 : vector<2x24x8xf32> to vector<48x8xf32>
    %158 = vector.extract_strided_slice %82 {offsets = [0, 24], sizes = [48, 8], strides = [1, 1]} : vector<48x96xf32> to vector<48x8xf32>
    %159 = vector.shape_cast %158 : vector<48x8xf32> to vector<2x24x8xf32>
    %160 = arith.truncf %159 : vector<2x24x8xf32> to vector<2x24x8xbf16>
    %161 = vector.extract_strided_slice %82 {offsets = [0, 56], sizes = [48, 8], strides = [1, 1]} : vector<48x96xf32> to vector<48x8xf32>
    %162 = vector.shape_cast %161 : vector<48x8xf32> to vector<2x24x8xf32>
    %163 = arith.truncf %162 : vector<2x24x8xf32> to vector<2x24x8xbf16>
    %164 = vector.extract_strided_slice %82 {offsets = [0, 88], sizes = [48, 8], strides = [1, 1]} : vector<48x96xf32> to vector<48x8xf32>
    %165 = vector.shape_cast %164 : vector<48x8xf32> to vector<2x24x8xf32>
    %166 = arith.truncf %165 : vector<2x24x8xf32> to vector<2x24x8xbf16>
    "tpu.trace_start"() <{level = 10 : i32, message = "bqh,bkh->bqk"}> : () -> ()
    %cst_34 = arith.constant dense<0.000000e+00> : vector<2x24x24xf32>
    %167 = tpu.matmul %160, %163, %cst_34 {dimension_numbers = #tpu.dot_dimension_numbers<[2], [2], [1], [1], [0, 0, 0, 1, 1, 1], [0], [0]>} : vector<2x24x8xbf16>, vector<2x24x8xbf16>, vector<2x24x24xf32> -> vector<2x24x24xf32>
    "tpu.trace_stop"() : () -> ()
    %168 = vector.broadcast %51 : vector<1x24x24xf32> to vector<2x24x24xf32>
    %169 = arith.addf %167, %168 : vector<2x24x24xf32>
    %cst_35 = arith.constant dense<0xFF800000> : vector<2x24xf32>
    %170 = vector.multi_reduction <maximumf>, %169, %cst_35 [2] : vector<2x24x24xf32> to vector<2x24xf32>
    %171 = vector.shape_cast %170 : vector<2x24xf32> to vector<2x24x1xf32>
    %172 = vector.broadcast %171 : vector<2x24x1xf32> to vector<2x24x24xf32>
    %173 = arith.subf %169, %172 : vector<2x24x24xf32>
    %174 = math.exp %173 : vector<2x24x24xf32>
    %cst_36 = arith.constant dense<0.000000e+00> : vector<2x24xf32>
    %175 = vector.multi_reduction <add>, %174, %cst_36 [2] : vector<2x24x24xf32> to vector<2x24xf32>
    %176 = vector.shape_cast %175 : vector<2x24xf32> to vector<2x24x1xf32>
    %177 = tpu.reciprocal %176 {approx = true} : vector<2x24x1xf32> -> vector<2x24x1xf32>
    %178 = vector.broadcast %177 : vector<2x24x1xf32> to vector<2x24x24xf32>
    %179 = arith.mulf %174, %178 : vector<2x24x24xf32>
    %180 = arith.truncf %179 : vector<2x24x24xf32> to vector<2x24x24xbf16>
    "tpu.trace_start"() <{level = 10 : i32, message = "bqk,bkh->bqh"}> : () -> ()
    %cst_37 = arith.constant dense<0.000000e+00> : vector<2x24x8xf32>
    %181 = tpu.matmul %180, %166, %cst_37 {dimension_numbers = #tpu.dot_dimension_numbers<[2], [1], [1], [2], [0, 0, 0, 1, 1, 2], [0], [0]>} : vector<2x24x24xbf16>, vector<2x24x8xbf16>, vector<2x24x8xf32> -> vector<2x24x8xf32>
    "tpu.trace_stop"() : () -> ()
    %182 = vector.shape_cast %181 : vector<2x24x8xf32> to vector<48x8xf32>
    %183 = tpu.concatenate %107, %132, %157, %182 in 1 : vector<48x8xf32>, vector<48x8xf32>, vector<48x8xf32>, vector<48x8xf32> -> vector<48x32xf32>
    %184 = arith.truncf %183 : vector<48x32xf32> to vector<48x32xbf16>
    %c0_38 = arith.constant 0 : index
    %c0_39 = arith.constant 0 : index
    %c0_40 = arith.constant 0 : index
    %185 = vector.load %arg4[%c0_38, %c0_39, %c0_40] : memref<2x32x32xbf16, #tpu.memory_space<vmem>>, vector<1x32x32xbf16>
    %186 = vector.shape_cast %185 : vector<1x32x32xbf16> to vector<32x32xbf16>
    %cst_41 = arith.constant dense<0.000000e+00> : vector<48x32xf32>
    %187 = tpu.matmul %184, %186, %cst_41 {dimension_numbers = #tpu.dot_dimension_numbers<[1], [0], [0], [1], [0, 0, 1, 1], [], []>} : vector<48x32xbf16>, vector<32x32xbf16>, vector<48x32xf32> -> vector<48x32xf32>
    %188 = arith.addf %45, %187 : vector<48x32xf32>
    %189 = vector.extract_strided_slice %0 {offsets = [36, 0], sizes = [1, 32], strides = [1, 1]} : vector<48x128xf32> to vector<1x32xf32>
    %190 = vector.broadcast %189 : vector<1x32xf32> to vector<48x32xf32>
    %191 = arith.addf %188, %190 : vector<48x32xf32>
    %192 = vector.extract_strided_slice %0 {offsets = [34, 0], sizes = [1, 32], strides = [1, 1]} : vector<48x128xf32> to vector<1x32xf32>
    %193 = vector.extract_strided_slice %0 {offsets = [35, 0], sizes = [1, 32], strides = [1, 1]} : vector<48x128xf32> to vector<1x32xf32>
    %cst_42 = arith.constant dense<0.000000e+00> : vector<48xf32>
    %194 = vector.multi_reduction <add>, %191, %cst_42 [1] : vector<48x32xf32> to vector<48xf32>
    %195 = vector.shape_cast %194 : vector<48xf32> to vector<48x1xf32>
    %cst_43 = arith.constant 3.200000e+01 : f32
    %196 = vector.broadcast %cst_43 : f32 to vector<48x1xf32>
    %197 = arith.divf %195, %196 : vector<48x1xf32>
    %198 = vector.broadcast %197 : vector<48x1xf32> to vector<48x32xf32>
    %199 = arith.subf %191, %198 : vector<48x32xf32>
    %200 = arith.mulf %199, %199 : vector<48x32xf32>
    %cst_44 = arith.constant dense<0.000000e+00> : vector<48xf32>
    %201 = vector.multi_reduction <add>, %200, %cst_44 [1] : vector<48x32xf32> to vector<48xf32>
    %202 = vector.shape_cast %201 : vector<48xf32> to vector<48x1xf32>
    %cst_45 = arith.constant 3.200000e+01 : f32
    %203 = vector.broadcast %cst_45 : f32 to vector<48x1xf32>
    %204 = arith.divf %202, %203 : vector<48x1xf32>
    %205 = vector.broadcast %197 : vector<48x1xf32> to vector<48x32xf32>
    %206 = arith.subf %191, %205 : vector<48x32xf32>
    %cst_46 = arith.constant 9.99999997E-7 : f32
    %207 = vector.broadcast %cst_46 : f32 to vector<48x1xf32>
    %208 = arith.addf %204, %207 : vector<48x1xf32>
    %209 = math.rsqrt %208 : vector<48x1xf32>
    %210 = vector.broadcast %209 : vector<48x1xf32> to vector<48x32xf32>
    %211 = arith.mulf %206, %210 : vector<48x32xf32>
    %212 = vector.broadcast %192 : vector<1x32xf32> to vector<48x32xf32>
    %213 = arith.mulf %211, %212 : vector<48x32xf32>
    %214 = vector.broadcast %193 : vector<1x32xf32> to vector<48x32xf32>
    %215 = arith.addf %213, %214 : vector<48x32xf32>
    %216 = arith.truncf %215 : vector<48x32xf32> to vector<48x32xbf16>
    %c0_47 = arith.constant 0 : index
    %c0_48 = arith.constant 0 : index
    %c0_49 = arith.constant 0 : index
    %217 = vector.load %arg5[%c0_47, %c0_48, %c0_49] : memref<2x32x128xbf16, #tpu.memory_space<vmem>>, vector<1x32x128xbf16>
    %218 = vector.shape_cast %217 : vector<1x32x128xbf16> to vector<32x128xbf16>
    %cst_50 = arith.constant dense<0.000000e+00> : vector<48x128xf32>
    %219 = tpu.matmul %216, %218, %cst_50 {dimension_numbers = #tpu.dot_dimension_numbers<[1], [0], [0], [1], [0, 0, 1, 1], [], []>} : vector<48x32xbf16>, vector<32x128xbf16>, vector<48x128xf32> -> vector<48x128xf32>
    %220 = vector.extract_strided_slice %0 {offsets = [39, 0], sizes = [1, 128], strides = [1, 1]} : vector<48x128xf32> to vector<1x128xf32>
    %221 = vector.broadcast %220 : vector<1x128xf32> to vector<48x128xf32>
    %222 = arith.addf %219, %221 : vector<48x128xf32>
    %223 = arith.mulf %222, %222 : vector<48x128xf32>
    %224 = arith.mulf %222, %223 : vector<48x128xf32>
    %cst_51 = arith.constant 4.471500e-02 : f32
    %225 = vector.broadcast %cst_51 : f32 to vector<48x128xf32>
    %226 = arith.mulf %225, %224 : vector<48x128xf32>
    %227 = arith.addf %222, %226 : vector<48x128xf32>
    %cst_52 = arith.constant 0.797884583 : f32
    %228 = vector.broadcast %cst_52 : f32 to vector<48x128xf32>
    %229 = arith.mulf %228, %227 : vector<48x128xf32>
    %230 = math.tanh %229 : vector<48x128xf32>
    %cst_53 = arith.constant 1.000000e+00 : f32
    %231 = vector.broadcast %cst_53 : f32 to vector<48x128xf32>
    %232 = arith.addf %231, %230 : vector<48x128xf32>
    %cst_54 = arith.constant 5.000000e-01 : f32
    %233 = vector.broadcast %cst_54 : f32 to vector<48x128xf32>
    %234 = arith.mulf %233, %232 : vector<48x128xf32>
    %235 = arith.mulf %222, %234 : vector<48x128xf32>
    %236 = arith.truncf %235 : vector<48x128xf32> to vector<48x128xbf16>
    %c0_55 = arith.constant 0 : index
    %c0_56 = arith.constant 0 : index
    %c0_57 = arith.constant 0 : index
    %237 = vector.load %arg6[%c0_55, %c0_56, %c0_57] : memref<2x128x32xbf16, #tpu.memory_space<vmem>>, vector<1x128x32xbf16>
    %238 = vector.shape_cast %237 : vector<1x128x32xbf16> to vector<128x32xbf16>
    %cst_58 = arith.constant dense<0.000000e+00> : vector<48x32xf32>
    %239 = tpu.matmul %236, %238, %cst_58 {dimension_numbers = #tpu.dot_dimension_numbers<[1], [0], [0], [1], [0, 0, 1, 1], [], []>} : vector<48x128xbf16>, vector<128x32xbf16>, vector<48x32xf32> -> vector<48x32xf32>
    %240 = arith.addf %191, %239 : vector<48x32xf32>
    %241 = vector.extract_strided_slice %0 {offsets = [37, 0], sizes = [1, 32], strides = [1, 1]} : vector<48x128xf32> to vector<1x32xf32>
    %242 = vector.broadcast %241 : vector<1x32xf32> to vector<48x32xf32>
    %243 = arith.addf %240, %242 : vector<48x32xf32>
    %244 = vector.extract_strided_slice %0 {offsets = [40, 0], sizes = [1, 32], strides = [1, 1]} : vector<48x128xf32> to vector<1x32xf32>
    %245 = vector.extract_strided_slice %0 {offsets = [41, 0], sizes = [1, 32], strides = [1, 1]} : vector<48x128xf32> to vector<1x32xf32>
    %cst_59 = arith.constant dense<0.000000e+00> : vector<48xf32>
    %246 = vector.multi_reduction <add>, %243, %cst_59 [1] : vector<48x32xf32> to vector<48xf32>
    %247 = vector.shape_cast %246 : vector<48xf32> to vector<48x1xf32>
    %cst_60 = arith.constant 3.200000e+01 : f32
    %248 = vector.broadcast %cst_60 : f32 to vector<48x1xf32>
    %249 = arith.divf %247, %248 : vector<48x1xf32>
    %250 = vector.broadcast %249 : vector<48x1xf32> to vector<48x32xf32>
    %251 = arith.subf %243, %250 : vector<48x32xf32>
    %252 = arith.mulf %251, %251 : vector<48x32xf32>
    %cst_61 = arith.constant dense<0.000000e+00> : vector<48xf32>
    %253 = vector.multi_reduction <add>, %252, %cst_61 [1] : vector<48x32xf32> to vector<48xf32>
    %254 = vector.shape_cast %253 : vector<48xf32> to vector<48x1xf32>
    %cst_62 = arith.constant 3.200000e+01 : f32
    %255 = vector.broadcast %cst_62 : f32 to vector<48x1xf32>
    %256 = arith.divf %254, %255 : vector<48x1xf32>
    %257 = vector.broadcast %249 : vector<48x1xf32> to vector<48x32xf32>
    %258 = arith.subf %243, %257 : vector<48x32xf32>
    %cst_63 = arith.constant 9.99999997E-7 : f32
    %259 = vector.broadcast %cst_63 : f32 to vector<48x1xf32>
    %260 = arith.addf %256, %259 : vector<48x1xf32>
    %261 = math.rsqrt %260 : vector<48x1xf32>
    %262 = vector.broadcast %261 : vector<48x1xf32> to vector<48x32xf32>
    %263 = arith.mulf %258, %262 : vector<48x32xf32>
    %264 = vector.broadcast %244 : vector<1x32xf32> to vector<48x32xf32>
    %265 = arith.mulf %263, %264 : vector<48x32xf32>
    %266 = vector.broadcast %245 : vector<1x32xf32> to vector<48x32xf32>
    %267 = arith.addf %265, %266 : vector<48x32xf32>
    %268 = arith.truncf %267 : vector<48x32xf32> to vector<48x32xbf16>
    %c1 = arith.constant 1 : index
    %c0_64 = arith.constant 0 : index
    %c0_65 = arith.constant 0 : index
    %269 = vector.load %arg3[%c1, %c0_64, %c0_65] : memref<2x32x96xbf16, #tpu.memory_space<vmem>>, vector<1x32x96xbf16>
    %270 = vector.shape_cast %269 : vector<1x32x96xbf16> to vector<32x96xbf16>
    %cst_66 = arith.constant dense<0.000000e+00> : vector<48x96xf32>
    %271 = tpu.matmul %268, %270, %cst_66 {dimension_numbers = #tpu.dot_dimension_numbers<[1], [0], [0], [1], [0, 0, 1, 1], [], []>} : vector<48x32xbf16>, vector<32x96xbf16>, vector<48x96xf32> -> vector<48x96xf32>
    %272 = vector.extract_strided_slice %0 {offsets = [46, 0], sizes = [1, 96], strides = [1, 1]} : vector<48x128xf32> to vector<1x96xf32>
    %273 = vector.broadcast %272 : vector<1x96xf32> to vector<48x96xf32>
    %274 = arith.addf %271, %273 : vector<48x96xf32>
    %275 = vector.extract_strided_slice %274 {offsets = [0, 0], sizes = [48, 8], strides = [1, 1]} : vector<48x96xf32> to vector<48x8xf32>
    %276 = vector.shape_cast %275 : vector<48x8xf32> to vector<2x24x8xf32>
    %277 = arith.truncf %276 : vector<2x24x8xf32> to vector<2x24x8xbf16>
    %278 = vector.extract_strided_slice %274 {offsets = [0, 32], sizes = [48, 8], strides = [1, 1]} : vector<48x96xf32> to vector<48x8xf32>
    %279 = vector.shape_cast %278 : vector<48x8xf32> to vector<2x24x8xf32>
    %280 = arith.truncf %279 : vector<2x24x8xf32> to vector<2x24x8xbf16>
    %281 = vector.extract_strided_slice %274 {offsets = [0, 64], sizes = [48, 8], strides = [1, 1]} : vector<48x96xf32> to vector<48x8xf32>
    %282 = vector.shape_cast %281 : vector<48x8xf32> to vector<2x24x8xf32>
    %283 = arith.truncf %282 : vector<2x24x8xf32> to vector<2x24x8xbf16>
    "tpu.trace_start"() <{level = 10 : i32, message = "bqh,bkh->bqk"}> : () -> ()
    %cst_67 = arith.constant dense<0.000000e+00> : vector<2x24x24xf32>
    %284 = tpu.matmul %277, %280, %cst_67 {dimension_numbers = #tpu.dot_dimension_numbers<[2], [2], [1], [1], [0, 0, 0, 1, 1, 1], [0], [0]>} : vector<2x24x8xbf16>, vector<2x24x8xbf16>, vector<2x24x24xf32> -> vector<2x24x24xf32>
    "tpu.trace_stop"() : () -> ()
    %285 = vector.broadcast %51 : vector<1x24x24xf32> to vector<2x24x24xf32>
    %286 = arith.addf %284, %285 : vector<2x24x24xf32>
    %cst_68 = arith.constant dense<0xFF800000> : vector<2x24xf32>
    %287 = vector.multi_reduction <maximumf>, %286, %cst_68 [2] : vector<2x24x24xf32> to vector<2x24xf32>
    %288 = vector.shape_cast %287 : vector<2x24xf32> to vector<2x24x1xf32>
    %289 = vector.broadcast %288 : vector<2x24x1xf32> to vector<2x24x24xf32>
    %290 = arith.subf %286, %289 : vector<2x24x24xf32>
    %291 = math.exp %290 : vector<2x24x24xf32>
    %cst_69 = arith.constant dense<0.000000e+00> : vector<2x24xf32>
    %292 = vector.multi_reduction <add>, %291, %cst_69 [2] : vector<2x24x24xf32> to vector<2x24xf32>
    %293 = vector.shape_cast %292 : vector<2x24xf32> to vector<2x24x1xf32>
    %294 = tpu.reciprocal %293 {approx = true} : vector<2x24x1xf32> -> vector<2x24x1xf32>
    %295 = vector.broadcast %294 : vector<2x24x1xf32> to vector<2x24x24xf32>
    %296 = arith.mulf %291, %295 : vector<2x24x24xf32>
    %297 = arith.truncf %296 : vector<2x24x24xf32> to vector<2x24x24xbf16>
    "tpu.trace_start"() <{level = 10 : i32, message = "bqk,bkh->bqh"}> : () -> ()
    %cst_70 = arith.constant dense<0.000000e+00> : vector<2x24x8xf32>
    %298 = tpu.matmul %297, %283, %cst_70 {dimension_numbers = #tpu.dot_dimension_numbers<[2], [1], [1], [2], [0, 0, 0, 1, 1, 2], [0], [0]>} : vector<2x24x24xbf16>, vector<2x24x8xbf16>, vector<2x24x8xf32> -> vector<2x24x8xf32>
    "tpu.trace_stop"() : () -> ()
    %299 = vector.shape_cast %298 : vector<2x24x8xf32> to vector<48x8xf32>
    %300 = vector.extract_strided_slice %274 {offsets = [0, 8], sizes = [48, 8], strides = [1, 1]} : vector<48x96xf32> to vector<48x8xf32>
    %301 = vector.shape_cast %300 : vector<48x8xf32> to vector<2x24x8xf32>
    %302 = arith.truncf %301 : vector<2x24x8xf32> to vector<2x24x8xbf16>
    %303 = vector.extract_strided_slice %274 {offsets = [0, 40], sizes = [48, 8], strides = [1, 1]} : vector<48x96xf32> to vector<48x8xf32>
    %304 = vector.shape_cast %303 : vector<48x8xf32> to vector<2x24x8xf32>
    %305 = arith.truncf %304 : vector<2x24x8xf32> to vector<2x24x8xbf16>
    %306 = vector.extract_strided_slice %274 {offsets = [0, 72], sizes = [48, 8], strides = [1, 1]} : vector<48x96xf32> to vector<48x8xf32>
    %307 = vector.shape_cast %306 : vector<48x8xf32> to vector<2x24x8xf32>
    %308 = arith.truncf %307 : vector<2x24x8xf32> to vector<2x24x8xbf16>
    "tpu.trace_start"() <{level = 10 : i32, message = "bqh,bkh->bqk"}> : () -> ()
    %cst_71 = arith.constant dense<0.000000e+00> : vector<2x24x24xf32>
    %309 = tpu.matmul %302, %305, %cst_71 {dimension_numbers = #tpu.dot_dimension_numbers<[2], [2], [1], [1], [0, 0, 0, 1, 1, 1], [0], [0]>} : vector<2x24x8xbf16>, vector<2x24x8xbf16>, vector<2x24x24xf32> -> vector<2x24x24xf32>
    "tpu.trace_stop"() : () -> ()
    %310 = vector.broadcast %51 : vector<1x24x24xf32> to vector<2x24x24xf32>
    %311 = arith.addf %309, %310 : vector<2x24x24xf32>
    %cst_72 = arith.constant dense<0xFF800000> : vector<2x24xf32>
    %312 = vector.multi_reduction <maximumf>, %311, %cst_72 [2] : vector<2x24x24xf32> to vector<2x24xf32>
    %313 = vector.shape_cast %312 : vector<2x24xf32> to vector<2x24x1xf32>
    %314 = vector.broadcast %313 : vector<2x24x1xf32> to vector<2x24x24xf32>
    %315 = arith.subf %311, %314 : vector<2x24x24xf32>
    %316 = math.exp %315 : vector<2x24x24xf32>
    %cst_73 = arith.constant dense<0.000000e+00> : vector<2x24xf32>
    %317 = vector.multi_reduction <add>, %316, %cst_73 [2] : vector<2x24x24xf32> to vector<2x24xf32>
    %318 = vector.shape_cast %317 : vector<2x24xf32> to vector<2x24x1xf32>
    %319 = tpu.reciprocal %318 {approx = true} : vector<2x24x1xf32> -> vector<2x24x1xf32>
    %320 = vector.broadcast %319 : vector<2x24x1xf32> to vector<2x24x24xf32>
    %321 = arith.mulf %316, %320 : vector<2x24x24xf32>
    %322 = arith.truncf %321 : vector<2x24x24xf32> to vector<2x24x24xbf16>
    "tpu.trace_start"() <{level = 10 : i32, message = "bqk,bkh->bqh"}> : () -> ()
    %cst_74 = arith.constant dense<0.000000e+00> : vector<2x24x8xf32>
    %323 = tpu.matmul %322, %308, %cst_74 {dimension_numbers = #tpu.dot_dimension_numbers<[2], [1], [1], [2], [0, 0, 0, 1, 1, 2], [0], [0]>} : vector<2x24x24xbf16>, vector<2x24x8xbf16>, vector<2x24x8xf32> -> vector<2x24x8xf32>
    "tpu.trace_stop"() : () -> ()
    %324 = vector.shape_cast %323 : vector<2x24x8xf32> to vector<48x8xf32>
    %325 = vector.extract_strided_slice %274 {offsets = [0, 16], sizes = [48, 8], strides = [1, 1]} : vector<48x96xf32> to vector<48x8xf32>
    %326 = vector.shape_cast %325 : vector<48x8xf32> to vector<2x24x8xf32>
    %327 = arith.truncf %326 : vector<2x24x8xf32> to vector<2x24x8xbf16>
    %328 = vector.extract_strided_slice %274 {offsets = [0, 48], sizes = [48, 8], strides = [1, 1]} : vector<48x96xf32> to vector<48x8xf32>
    %329 = vector.shape_cast %328 : vector<48x8xf32> to vector<2x24x8xf32>
    %330 = arith.truncf %329 : vector<2x24x8xf32> to vector<2x24x8xbf16>
    %331 = vector.extract_strided_slice %274 {offsets = [0, 80], sizes = [48, 8], strides = [1, 1]} : vector<48x96xf32> to vector<48x8xf32>
    %332 = vector.shape_cast %331 : vector<48x8xf32> to vector<2x24x8xf32>
    %333 = arith.truncf %332 : vector<2x24x8xf32> to vector<2x24x8xbf16>
    "tpu.trace_start"() <{level = 10 : i32, message = "bqh,bkh->bqk"}> : () -> ()
    %cst_75 = arith.constant dense<0.000000e+00> : vector<2x24x24xf32>
    %334 = tpu.matmul %327, %330, %cst_75 {dimension_numbers = #tpu.dot_dimension_numbers<[2], [2], [1], [1], [0, 0, 0, 1, 1, 1], [0], [0]>} : vector<2x24x8xbf16>, vector<2x24x8xbf16>, vector<2x24x24xf32> -> vector<2x24x24xf32>
    "tpu.trace_stop"() : () -> ()
    %335 = vector.broadcast %51 : vector<1x24x24xf32> to vector<2x24x24xf32>
    %336 = arith.addf %334, %335 : vector<2x24x24xf32>
    %cst_76 = arith.constant dense<0xFF800000> : vector<2x24xf32>
    %337 = vector.multi_reduction <maximumf>, %336, %cst_76 [2] : vector<2x24x24xf32> to vector<2x24xf32>
    %338 = vector.shape_cast %337 : vector<2x24xf32> to vector<2x24x1xf32>
    %339 = vector.broadcast %338 : vector<2x24x1xf32> to vector<2x24x24xf32>
    %340 = arith.subf %336, %339 : vector<2x24x24xf32>
    %341 = math.exp %340 : vector<2x24x24xf32>
    %cst_77 = arith.constant dense<0.000000e+00> : vector<2x24xf32>
    %342 = vector.multi_reduction <add>, %341, %cst_77 [2] : vector<2x24x24xf32> to vector<2x24xf32>
    %343 = vector.shape_cast %342 : vector<2x24xf32> to vector<2x24x1xf32>
    %344 = tpu.reciprocal %343 {approx = true} : vector<2x24x1xf32> -> vector<2x24x1xf32>
    %345 = vector.broadcast %344 : vector<2x24x1xf32> to vector<2x24x24xf32>
    %346 = arith.mulf %341, %345 : vector<2x24x24xf32>
    %347 = arith.truncf %346 : vector<2x24x24xf32> to vector<2x24x24xbf16>
    "tpu.trace_start"() <{level = 10 : i32, message = "bqk,bkh->bqh"}> : () -> ()
    %cst_78 = arith.constant dense<0.000000e+00> : vector<2x24x8xf32>
    %348 = tpu.matmul %347, %333, %cst_78 {dimension_numbers = #tpu.dot_dimension_numbers<[2], [1], [1], [2], [0, 0, 0, 1, 1, 2], [0], [0]>} : vector<2x24x24xbf16>, vector<2x24x8xbf16>, vector<2x24x8xf32> -> vector<2x24x8xf32>
    "tpu.trace_stop"() : () -> ()
    %349 = vector.shape_cast %348 : vector<2x24x8xf32> to vector<48x8xf32>
    %350 = vector.extract_strided_slice %274 {offsets = [0, 24], sizes = [48, 8], strides = [1, 1]} : vector<48x96xf32> to vector<48x8xf32>
    %351 = vector.shape_cast %350 : vector<48x8xf32> to vector<2x24x8xf32>
    %352 = arith.truncf %351 : vector<2x24x8xf32> to vector<2x24x8xbf16>
    %353 = vector.extract_strided_slice %274 {offsets = [0, 56], sizes = [48, 8], strides = [1, 1]} : vector<48x96xf32> to vector<48x8xf32>
    %354 = vector.shape_cast %353 : vector<48x8xf32> to vector<2x24x8xf32>
    %355 = arith.truncf %354 : vector<2x24x8xf32> to vector<2x24x8xbf16>
    %356 = vector.extract_strided_slice %274 {offsets = [0, 88], sizes = [48, 8], strides = [1, 1]} : vector<48x96xf32> to vector<48x8xf32>
    %357 = vector.shape_cast %356 : vector<48x8xf32> to vector<2x24x8xf32>
    %358 = arith.truncf %357 : vector<2x24x8xf32> to vector<2x24x8xbf16>
    "tpu.trace_start"() <{level = 10 : i32, message = "bqh,bkh->bqk"}> : () -> ()
    %cst_79 = arith.constant dense<0.000000e+00> : vector<2x24x24xf32>
    %359 = tpu.matmul %352, %355, %cst_79 {dimension_numbers = #tpu.dot_dimension_numbers<[2], [2], [1], [1], [0, 0, 0, 1, 1, 1], [0], [0]>} : vector<2x24x8xbf16>, vector<2x24x8xbf16>, vector<2x24x24xf32> -> vector<2x24x24xf32>
    "tpu.trace_stop"() : () -> ()
    %360 = vector.broadcast %51 : vector<1x24x24xf32> to vector<2x24x24xf32>
    %361 = arith.addf %359, %360 : vector<2x24x24xf32>
    %cst_80 = arith.constant dense<0xFF800000> : vector<2x24xf32>
    %362 = vector.multi_reduction <maximumf>, %361, %cst_80 [2] : vector<2x24x24xf32> to vector<2x24xf32>
    %363 = vector.shape_cast %362 : vector<2x24xf32> to vector<2x24x1xf32>
    %364 = vector.broadcast %363 : vector<2x24x1xf32> to vector<2x24x24xf32>
    %365 = arith.subf %361, %364 : vector<2x24x24xf32>
    %366 = math.exp %365 : vector<2x24x24xf32>
    %cst_81 = arith.constant dense<0.000000e+00> : vector<2x24xf32>
    %367 = vector.multi_reduction <add>, %366, %cst_81 [2] : vector<2x24x24xf32> to vector<2x24xf32>
    %368 = vector.shape_cast %367 : vector<2x24xf32> to vector<2x24x1xf32>
    %369 = tpu.reciprocal %368 {approx = true} : vector<2x24x1xf32> -> vector<2x24x1xf32>
    %370 = vector.broadcast %369 : vector<2x24x1xf32> to vector<2x24x24xf32>
    %371 = arith.mulf %366, %370 : vector<2x24x24xf32>
    %372 = arith.truncf %371 : vector<2x24x24xf32> to vector<2x24x24xbf16>
    "tpu.trace_start"() <{level = 10 : i32, message = "bqk,bkh->bqh"}> : () -> ()
    %cst_82 = arith.constant dense<0.000000e+00> : vector<2x24x8xf32>
    %373 = tpu.matmul %372, %358, %cst_82 {dimension_numbers = #tpu.dot_dimension_numbers<[2], [1], [1], [2], [0, 0, 0, 1, 1, 2], [0], [0]>} : vector<2x24x24xbf16>, vector<2x24x8xbf16>, vector<2x24x8xf32> -> vector<2x24x8xf32>
    "tpu.trace_stop"() : () -> ()
    %374 = vector.shape_cast %373 : vector<2x24x8xf32> to vector<48x8xf32>
    %375 = tpu.concatenate %299, %324, %349, %374 in 1 : vector<48x8xf32>, vector<48x8xf32>, vector<48x8xf32>, vector<48x8xf32> -> vector<48x32xf32>
    %376 = arith.truncf %375 : vector<48x32xf32> to vector<48x32xbf16>
    %c1_83 = arith.constant 1 : index
    %c0_84 = arith.constant 0 : index
    %c0_85 = arith.constant 0 : index
    %377 = vector.load %arg4[%c1_83, %c0_84, %c0_85] : memref<2x32x32xbf16, #tpu.memory_space<vmem>>, vector<1x32x32xbf16>
    %378 = vector.shape_cast %377 : vector<1x32x32xbf16> to vector<32x32xbf16>
    %cst_86 = arith.constant dense<0.000000e+00> : vector<48x32xf32>
    %379 = tpu.matmul %376, %378, %cst_86 {dimension_numbers = #tpu.dot_dimension_numbers<[1], [0], [0], [1], [0, 0, 1, 1], [], []>} : vector<48x32xbf16>, vector<32x32xbf16>, vector<48x32xf32> -> vector<48x32xf32>
    %380 = arith.addf %243, %379 : vector<48x32xf32>
    %381 = vector.extract_strided_slice %0 {offsets = [44, 0], sizes = [1, 32], strides = [1, 1]} : vector<48x128xf32> to vector<1x32xf32>
    %382 = vector.broadcast %381 : vector<1x32xf32> to vector<48x32xf32>
    %383 = arith.addf %380, %382 : vector<48x32xf32>
    %384 = vector.extract_strided_slice %0 {offsets = [42, 0], sizes = [1, 32], strides = [1, 1]} : vector<48x128xf32> to vector<1x32xf32>
    %385 = vector.extract_strided_slice %0 {offsets = [43, 0], sizes = [1, 32], strides = [1, 1]} : vector<48x128xf32> to vector<1x32xf32>
    %cst_87 = arith.constant dense<0.000000e+00> : vector<48xf32>
    %386 = vector.multi_reduction <add>, %383, %cst_87 [1] : vector<48x32xf32> to vector<48xf32>
    %387 = vector.shape_cast %386 : vector<48xf32> to vector<48x1xf32>
    %cst_88 = arith.constant 3.200000e+01 : f32
    %388 = vector.broadcast %cst_88 : f32 to vector<48x1xf32>
    %389 = arith.divf %387, %388 : vector<48x1xf32>
    %390 = vector.broadcast %389 : vector<48x1xf32> to vector<48x32xf32>
    %391 = arith.subf %383, %390 : vector<48x32xf32>
    %392 = arith.mulf %391, %391 : vector<48x32xf32>
    %cst_89 = arith.constant dense<0.000000e+00> : vector<48xf32>
    %393 = vector.multi_reduction <add>, %392, %cst_89 [1] : vector<48x32xf32> to vector<48xf32>
    %394 = vector.shape_cast %393 : vector<48xf32> to vector<48x1xf32>
    %cst_90 = arith.constant 3.200000e+01 : f32
    %395 = vector.broadcast %cst_90 : f32 to vector<48x1xf32>
    %396 = arith.divf %394, %395 : vector<48x1xf32>
    %397 = vector.broadcast %389 : vector<48x1xf32> to vector<48x32xf32>
    %398 = arith.subf %383, %397 : vector<48x32xf32>
    %cst_91 = arith.constant 9.99999997E-7 : f32
    %399 = vector.broadcast %cst_91 : f32 to vector<48x1xf32>
    %400 = arith.addf %396, %399 : vector<48x1xf32>
    %401 = math.rsqrt %400 : vector<48x1xf32>
    %402 = vector.broadcast %401 : vector<48x1xf32> to vector<48x32xf32>
    %403 = arith.mulf %398, %402 : vector<48x32xf32>
    %404 = vector.broadcast %384 : vector<1x32xf32> to vector<48x32xf32>
    %405 = arith.mulf %403, %404 : vector<48x32xf32>
    %406 = vector.broadcast %385 : vector<1x32xf32> to vector<48x32xf32>
    %407 = arith.addf %405, %406 : vector<48x32xf32>
    %408 = arith.truncf %407 : vector<48x32xf32> to vector<48x32xbf16>
    %c1_92 = arith.constant 1 : index
    %c0_93 = arith.constant 0 : index
    %c0_94 = arith.constant 0 : index
    %409 = vector.load %arg5[%c1_92, %c0_93, %c0_94] : memref<2x32x128xbf16, #tpu.memory_space<vmem>>, vector<1x32x128xbf16>
    %410 = vector.shape_cast %409 : vector<1x32x128xbf16> to vector<32x128xbf16>
    %cst_95 = arith.constant dense<0.000000e+00> : vector<48x128xf32>
    %411 = tpu.matmul %408, %410, %cst_95 {dimension_numbers = #tpu.dot_dimension_numbers<[1], [0], [0], [1], [0, 0, 1, 1], [], []>} : vector<48x32xbf16>, vector<32x128xbf16>, vector<48x128xf32> -> vector<48x128xf32>
    %412 = vector.extract_strided_slice %0 {offsets = [47, 0], sizes = [1, 128], strides = [1, 1]} : vector<48x128xf32> to vector<1x128xf32>
    %413 = vector.broadcast %412 : vector<1x128xf32> to vector<48x128xf32>
    %414 = arith.addf %411, %413 : vector<48x128xf32>
    %415 = arith.mulf %414, %414 : vector<48x128xf32>
    %416 = arith.mulf %414, %415 : vector<48x128xf32>
    %cst_96 = arith.constant 4.471500e-02 : f32
    %417 = vector.broadcast %cst_96 : f32 to vector<48x128xf32>
    %418 = arith.mulf %417, %416 : vector<48x128xf32>
    %419 = arith.addf %414, %418 : vector<48x128xf32>
    %cst_97 = arith.constant 0.797884583 : f32
    %420 = vector.broadcast %cst_97 : f32 to vector<48x128xf32>
    %421 = arith.mulf %420, %419 : vector<48x128xf32>
    %422 = math.tanh %421 : vector<48x128xf32>
    %cst_98 = arith.constant 1.000000e+00 : f32
    %423 = vector.broadcast %cst_98 : f32 to vector<48x128xf32>
    %424 = arith.addf %423, %422 : vector<48x128xf32>
    %cst_99 = arith.constant 5.000000e-01 : f32
    %425 = vector.broadcast %cst_99 : f32 to vector<48x128xf32>
    %426 = arith.mulf %425, %424 : vector<48x128xf32>
    %427 = arith.mulf %414, %426 : vector<48x128xf32>
    %428 = arith.truncf %427 : vector<48x128xf32> to vector<48x128xbf16>
    %c1_100 = arith.constant 1 : index
    %c0_101 = arith.constant 0 : index
    %c0_102 = arith.constant 0 : index
    %429 = vector.load %arg6[%c1_100, %c0_101, %c0_102] : memref<2x128x32xbf16, #tpu.memory_space<vmem>>, vector<1x128x32xbf16>
    %430 = vector.shape_cast %429 : vector<1x128x32xbf16> to vector<128x32xbf16>
    %cst_103 = arith.constant dense<0.000000e+00> : vector<48x32xf32>
    %431 = tpu.matmul %428, %430, %cst_103 {dimension_numbers = #tpu.dot_dimension_numbers<[1], [0], [0], [1], [0, 0, 1, 1], [], []>} : vector<48x128xbf16>, vector<128x32xbf16>, vector<48x32xf32> -> vector<48x32xf32>
    %432 = arith.addf %383, %431 : vector<48x32xf32>
    %433 = vector.extract_strided_slice %0 {offsets = [45, 0], sizes = [1, 32], strides = [1, 1]} : vector<48x128xf32> to vector<1x32xf32>
    %434 = vector.broadcast %433 : vector<1x32xf32> to vector<48x32xf32>
    %435 = arith.addf %432, %434 : vector<48x32xf32>
    %436 = vector.extract_strided_slice %0 {offsets = [28, 0], sizes = [1, 32], strides = [1, 1]} : vector<48x128xf32> to vector<1x32xf32>
    %437 = vector.extract_strided_slice %0 {offsets = [29, 0], sizes = [1, 32], strides = [1, 1]} : vector<48x128xf32> to vector<1x32xf32>
    %cst_104 = arith.constant dense<0.000000e+00> : vector<48xf32>
    %438 = vector.multi_reduction <add>, %435, %cst_104 [1] : vector<48x32xf32> to vector<48xf32>
    %439 = vector.shape_cast %438 : vector<48xf32> to vector<48x1xf32>
    %cst_105 = arith.constant 3.200000e+01 : f32
    %440 = vector.broadcast %cst_105 : f32 to vector<48x1xf32>
    %441 = arith.divf %439, %440 : vector<48x1xf32>
    %442 = vector.broadcast %441 : vector<48x1xf32> to vector<48x32xf32>
    %443 = arith.subf %435, %442 : vector<48x32xf32>
    %444 = arith.mulf %443, %443 : vector<48x32xf32>
    %cst_106 = arith.constant dense<0.000000e+00> : vector<48xf32>
    %445 = vector.multi_reduction <add>, %444, %cst_106 [1] : vector<48x32xf32> to vector<48xf32>
    %446 = vector.shape_cast %445 : vector<48xf32> to vector<48x1xf32>
    %cst_107 = arith.constant 3.200000e+01 : f32
    %447 = vector.broadcast %cst_107 : f32 to vector<48x1xf32>
    %448 = arith.divf %446, %447 : vector<48x1xf32>
    %449 = vector.broadcast %441 : vector<48x1xf32> to vector<48x32xf32>
    %450 = arith.subf %435, %449 : vector<48x32xf32>
    %cst_108 = arith.constant 9.99999997E-7 : f32
    %451 = vector.broadcast %cst_108 : f32 to vector<48x1xf32>
    %452 = arith.addf %448, %451 : vector<48x1xf32>
    %453 = math.rsqrt %452 : vector<48x1xf32>
    %454 = vector.broadcast %453 : vector<48x1xf32> to vector<48x32xf32>
    %455 = arith.mulf %450, %454 : vector<48x32xf32>
    %456 = vector.broadcast %436 : vector<1x32xf32> to vector<48x32xf32>
    %457 = arith.mulf %455, %456 : vector<48x32xf32>
    %458 = vector.broadcast %437 : vector<1x32xf32> to vector<48x32xf32>
    %459 = arith.addf %457, %458 : vector<48x32xf32>
    %c0_109 = arith.constant 0 : index
    %c0_110 = arith.constant 0 : index
    %460 = vector.load %arg7[%c0_109, %c0_110] : memref<48x32xf32, #tpu.memory_space<vmem>>, vector<48x32xf32>
    tpu.vector_store %arg7[%c0_109, %c0_110], %459 {strides = array<i32>} : memref<48x32xf32, #tpu.memory_space<vmem>>, vector<48x32xf32>,
    return
  }
}

</mosaic_0001>

<llo_original>
// kernel: encoder_forward.1
$region0: #{encoder_forward.1}
  #allocation0 [shape = 'u32[]', space=smem, size = 0x4, offset = 0x4, fixed_abs, tag = 'smem constant byte address 0x4 - core index']
  #allocation1 [shape = 'u32[144,128]{1,0:T(1,128)}', space=vmem, size = 0x12000, scoped, tag = 'internal scratch']
  %s0 = inlined_call_operand.vmem [shape: bf16[32,48], index: 0, kind: input, shape index: {}]
  %s1 = inlined_call_operand.vmem [shape: f32[48,128], index: 1, kind: input, shape index: {}]
  %s2 = inlined_call_operand.vmem [shape: bf16[48,32], index: 2, kind: input, shape index: {}]
  %s3 = inlined_call_operand.vmem [shape: bf16[2,32,96], index: 3, kind: input, shape index: {}]
  %s4 = inlined_call_operand.vmem [shape: bf16[2,32,32], index: 4, kind: input, shape index: {}]
  %s5 = inlined_call_operand.vmem [shape: bf16[2,32,128], index: 5, kind: input, shape index: {}]
  %s6 = inlined_call_operand.vmem [shape: bf16[2,128,32], index: 6, kind: input, shape index: {}]
  %s7 = inlined_call_operand.vmem [shape: f32[48,32], index: 7, kind: output, shape index: {}]
  %s8 = sld [smem:[#allocation0]]
  $region38: #{encoder_forward.1} parent=0
    _
  %s10 = ssub.s32 1, %s8
  %s11 = scalar_select 0, %s10, %s8
  // Predicated region
  $region2: #{encoder_forward.1} parent=0 // pred_check
    _
  $region3: #{encoder_forward.1} parent=0 // pred_check_branch
    %13 = sbr.rel (0) target = $region5
  $region4: #{encoder_forward.1} parent=0 // pred_region
    _
  $region5: #{encoder_forward.1} parent=0 // pred_fallthru
    _
  // Predicated region
  $region6: #{encoder_forward.1} parent=0 // pred_check
    _
  $region7: #{encoder_forward.1} parent=0 // pred_check_branch
    %15 = sbr.rel (0) target = $region9
  $region8: #{encoder_forward.1} parent=0 // pred_region
    _
  $region9: #{encoder_forward.1} parent=0 // pred_fallthru
    _
  // Predicated region
  $region10: #{encoder_forward.1} parent=0 // pred_check
    _
  $region11: #{encoder_forward.1} parent=0 // pred_check_branch
    %17 = sbr.rel (0) target = $region13
  $region12: #{encoder_forward.1} parent=0 // pred_region
    _
  $region13: #{encoder_forward.1} parent=0 // pred_fallthru
    _
  // Predicated region
  $region14: #{encoder_forward.1} parent=0 // pred_check
    _
  $region15: #{encoder_forward.1} parent=0 // pred_check_branch
    %19 = sbr.rel (0) target = $region17
  $region16: #{encoder_forward.1} parent=0 // pred_region
    _
  $region17: #{encoder_forward.1} parent=0 // pred_fallthru
    _
  // Predicated region
  $region18: #{encoder_forward.1} parent=0 // pred_check
    _
  $region19: #{encoder_forward.1} parent=0 // pred_check_branch
    %21 = sbr.rel (0) target = $region21
  $region20: #{encoder_forward.1} parent=0 // pred_region
    _
  $region21: #{encoder_forward.1} parent=0 // pred_fallthru
    _
  // Predicated region
  $region22: #{encoder_forward.1} parent=0 // pred_check
    _
  $region23: #{encoder_forward.1} parent=0 // pred_check_branch
    %23 = sbr.rel (0) target = $region25
  $region24: #{encoder_forward.1} parent=0 // pred_region
    _
  $region25: #{encoder_forward.1} parent=0 // pred_fallthru
    _
  // Predicated region
  $region26: #{encoder_forward.1} parent=0 // pred_check
    _
  $region27: #{encoder_forward.1} parent=0 // pred_check_branch
    %25 = sbr.rel (0) target = $region29
  $region28: #{encoder_forward.1} parent=0 // pred_region
    _
  $region29: #{encoder_forward.1} parent=0 // pred_fallthru
    _
  %v27 = vld [vmem:[%s1] sm:$0xff]
  %v28 = vld [vmem:[%s1 + $0x8] sm:$0xff]
  %v29 = vld [vmem:[%s1 + $0x10] sm:$0xff]
  %v30 = vld [vmem:[%s1 + $0x18] sm:$0xff]
  %v31 = vld [vmem:[%s1 + $0x20] sm:$0xff]
  %v32 = vld [vmem:[%s1 + $0x28] sm:$0xff]
  %v33 = vld [vmem:[%s0] sm:$0xf]
  %v34 = vld [vmem:[%s0 + $0x4] sm:$0xf]
  %v35 = vld [vmem:[%s0 + $0x8] sm:$0xf]
  %v36 = vld [vmem:[%s0 + $0xc] sm:$0xf]
  %v37 = vld [vmem:[%s2] sm:$0xf]
  %v38 = vld [vmem:[%s2 + $0x4] sm:$0xf]
  %v39 = vld [vmem:[%s2 + $0x8] sm:$0xf]
  %v40 = vld [vmem:[%s2 + $0xc] sm:$0xf]
  %v41 = vld [vmem:[%s2 + $0x10] sm:$0xf]
  %v42 = vld [vmem:[%s2 + $0x14] sm:$0xf]
  %v43 = vlaneseq
  %v44 = vshrl.u32 %v43, 7
  %v45 = vsub.s32 1, %v44
  %v46 = vrot.slane %v30, %v45
  %v51 = vunpack.c.l.b16 %v33
  %v52 = vunpack.c.l.b16 %v34
  %v53 = vunpack.c.l.b16 %v35
  %v54 = vunpack.c.l.b16 %v36
  %v55 = vpack.c.b16 %v52, %v51
  %v56 = vpack.c.b16 %v54, %v53
  %v63 = vunpack.c.l.b16 %v37
  %v64 = vunpack.c.l.b16 %v38
  %v65 = vunpack.c.l.b16 %v39
  %v66 = vunpack.c.l.b16 %v40
  %v67 = vunpack.c.l.b16 %v41
  %v68 = vunpack.c.l.b16 %v42
  %v69 = vpack.c.b16 %v64, %v63
  %v70 = vpack.c.b16 %v66, %v65
  %v71 = vpack.c.b16 %v68, %v67
  %vm75 = vcmask 392192
  %v77 = vsel %vm75, %v55, 0
  %v80 = vsel %vm75, %v56, 0
  %82 = vmatprep.subr.bf16.mxu0 0
  %83 = vmatpush1.bf16.msra.mxu0 %v69
  %84 = vmatprep.subr.bf16.mxu0 0
  %85 = vmatpush1.bf16.msra.mxu0 %v70
  %86 = vmatprep.subr.bf16.mxu0 0
  %87 = vmatpush1.bf16.msra.mxu0 %v71
  %88 = vmatprep.subr.bf16.mxu0 0
  %89 = vmatpush1.bf16.msra.mxu0 0
  %90 = vmatprep.subr.bf16.mxu0 0
  %91 = vmatpush1.bf16.msra.mxu0 0
  %92 = vmatprep.subr.bf16.mxu0 0
  %93 = vmatpush1.bf16.msra.mxu0 0
  %94 = vmatprep.subr.bf16.mxu0 0
  %95 = vmatpush1.bf16.msra.mxu0 0
  %96 = vmatprep.subr.bf16.mxu0 0
  %97 = vmatpush1.bf16.msra.mxu0 0
  %98 = vmatprep.subr.bf16.mxu0 0
  %99 = vmatpush1.bf16.msra.mxu0 0
  %100 = vmatprep.subr.bf16.mxu0 0
  %101 = vmatpush1.bf16.msra.mxu0 0
  %102 = vmatprep.subr.bf16.mxu0 0
  %103 = vmatpush1.bf16.msra.mxu0 0
  %104 = vmatprep.subr.bf16.mxu0 0
  %105 = vmatpush1.bf16.msra.mxu0 0
  %106 = vmatprep.subr.bf16.mxu0 0
  %107 = vmatpush1.bf16.msra.mxu0 0
  %108 = vmatprep.subr.bf16.mxu0 0
  %109 = vmatpush1.bf16.msra.mxu0 0
  %110 = vmatprep.subr.bf16.mxu0 0
  %111 = vmatpush1.bf16.msra.mxu0 0
  %112 = vmatprep.subr.bf16.mxu0 0
  %113 = vmatpush1.bf16.msra.mxu0 0
  %114 = vmatprep.mubr.bf16.mxu0 0
  %115 = vmatmul.mubr.bf16.gmra.mrb[0].mxu0 %v77
  %v116 = vpop.f32.mrb[0].mxu0
  %v117 = vadd.f32 %v46, %v116
  %v118 = vpop.f32.mrb[0].mxu0
  %v119 = vpop.f32.mrb[0].mxu0
  %v120 = vadd.f32 %v46, %v119
  %v121 = vpop.f32.mrb[0].mxu0
  %122 = vmatprep.mubr.bf16.mxu0 0
  %123 = vmatmul.mubr.bf16.gmra.mrb[0].mxu0 %v80
  %v124 = vpop.f32.mrb[0].mxu0
  %v125 = vadd.f32 %v46, %v124
  %v126 = vpop.f32.mrb[0].mxu0
  %v127 = vpop.f32.mrb[0].mxu0
  %v128 = vadd.f32 %v46, %v127
  %v129 = vpop.f32.mrb[0].mxu0
  %130 = vdwg.mxu0
  %v131 = vlaneseq
  %v132 = vshrl.u32 %v131, 7
  %vm133 = vcmp.eq.s32.totalorder %v132, 0
  %v134 = vlaneseq
  %v135 = vshrl.u32 %v134, 7
  %v136 = vsub.s32 0, %v135
  %v137 = vrot.slane %v30, %v136
  %v138 = vsel %vm133, %v137, 0.0
  %v139 = vadd.f32 %v117, %v27
  %v140 = vadd.f32 %v120, %v28
  %v141 = vadd.f32 %v138, %v29
  %v142 = vadd.f32 %v125, %v27
  %v143 = vadd.f32 %v128, %v28
  %vm144 = vcmask 261120
  %v145 = vsel %vm144, %v139, 0.0
  %146 = vadd.xlane.f32.xlu0 %v145
  %v147 = vpop.xlane.xlu0 %146
  %v148 = vsel %vm144, %v140, 0.0
  %149 = vadd.xlane.f32.xlu0 %v148
  %v150 = vpop.xlane.xlu0 %149
  %v151 = vsel %vm144, %v141, 0.0
  %152 = vadd.xlane.f32.xlu0 %v151
  %v153 = vpop.xlane.xlu0 %152
  %v154 = vsel %vm144, %v142, 0.0
  %155 = vadd.xlane.f32.xlu0 %v154
  %v156 = vpop.xlane.xlu0 %155
  %v157 = vsel %vm144, %v143, 0.0
  %158 = vadd.xlane.f32.xlu0 %v157
  %v159 = vpop.xlane.xlu0 %158
  %v160 = vrcp.pop 32.0
  %v161 = vmul.f32 %v147, %v160
  %v162 = vmul.f32 %v150, %v160
  %v163 = vmul.f32 %v153, %v160
  %v164 = vmul.f32 %v156, %v160
  %v165 = vmul.f32 %v159, %v160
  %v166 = vsub.f32 %v139, %v161
  %v167 = vsub.f32 %v140, %v162
  %v168 = vsub.f32 %v141, %v163
  %v169 = vsub.f32 %v142, %v164
  %v170 = vsub.f32 %v143, %v165
  %v171 = vmul.f32 %v166, %v166
  %v172 = vmul.f32 %v167, %v167
  %v173 = vmul.f32 %v168, %v168
  %v174 = vmul.f32 %v169, %v169
  %v175 = vmul.f32 %v170, %v170
  %v176 = vsel %vm144, %v171, 0.0
  %177 = vadd.xlane.f32.xlu0 %v176
  %v178 = vpop.xlane.xlu0 %177
  %v179 = vsel %vm144, %v172, 0.0
  %180 = vadd.xlane.f32.xlu0 %v179
  %v181 = vpop.xlane.xlu0 %180
  %v182 = vsel %vm144, %v173, 0.0
  %183 = vadd.xlane.f32.xlu0 %v182
  %v184 = vpop.xlane.xlu0 %183
  %v185 = vsel %vm144, %v174, 0.0
  %186 = vadd.xlane.f32.xlu0 %v185
  %v187 = vpop.xlane.xlu0 %186
  %v188 = vsel %vm144, %v175, 0.0
  %189 = vadd.xlane.f32.xlu0 %v188
  %v190 = vpop.xlane.xlu0 %189
  %v191 = vmul.f32 %v178, %v160
  %v192 = vmul.f32 %v181, %v160
  %v193 = vmul.f32 %v184, %v160
  %v194 = vmul.f32 %v187, %v160
  %v195 = vmul.f32 %v190, %v160
  %v196 = vadd.f32 %v191, 1e-06
  %v197 = vadd.f32 %v192, 1e-06
  %v198 = vadd.f32 %v193, 1e-06
  %v199 = vadd.f32 %v194, 1e-06
  %v200 = vadd.f32 %v195, 1e-06
  %v201 = vrsqrt.pop %v196
  %v202 = vrsqrt.pop %v197
  %v203 = vrsqrt.pop %v198
  %v204 = vrsqrt.pop %v199
  %v205 = vrsqrt.pop %v200
  %v206 = vmul.f32 %v166, %v201
  %v207 = vmul.f32 %v167, %v202
  %v208 = vmul.f32 %v168, %v203
  %v209 = vmul.f32 %v169, %v204
  %v210 = vmul.f32 %v170, %v205
  %v211 = vlaneseq
  %v212 = vshrl.u32 %v211, 7
  %v213 = vsub.s32 2, %v212
  %v214 = vrot.slane %v30, %v213
  %v215 = vmul.f32 %v206, %v214
  %v216 = vmul.f32 %v207, %v214
  %v217 = vmul.f32 %v208, %v214
  %v218 = vmul.f32 %v209, %v214
  %v219 = vmul.f32 %v210, %v214
  %v220 = vlaneseq
  %v221 = vshrl.u32 %v220, 7
  %v222 = vsub.s32 3, %v221
  %v223 = vrot.slane %v30, %v222
  %v224 = vadd.f32 %v215, %v223
  %v225 = vadd.f32 %v216, %v223
  %v226 = vadd.f32 %v217, %v223
  %v227 = vadd.f32 %v218, %v223
  %v228 = vadd.f32 %v219, %v223
  %v229 = vlaneseq
  %v230 = vand.u32 %v229, 127
  %vm231 = vcmp.lt.s32.totalorder %v230, 17
  %v232 = vsel %vm231, 0.0, -1e+30
  %v233 = vsel %vm144, %v224, 0.0
  %234 = vadd.xlane.f32.xlu0 %v233
  %v235 = vpop.xlane.xlu0 %234
  %v236 = vsel %vm144, %v225, 0.0
  %237 = vadd.xlane.f32.xlu0 %v236
  %v238 = vpop.xlane.xlu0 %237
  %v239 = vsel %vm144, %v226, 0.0
  %240 = vadd.xlane.f32.xlu0 %v239
  %v241 = vpop.xlane.xlu0 %240
  %v242 = vsel %vm144, %v227, 0.0
  %243 = vadd.xlane.f32.xlu0 %v242
  %v244 = vpop.xlane.xlu0 %243
  %v245 = vsel %vm144, %v228, 0.0
  %246 = vadd.xlane.f32.xlu0 %v245
  %v247 = vpop.xlane.xlu0 %246
  %v248 = vmul.f32 %v235, %v160
  %v249 = vmul.f32 %v238, %v160
  %v250 = vmul.f32 %v241, %v160
  %v251 = vmul.f32 %v244, %v160
  %v252 = vmul.f32 %v247, %v160
  %v253 = vsub.f32 %v224, %v248
  %v254 = vsub.f32 %v225, %v249
  %v255 = vsub.f32 %v226, %v250
  %v256 = vsub.f32 %v227, %v251
  %v257 = vsub.f32 %v228, %v252
  %v258 = vmul.f32 %v253, %v253
  %v259 = vmul.f32 %v254, %v254
  %v260 = vmul.f32 %v255, %v255
  %v261 = vmul.f32 %v256, %v256
  %v262 = vmul.f32 %v257, %v257
  %v263 = vsel %vm144, %v258, 0.0
  %264 = vadd.xlane.f32.xlu0 %v263
  %v265 = vpop.xlane.xlu0 %264
  %v266 = vsel %vm144, %v259, 0.0
  %267 = vadd.xlane.f32.xlu0 %v266
  %v268 = vpop.xlane.xlu0 %267
  %v269 = vsel %vm144, %v260, 0.0
  %270 = vadd.xlane.f32.xlu0 %v269
  %v271 = vpop.xlane.xlu0 %270
  %v272 = vsel %vm144, %v261, 0.0
  %273 = vadd.xlane.f32.xlu0 %v272
  %v274 = vpop.xlane.xlu0 %273
  %v275 = vsel %vm144, %v262, 0.0
  %276 = vadd.xlane.f32.xlu0 %v275
  %v277 = vpop.xlane.xlu0 %276
  %v278 = vmul.f32 %v265, %v160
  %v279 = vmul.f32 %v268, %v160
  %v280 = vmul.f32 %v271, %v160
  %v281 = vmul.f32 %v274, %v160
  %v282 = vmul.f32 %v277, %v160
  %v283 = vadd.f32 %v278, 1e-06
  %v284 = vadd.f32 %v279, 1e-06
  %v285 = vadd.f32 %v280, 1e-06
  %v286 = vadd.f32 %v281, 1e-06
  %v287 = vadd.f32 %v282, 1e-06
  %v288 = vrsqrt.pop %v283
  %v289 = vrsqrt.pop %v284
  %v290 = vrsqrt.pop %v285
  %v291 = vrsqrt.pop %v286
  %v292 = vrsqrt.pop %v287
  %v293 = vmul.f32 %v253, %v288
  %v294 = vmul.f32 %v254, %v289
  %v295 = vmul.f32 %v255, %v290
  %v296 = vmul.f32 %v256, %v291
  %v297 = vmul.f32 %v257, %v292
  %v298 = vlaneseq
  %v299 = vshrl.u32 %v298, 7
  %v300 = vsub.s32 0, %v299
  %v301 = vrot.slane %v31, %v300
  %v302 = vmul.f32 %v293, %v301
  %v303 = vmul.f32 %v294, %v301
  %v304 = vmul.f32 %v295, %v301
  %v305 = vmul.f32 %v296, %v301
  %v306 = vmul.f32 %v297, %v301
  %v307 = vlaneseq
  %v308 = vshrl.u32 %v307, 7
  %v309 = vsub.s32 1, %v308
  %v310 = vrot.slane %v31, %v309
  %v311 = vadd.f32 %v302, %v310
  %v312 = vadd.f32 %v303, %v310
  %v313 = vadd.f32 %v304, %v310
  %v314 = vadd.f32 %v305, %v310
  %v315 = vadd.f32 %v306, %v310
  %v316 = vpack.c.bf16 %v312, %v311
  %v317 = vpack.c.bf16 %v314, %v313
  %v318 = vpack.c.bf16 %v313, %v315
  %v319 = vld [vmem:[%s3] sm:$0xf]
  %v320 = vld [vmem:[%s3 + $0x4] sm:$0xf]
  %v321 = vld [vmem:[%s3 + $0x8] sm:$0xf]
  %v322 = vld [vmem:[%s3 + $0xc] sm:$0xf]
  %v323 = vlaneseq
  %v324 = vshrl.u32 %v323, 7
  %v325 = vsub.s32 6, %v324
  %v326 = vrot.slane %v31, %v325
  %v331 = vunpack.c.l.b16 %v319
  %v332 = vunpack.c.l.b16 %v320
  %v333 = vunpack.c.l.b16 %v321
  %v334 = vunpack.c.l.b16 %v322
  %v335 = vpack.c.b16 %v332, %v331
  %v336 = vpack.c.b16 %v334, %v333
  %v340 = vsel %vm144, %v316, 0
  %v343 = vsel %vm144, %v317, 0
  %v346 = vsel %vm144, %v318, 0
  %348 = vmatprep.subr.bf16.mxu0 0
  %349 = vmatpush1.bf16.msra.mxu0 %v335
  %350 = vmatprep.subr.bf16.mxu0 0
  %351 = vmatpush1.bf16.msra.mxu0 %v336
  %352 = vmatprep.subr.bf16.mxu0 0
  %353 = vmatpush1.bf16.msra.mxu0 0
  %354 = vmatprep.subr.bf16.mxu0 0
  %355 = vmatpush1.bf16.msra.mxu0 0
  %356 = vmatprep.subr.bf16.mxu0 0
  %357 = vmatpush1.bf16.msra.mxu0 0
  %358 = vmatprep.subr.bf16.mxu0 0
  %359 = vmatpush1.bf16.msra.mxu0 0
  %360 = vmatprep.subr.bf16.mxu0 0
  %361 = vmatpush1.bf16.msra.mxu0 0
  %362 = vmatprep.subr.bf16.mxu0 0
  %363 = vmatpush1.bf16.msra.mxu0 0
  %364 = vmatprep.subr.bf16.mxu0 0
  %365 = vmatpush1.bf16.msra.mxu0 0
  %366 = vmatprep.subr.bf16.mxu0 0
  %367 = vmatpush1.bf16.msra.mxu0 0
  %368 = vmatprep.subr.bf16.mxu0 0
  %369 = vmatpush1.bf16.msra.mxu0 0
  %370 = vmatprep.subr.bf16.mxu0 0
  %371 = vmatpush1.bf16.msra.mxu0 0
  %372 = vmatprep.subr.bf16.mxu0 0
  %373 = vmatpush1.bf16.msra.mxu0 0
  %374 = vmatprep.subr.bf16.mxu0 0
  %375 = vmatpush1.bf16.msra.mxu0 0
  %376 = vmatprep.subr.bf16.mxu0 0
  %377 = vmatpush1.bf16.msra.mxu0 0
  %378 = vmatprep.subr.bf16.mxu0 0
  %379 = vmatpush1.bf16.msra.mxu0 0
  %380 = vmatprep.mubr.bf16.mxu0 0
  %381 = vmatmul.mubr.bf16.gmra.mrb[0].mxu0 %v340
  %v382 = vpop.f32.mrb[0].mxu0
  %v383 = vadd.f32 %v326, %v382
  %v384 = vpop.f32.mrb[0].mxu0
  %v385 = vpop.f32.mrb[0].mxu0
  %v386 = vadd.f32 %v326, %v385
  %v387 = vpop.f32.mrb[0].mxu0
  %388 = vmatprep.mubr.bf16.mxu0 0
  %389 = vmatmul.mubr.bf16.gmra.mrb[0].mxu0 %v343
  %v390 = vpop.f32.mrb[0].mxu0
  %v391 = vadd.f32 %v326, %v390
  %v392 = vpop.f32.mrb[0].mxu0
  %v393 = vpop.f32.mrb[0].mxu0
  %v394 = vadd.f32 %v326, %v393
  %v395 = vpop.f32.mrb[0].mxu0
  %396 = vmatprep.mubr.bf16.mxu0 0
  %397 = vmatmul.mubr.bf16.gmra.mrb[0].mxu0 %v346
  %v398 = vpop.f32.mrb[0].mxu0
  %v399 = vadd.f32 %v326, %v398
  %v400 = vpop.f32.mrb[0].mxu0
  %v401 = vpop.f32.mrb[0].mxu0
  %v402 = vadd.f32 %v326, %v401
  %v403 = vpop.f32.mrb[0].mxu0
  %404 = vdwg.mxu0
  %v405 = vpack.c.bf16 %v386, %v383
  %v406 = vpack.c.bf16 %v391, %v391
  %v407 = vpack.c.bf16 %v399, %v394
  %v408 = vpack.c.bf16 %v402, %v402
  %411 = vrot.lane.b32.xlu0 %v405, 96
  %v412 = vpop.permute.xlu0 %411
  %413 = vrot.lane.b32.xlu0 %v406, 96
  %v414 = vpop.permute.xlu0 %413
  %vm415 = vcmask 64512
  %v417 = vsel %vm415, %v405, 0
  %v420 = vsel %vm415, %v406, 0
  %v423 = vsel %vm415, %v412, 0
  %v426 = vsel %vm415, %v414, 0
  %428 = vmatprep.subr.bf16.mxu0 0
  %429 = vmatpush1.bf16.xpose.msra.mxu0 %v423
  %430 = vmatprep.subr.bf16.mxu0 0
  %431 = vmatpush1.bf16.xpose.msra.mxu0 %v426
  %432 = vmatprep.subr.bf16.mxu0 0
  %433 = vmatpush1.bf16.xpose.msra.mxu0 0
  %434 = vmatprep.subr.bf16.mxu0 0
  %435 = vmatpush1.bf16.xpose.msra.mxu0 0
  %436 = vmatprep.subr.bf16.mxu0 0
  %437 = vmatpush1.bf16.xpose.msra.mxu0 0
  %438 = vmatprep.subr.bf16.mxu0 0
  %439 = vmatpush1.bf16.xpose.msra.mxu0 0
  %440 = vmatprep.subr.bf16.mxu0 0
  %441 = vmatpush1.bf16.xpose.msra.mxu0 0
  %442 = vmatprep.subr.bf16.mxu0 0
  %443 = vmatpush1.bf16.xpose.msra.mxu0 0
  %444 = vmatprep.subr.bf16.mxu0 0
  %445 = vmatpush1.bf16.xpose.msra.mxu0 0
  %446 = vmatprep.subr.bf16.mxu0 0
  %447 = vmatpush1.bf16.xpose.msra.mxu0 0
  %448 = vmatprep.subr.bf16.mxu0 0
  %449 = vmatpush1.bf16.xpose.msra.mxu0 0
  %450 = vmatprep.subr.bf16.mxu0 0
  %451 = vmatpush1.bf16.xpose.msra.mxu0 0
  %452 = vmatprep.subr.bf16.mxu0 0
  %453 = vmatpush1.bf16.xpose.msra.mxu0 0
  %454 = vmatprep.subr.bf16.mxu0 0
  %455 = vmatpush1.bf16.xpose.msra.mxu0 0
  %456 = vmatprep.subr.bf16.mxu0 0
  %457 = vmatpush1.bf16.xpose.msra.mxu0 0
  %458 = vmatprep.subr.bf16.mxu0 0
  %459 = vmatpush1.bf16.xpose.msra.mxu0 0
  %460 = vmatprep.mubr.bf16.mxu0 0
  %461 = vmatmul.mubr.bf16.gmra.mrb[0].mxu0 %v417
  %v462 = vpop.f32.mrb[0].mxu0
  %v463 = vadd.f32 %v232, %v462
  %v464 = vpop.f32.mrb[0].mxu0
  %v465 = vpop.f32.mrb[0].mxu0
  %v466 = vadd.f32 %v232, %v465
  %v467 = vpop.f32.mrb[0].mxu0
  %468 = vmatprep.mubr.bf16.mxu0 0
  %469 = vmatmul.mubr.bf16.gmra.mrb[0].mxu0 %v420
  %v470 = vpop.f32.mrb[0].mxu0
  %v471 = vadd.f32 %v232, %v470
  %v472 = vpop.f32.mrb[0].mxu0
  %v473 = vpop.f32.mrb[0].mxu0
  %v474 = vpop.f32.mrb[0].mxu0
  %475 = vdwg.mxu0
  %478 = vrot.lane.b32.xlu0 %v407, 96
  %v479 = vpop.permute.xlu0 %478
  %480 = vrot.lane.b32.xlu0 %v408, 96
  %v481 = vpop.permute.xlu0 %480
  %v483 = vsel %vm415, %v407, 0
  %v486 = vsel %vm415, %v408, 0
  %v489 = vsel %vm415, %v479, 0
  %v492 = vsel %vm415, %v481, 0
  %494 = vmatprep.subr.bf16.mxu0 0
  %495 = vmatpush1.bf16.xpose.msra.mxu0 %v489
  %496 = vmatprep.subr.bf16.mxu0 0
  %497 = vmatpush1.bf16.xpose.msra.mxu0 %v492
  %498 = vmatprep.subr.bf16.mxu0 0
  %499 = vmatpush1.bf16.xpose.msra.mxu0 0
  %500 = vmatprep.subr.bf16.mxu0 0
  %501 = vmatpush1.bf16.xpose.msra.mxu0 0
  %502 = vmatprep.subr.bf16.mxu0 0
  %503 = vmatpush1.bf16.xpose.msra.mxu0 0
  %504 = vmatprep.subr.bf16.mxu0 0
  %505 = vmatpush1.bf16.xpose.msra.mxu0 0
  %506 = vmatprep.subr.bf16.mxu0 0
  %507 = vmatpush1.bf16.xpose.msra.mxu0 0
  %508 = vmatprep.subr.bf16.mxu0 0
  %509 = vmatpush1.bf16.xpose.msra.mxu0 0
  %510 = vmatprep.subr.bf16.mxu0 0
  %511 = vmatpush1.bf16.xpose.msra.mxu0 0
  %512 = vmatprep.subr.bf16.mxu0 0
  %513 = vmatpush1.bf16.xpose.msra.mxu0 0
  %514 = vmatprep.subr.bf16.mxu0 0
  %515 = vmatpush1.bf16.xpose.msra.mxu0 0
  %516 = vmatprep.subr.bf16.mxu0 0
  %517 = vmatpush1.bf16.xpose.msra.mxu0 0
  %518 = vmatprep.subr.bf16.mxu0 0
  %519 = vmatpush1.bf16.xpose.msra.mxu0 0
  %520 = vmatprep.subr.bf16.mxu0 0
  %521 = vmatpush1.bf16.xpose.msra.mxu0 0
  %522 = vmatprep.subr.bf16.mxu0 0
  %523 = vmatpush1.bf16.xpose.msra.mxu0 0
  %524 = vmatprep.subr.bf16.mxu0 0
  %525 = vmatpush1.bf16.xpose.msra.mxu0 0
  %526 = vmatprep.mubr.bf16.mxu0 0
  %527 = vmatmul.mubr.bf16.gmra.mrb[0].mxu0 %v483
  %v528 = vpop.f32.mrb[0].mxu0
  %v529 = vadd.f32 %v232, %v528
  %v530 = vpop.f32.mrb[0].mxu0
  %v531 = vpop.f32.mrb[0].mxu0
  %v532 = vadd.f32 %v232, %v531
  %v533 = vpop.f32.mrb[0].mxu0
  %534 = vmatprep.mubr.bf16.mxu0 0
  %535 = vmatmul.mubr.bf16.gmra.mrb[0].mxu0 %v486
  %v536 = vpop.f32.mrb[0].mxu0
  %v537 = vadd.f32 %v232, %v536
  %v538 = vpop.f32.mrb[0].mxu0
  %v539 = vpop.f32.mrb[0].mxu0
  %v540 = vpop.f32.mrb[0].mxu0
  %541 = vdwg.mxu0
  %vm542 = vcmask 195584
  %v543 = vsel %vm542, %v463, -inf
  %544 = vmax.xlane.f32.xlu0 %v543
  %v545 = vpop.xlane.xlu0 %544
  %v546 = vsel %vm542, %v466, -inf
  %547 = vmax.xlane.f32.xlu0 %v546
  %v548 = vpop.xlane.xlu0 %547
  %v549 = vsel %vm542, %v471, -inf
  %550 = vmax.xlane.f32.xlu0 %v549
  %v551 = vpop.xlane.xlu0 %550
  %v552 = vsel %vm542, %v529, -inf
  %553 = vmax.xlane.f32.xlu0 %v552
  %v554 = vpop.xlane.xlu0 %553
  %v555 = vsel %vm542, %v532, -inf
  %556 = vmax.xlane.f32.xlu0 %v555
  %v557 = vpop.xlane.xlu0 %556
  %v558 = vsel %vm542, %v537, -inf
  %559 = vmax.xlane.f32.xlu0 %v558
  %v560 = vpop.xlane.xlu0 %559
  %v561 = vsub.f32 %v463, %v545
  %v562 = vsub.f32 %v466, %v548
  %v563 = vsub.f32 %v471, %v551
  %v564 = vsub.f32 %v529, %v554
  %v565 = vsub.f32 %v532, %v557
  %v566 = vsub.f32 %v537, %v560
  %v567 = vmul.f32 %v561, 1.442695
  %v568 = vpow.pop %v567
  %v569 = vmul.f32 %v562, 1.442695
  %v570 = vpow.pop %v569
  %v571 = vmul.f32 %v563, 1.442695
  %v572 = vpow.pop %v571
  %v573 = vmul.f32 %v564, 1.442695
  %v574 = vpow.pop %v573
  %v575 = vmul.f32 %v565, 1.442695
  %v576 = vpow.pop %v575
  %v577 = vmul.f32 %v566, 1.442695
  %v578 = vpow.pop %v577
  %v579 = vsel %vm542, %v568, 0.0
  %580 = vadd.xlane.f32.xlu0 %v579
  %v581 = vpop.xlane.xlu0 %580
  %v582 = vsel %vm542, %v570, 0.0
  %583 = vadd.xlane.f32.xlu0 %v582
  %v584 = vpop.xlane.xlu0 %583
  %v585 = vsel %vm542, %v572, 0.0
  %586 = vadd.xlane.f32.xlu0 %v585
  %v587 = vpop.xlane.xlu0 %586
  %v588 = vsel %vm542, %v574, 0.0
  %589 = vadd.xlane.f32.xlu0 %v588
  %v590 = vpop.xlane.xlu0 %589
  %v591 = vsel %vm542, %v576, 0.0
  %592 = vadd.xlane.f32.xlu0 %v591
  %v593 = vpop.xlane.xlu0 %592
  %v594 = vsel %vm542, %v578, 0.0
  %595 = vadd.xlane.f32.xlu0 %v594
  %v596 = vpop.xlane.xlu0 %595
  %v597 = vrcp.pop %v581
  %v598 = vrcp.pop %v584
  %v599 = vrcp.pop %v587
  %v600 = vrcp.pop %v590
  %v601 = vrcp.pop %v593
  %v602 = vrcp.pop %v596
  %v603 = vmul.f32 %v568, %v597
  %v604 = vmul.f32 %v570, %v598
  %v605 = vmul.f32 %v572, %v599
  %v606 = vmul.f32 %v574, %v600
  %v607 = vmul.f32 %v576, %v601
  %v608 = vmul.f32 %v578, %v602
  %v609 = vpack.c.bf16 %v604, %v603
  %v610 = vpack.c.bf16 %v605, %v605
  %v611 = vpack.c.bf16 %v607, %v606
  %v612 = vpack.c.bf16 %v608, %v608
  %613 = vrot.lane.b32.xlu0 %v405, 64
  %v614 = vpop.permute.xlu0 %613
  %615 = vrot.lane.b32.xlu0 %v406, 64
  %v616 = vpop.permute.xlu0 %615
  %v619 = vsel %vm542, %v609, 0
  %v622 = vsel %vm542, %v610, 0
  %vm624 = vcmask 1043456
  %v626 = vsel %vm624, %v616, 0
  %628 = vmatprep.subr.bf16.mxu0 0
  %629 = vmatpush1.bf16.msra.mxu0 %v614
  %630 = vmatprep.subr.bf16.mxu0 0
  %631 = vmatpush1.bf16.msra.mxu0 %v626
  %632 = vmatprep.subr.bf16.mxu0 0
  %633 = vmatpush1.bf16.msra.mxu0 0
  %634 = vmatprep.subr.bf16.mxu0 0
  %635 = vmatpush1.bf16.msra.mxu0 0
  %636 = vmatprep.subr.bf16.mxu0 0
  %637 = vmatpush1.bf16.msra.mxu0 0
  %638 = vmatprep.subr.bf16.mxu0 0
  %639 = vmatpush1.bf16.msra.mxu0 0
  %640 = vmatprep.subr.bf16.mxu0 0
  %641 = vmatpush1.bf16.msra.mxu0 0
  %642 = vmatprep.subr.bf16.mxu0 0
  %643 = vmatpush1.bf16.msra.mxu0 0
  %644 = vmatprep.subr.bf16.mxu0 0
  %645 = vmatpush1.bf16.msra.mxu0 0
  %646 = vmatprep.subr.bf16.mxu0 0
  %647 = vmatpush1.bf16.msra.mxu0 0
  %648 = vmatprep.subr.bf16.mxu0 0
  %649 = vmatpush1.bf16.msra.mxu0 0
  %650 = vmatprep.subr.bf16.mxu0 0
  %651 = vmatpush1.bf16.msra.mxu0 0
  %652 = vmatprep.subr.bf16.mxu0 0
  %653 = vmatpush1.bf16.msra.mxu0 0
  %654 = vmatprep.subr.bf16.mxu0 0
  %655 = vmatpush1.bf16.msra.mxu0 0
  %656 = vmatprep.subr.bf16.mxu0 0
  %657 = vmatpush1.bf16.msra.mxu0 0
  %658 = vmatprep.subr.bf16.mxu0 0
  %659 = vmatpush1.bf16.msra.mxu0 0
  %660 = vmatprep.mubr.bf16.mxu0 0
  %661 = vmatmul.mubr.bf16.gmra.mrb[0].mxu0 %v619
  %v662 = vpop.f32.mrb[0].mxu0
  %v663 = vadd.f32 0.0, %v662
  %v664 = vpop.f32.mrb[0].mxu0
  %v665 = vpop.f32.mrb[0].mxu0
  %v666 = vadd.f32 0.0, %v665
  %v667 = vpop.f32.mrb[0].mxu0
  %668 = vmatprep.mubr.bf16.mxu0 0
  %669 = vmatmul.mubr.bf16.gmra.mrb[0].mxu0 %v622
  %v670 = vpop.f32.mrb[0].mxu0
  %v671 = vadd.f32 0.0, %v670
  %v672 = vpop.f32.mrb[0].mxu0
  %v673 = vpop.f32.mrb[0].mxu0
  %v674 = vpop.f32.mrb[0].mxu0
  %675 = vdwg.mxu0
  %676 = vrot.lane.b32.xlu0 %v407, 64
  %v677 = vpop.permute.xlu0 %676
  %678 = vrot.lane.b32.xlu0 %v408, 64
  %v679 = vpop.permute.xlu0 %678
  %v682 = vsel %vm542, %v611, 0
  %v685 = vsel %vm542, %v612, 0
  %v688 = vsel %vm624, %v679, 0
  %690 = vmatprep.subr.bf16.mxu0 0
  %691 = vmatpush1.bf16.msra.mxu0 %v677
  %692 = vmatprep.subr.bf16.mxu0 0
  %693 = vmatpush1.bf16.msra.mxu0 %v688
  %694 = vmatprep.subr.bf16.mxu0 0
  %695 = vmatpush1.bf16.msra.mxu0 0
  %696 = vmatprep.subr.bf16.mxu0 0
  %697 = vmatpush1.bf16.msra.mxu0 0
  %698 = vmatprep.subr.bf16.mxu0 0
  %699 = vmatpush1.bf16.msra.mxu0 0
  %700 = vmatprep.subr.bf16.mxu0 0
  %701 = vmatpush1.bf16.msra.mxu0 0
  %702 = vmatprep.subr.bf16.mxu0 0
  %703 = vmatpush1.bf16.msra.mxu0 0
  %704 = vmatprep.subr.bf16.mxu0 0
  %705 = vmatpush1.bf16.msra.mxu0 0
  %706 = vmatprep.subr.bf16.mxu0 0
  %707 = vmatpush1.bf16.msra.mxu0 0
  %708 = vmatprep.subr.bf16.mxu0 0
  %709 = vmatpush1.bf16.msra.mxu0 0
  %710 = vmatprep.subr.bf16.mxu0 0
  %711 = vmatpush1.bf16.msra.mxu0 0
  %712 = vmatprep.subr.bf16.mxu0 0
  %713 = vmatpush1.bf16.msra.mxu0 0
  %714 = vmatprep.subr.bf16.mxu0 0
  %715 = vmatpush1.bf16.msra.mxu0 0
  %716 = vmatprep.subr.bf16.mxu0 0
  %717 = vmatpush1.bf16.msra.mxu0 0
  %718 = vmatprep.subr.bf16.mxu0 0
  %719 = vmatpush1.bf16.msra.mxu0 0
  %720 = vmatprep.subr.bf16.mxu0 0
  %721 = vmatpush1.bf16.msra.mxu0 0
  %722 = vmatprep.mubr.bf16.mxu0 0
  %723 = vmatmul.mubr.bf16.gmra.mrb[0].mxu0 %v682
  %v724 = vpop.f32.mrb[0].mxu0
  %v725 = vadd.f32 0.0, %v724
  %v726 = vpop.f32.mrb[0].mxu0
  %v727 = vpop.f32.mrb[0].mxu0
  %v728 = vadd.f32 0.0, %v727
  %v729 = vpop.f32.mrb[0].mxu0
  %730 = vmatprep.mubr.bf16.mxu0 0
  %731 = vmatmul.mubr.bf16.gmra.mrb[0].mxu0 %v685
  %v732 = vpop.f32.mrb[0].mxu0
  %v733 = vadd.f32 0.0, %v732
  %v734 = vpop.f32.mrb[0].mxu0
  %v735 = vpop.f32.mrb[0].mxu0
  %v736 = vpop.f32.mrb[0].mxu0
  %737 = vdwg.mxu0
  %738 = vrot.lane.b32.xlu0 %v405, 120
  %v739 = vpop.permute.xlu0 %738
  %740 = vrot.lane.b32.xlu0 %v406, 120
  %v741 = vpop.permute.xlu0 %740
  %742 = vrot.lane.b32.xlu0 %v405, 88
  %v743 = vpop.permute.xlu0 %742
  %744 = vrot.lane.b32.xlu0 %v406, 88
  %v745 = vpop.permute.xlu0 %744
  %v747 = vsel %vm415, %v739, 0
  %v750 = vsel %vm415, %v741, 0
  %v753 = vsel %vm415, %v743, 0
  %v756 = vsel %vm415, %v745, 0
  %758 = vmatprep.subr.bf16.mxu0 0
  %759 = vmatpush1.bf16.xpose.msra.mxu0 %v753
  %760 = vmatprep.subr.bf16.mxu0 0
  %761 = vmatpush1.bf16.xpose.msra.mxu0 %v756
  %762 = vmatprep.subr.bf16.mxu0 0
  %763 = vmatpush1.bf16.xpose.msra.mxu0 0
  %764 = vmatprep.subr.bf16.mxu0 0
  %765 = vmatpush1.bf16.xpose.msra.mxu0 0
  %766 = vmatprep.subr.bf16.mxu0 0
  %767 = vmatpush1.bf16.xpose.msra.mxu0 0
  %768 = vmatprep.subr.bf16.mxu0 0
  %769 = vmatpush1.bf16.xpose.msra.mxu0 0
  %770 = vmatprep.subr.bf16.mxu0 0
  %771 = vmatpush1.bf16.xpose.msra.mxu0 0
  %772 = vmatprep.subr.bf16.mxu0 0
  %773 = vmatpush1.bf16.xpose.msra.mxu0 0
  %774 = vmatprep.subr.bf16.mxu0 0
  %775 = vmatpush1.bf16.xpose.msra.mxu0 0
  %776 = vmatprep.subr.bf16.mxu0 0
  %777 = vmatpush1.bf16.xpose.msra.mxu0 0
  %778 = vmatprep.subr.bf16.mxu0 0
  %779 = vmatpush1.bf16.xpose.msra.mxu0 0
  %780 = vmatprep.subr.bf16.mxu0 0
  %781 = vmatpush1.bf16.xpose.msra.mxu0 0
  %782 = vmatprep.subr.bf16.mxu0 0
  %783 = vmatpush1.bf16.xpose.msra.mxu0 0
  %784 = vmatprep.subr.bf16.mxu0 0
  %785 = vmatpush1.bf16.xpose.msra.mxu0 0
  %786 = vmatprep.subr.bf16.mxu0 0
  %787 = vmatpush1.bf16.xpose.msra.mxu0 0
  %788 = vmatprep.subr.bf16.mxu0 0
  %789 = vmatpush1.bf16.xpose.msra.mxu0 0
  %790 = vmatprep.mubr.bf16.mxu0 0
  %791 = vmatmul.mubr.bf16.gmra.mrb[0].mxu0 %v747
  %v792 = vpop.f32.mrb[0].mxu0
  %v793 = vadd.f32 %v232, %v792
  %v794 = vpop.f32.mrb[0].mxu0
  %v795 = vpop.f32.mrb[0].mxu0
  %v796 = vadd.f32 %v232, %v795
  %v797 = vpop.f32.mrb[0].mxu0
  %798 = vmatprep.mubr.bf16.mxu0 0
  %799 = vmatmul.mubr.bf16.gmra.mrb[0].mxu0 %v750
  %v800 = vpop.f32.mrb[0].mxu0
  %v801 = vadd.f32 %v232, %v800
  %v802 = vpop.f32.mrb[0].mxu0
  %v803 = vpop.f32.mrb[0].mxu0
  %v804 = vpop.f32.mrb[0].mxu0
  %805 = vdwg.mxu0
  %806 = vrot.lane.b32.xlu0 %v407, 120
  %v807 = vpop.permute.xlu0 %806
  %808 = vrot.lane.b32.xlu0 %v408, 120
  %v809 = vpop.permute.xlu0 %808
  %810 = vrot.lane.b32.xlu0 %v407, 88
  %v811 = vpop.permute.xlu0 %810
  %812 = vrot.lane.b32.xlu0 %v408, 88
  %v813 = vpop.permute.xlu0 %812
  %v815 = vsel %vm415, %v807, 0
  %v818 = vsel %vm415, %v809, 0
  %v821 = vsel %vm415, %v811, 0
  %v824 = vsel %vm415, %v813, 0
  %826 = vmatprep.subr.bf16.mxu0 0
  %827 = vmatpush1.bf16.xpose.msra.mxu0 %v821
  %828 = vmatprep.subr.bf16.mxu0 0
  %829 = vmatpush1.bf16.xpose.msra.mxu0 %v824
  %830 = vmatprep.subr.bf16.mxu0 0
  %831 = vmatpush1.bf16.xpose.msra.mxu0 0
  %832 = vmatprep.subr.bf16.mxu0 0
  %833 = vmatpush1.bf16.xpose.msra.mxu0 0
  %834 = vmatprep.subr.bf16.mxu0 0
  %835 = vmatpush1.bf16.xpose.msra.mxu0 0
  %836 = vmatprep.subr.bf16.mxu0 0
  %837 = vmatpush1.bf16.xpose.msra.mxu0 0
  %838 = vmatprep.subr.bf16.mxu0 0
  %839 = vmatpush1.bf16.xpose.msra.mxu0 0
  %840 = vmatprep.subr.bf16.mxu0 0
  %841 = vmatpush1.bf16.xpose.msra.mxu0 0
  %842 = vmatprep.subr.bf16.mxu0 0
  %843 = vmatpush1.bf16.xpose.msra.mxu0 0
  %844 = vmatprep.subr.bf16.mxu0 0
  %845 = vmatpush1.bf16.xpose.msra.mxu0 0
  %846 = vmatprep.subr.bf16.mxu0 0
  %847 = vmatpush1.bf16.xpose.msra.mxu0 0
  %848 = vmatprep.subr.bf16.mxu0 0
  %849 = vmatpush1.bf16.xpose.msra.mxu0 0
  %850 = vmatprep.subr.bf16.mxu0 0
  %851 = vmatpush1.bf16.xpose.msra.mxu0 0
  %852 = vmatprep.subr.bf16.mxu0 0
  %853 = vmatpush1.bf16.xpose.msra.mxu0 0
  %854 = vmatprep.subr.bf16.mxu0 0
  %855 = vmatpush1.bf16.xpose.msra.mxu0 0
  %856 = vmatprep.subr.bf16.mxu0 0
  %857 = vmatpush1.bf16.xpose.msra.mxu0 0
  %858 = vmatprep.mubr.bf16.mxu0 0
  %859 = vmatmul.mubr.bf16.gmra.mrb[0].mxu0 %v815
  %v860 = vpop.f32.mrb[0].mxu0
  %v861 = vadd.f32 %v232, %v860
  %v862 = vpop.f32.mrb[0].mxu0
  %v863 = vpop.f32.mrb[0].mxu0
  %v864 = vadd.f32 %v232, %v863
  %v865 = vpop.f32.mrb[0].mxu0
  %866 = vmatprep.mubr.bf16.mxu0 0
  %867 = vmatmul.mubr.bf16.gmra.mrb[0].mxu0 %v818
  %v868 = vpop.f32.mrb[0].mxu0
  %v869 = vadd.f32 %v232, %v868
  %v870 = vpop.f32.mrb[0].mxu0
  %v871 = vpop.f32.mrb[0].mxu0
  %v872 = vpop.f32.mrb[0].mxu0
  %873 = vdwg.mxu0
  %v874 = vsel %vm542, %v793, -inf
  %875 = vmax.xlane.f32.xlu0 %v874
  %v876 = vpop.xlane.xlu0 %875
  %v877 = vsel %vm542, %v796, -inf
  %878 = vmax.xlane.f32.xlu0 %v877
  %v879 = vpop.xlane.xlu0 %878
  %v880 = vsel %vm542, %v801, -inf
  %881 = vmax.xlane.f32.xlu0 %v880
  %v882 = vpop.xlane.xlu0 %881
  %v883 = vsel %vm542, %v861, -inf
  %884 = vmax.xlane.f32.xlu0 %v883
  %v885 = vpop.xlane.xlu0 %884
  %v886 = vsel %vm542, %v864, -inf
  %887 = vmax.xlane.f32.xlu0 %v886
  %v888 = vpop.xlane.xlu0 %887
  %v889 = vsel %vm542, %v869, -inf
  %890 = vmax.xlane.f32.xlu0 %v889
  %v891 = vpop.xlane.xlu0 %890
  %v892 = vsub.f32 %v793, %v876
  %v893 = vsub.f32 %v796, %v879
  %v894 = vsub.f32 %v801, %v882
  %v895 = vsub.f32 %v861, %v885
  %v896 = vsub.f32 %v864, %v888
  %v897 = vsub.f32 %v869, %v891
  %v898 = vmul.f32 %v892, 1.442695
  %v899 = vpow.pop %v898
  %v900 = vmul.f32 %v893, 1.442695
  %v901 = vpow.pop %v900
  %v902 = vmul.f32 %v894, 1.442695
  %v903 = vpow.pop %v902
  %v904 = vmul.f32 %v895, 1.442695
  %v905 = vpow.pop %v904
  %v906 = vmul.f32 %v896, 1.442695
  %v907 = vpow.pop %v906
  %v908 = vmul.f32 %v897, 1.442695
  %v909 = vpow.pop %v908
  %v910 = vsel %vm542, %v899, 0.0
  %911 = vadd.xlane.f32.xlu0 %v910
  %v912 = vpop.xlane.xlu0 %911
  %v913 = vsel %vm542, %v901, 0.0
  %914 = vadd.xlane.f32.xlu0 %v913
  %v915 = vpop.xlane.xlu0 %914
  %v916 = vsel %vm542, %v903, 0.0
  %917 = vadd.xlane.f32.xlu0 %v916
  %v918 = vpop.xlane.xlu0 %917
  %v919 = vsel %vm542, %v905, 0.0
  %920 = vadd.xlane.f32.xlu0 %v919
  %v921 = vpop.xlane.xlu0 %920
  %v922 = vsel %vm542, %v907, 0.0
  %923 = vadd.xlane.f32.xlu0 %v922
  %v924 = vpop.xlane.xlu0 %923
  %v925 = vsel %vm542, %v909, 0.0
  %926 = vadd.xlane.f32.xlu0 %v925
  %v927 = vpop.xlane.xlu0 %926
  %v928 = vrcp.pop %v912
  %v929 = vrcp.pop %v915
  %v930 = vrcp.pop %v918
  %v931 = vrcp.pop %v921
  %v932 = vrcp.pop %v924
  %v933 = vrcp.pop %v927
  %v934 = vmul.f32 %v899, %v928
  %v935 = vmul.f32 %v901, %v929
  %v936 = vmul.f32 %v903, %v930
  %v937 = vmul.f32 %v905, %v931
  %v938 = vmul.f32 %v907, %v932
  %v939 = vmul.f32 %v909, %v933
  %v940 = vpack.c.bf16 %v935, %v934
  %v941 = vpack.c.bf16 %v936, %v936
  %v942 = vpack.c.bf16 %v938, %v937
  %v943 = vpack.c.bf16 %v939, %v939
  %944 = vrot.lane.b32.xlu0 %v405, 56
  %v945 = vpop.permute.xlu0 %944
  %946 = vrot.lane.b32.xlu0 %v406, 56
  %v947 = vpop.permute.xlu0 %946
  %v950 = vsel %vm542, %v940, 0
  %v953 = vsel %vm542, %v941, 0
  %v956 = vsel %vm624, %v947, 0
  %958 = vmatprep.subr.bf16.mxu0 0
  %959 = vmatpush1.bf16.msra.mxu0 %v945
  %960 = vmatprep.subr.bf16.mxu0 0
  %961 = vmatpush1.bf16.msra.mxu0 %v956
  %962 = vmatprep.subr.bf16.mxu0 0
  %963 = vmatpush1.bf16.msra.mxu0 0
  %964 = vmatprep.subr.bf16.mxu0 0
  %965 = vmatpush1.bf16.msra.mxu0 0
  %966 = vmatprep.subr.bf16.mxu0 0
  %967 = vmatpush1.bf16.msra.mxu0 0
  %968 = vmatprep.subr.bf16.mxu0 0
  %969 = vmatpush1.bf16.msra.mxu0 0
  %970 = vmatprep.subr.bf16.mxu0 0
  %971 = vmatpush1.bf16.msra.mxu0 0
  %972 = vmatprep.subr.bf16.mxu0 0
  %973 = vmatpush1.bf16.msra.mxu0 0
  %974 = vmatprep.subr.bf16.mxu0 0
  %975 = vmatpush1.bf16.msra.mxu0 0
  %976 = vmatprep.subr.bf16.mxu0 0
  %977 = vmatpush1.bf16.msra.mxu0 0
  %978 = vmatprep.subr.bf16.mxu0 0
  %979 = vmatpush1.bf16.msra.mxu0 0
  %980 = vmatprep.subr.bf16.mxu0 0
  %981 = vmatpush1.bf16.msra.mxu0 0
  %982 = vmatprep.subr.bf16.mxu0 0
  %983 = vmatpush1.bf16.msra.mxu0 0
  %984 = vmatprep.subr.bf16.mxu0 0
  %985 = vmatpush1.bf16.msra.mxu0 0
  %986 = vmatprep.subr.bf16.mxu0 0
  %987 = vmatpush1.bf16.msra.mxu0 0
  %988 = vmatprep.subr.bf16.mxu0 0
  %989 = vmatpush1.bf16.msra.mxu0 0
  %990 = vmatprep.mubr.bf16.mxu0 0
  %991 = vmatmul.mubr.bf16.gmra.mrb[0].mxu0 %v950
  %v992 = vpop.f32.mrb[0].mxu0
  %v993 = vadd.f32 0.0, %v992
  %v994 = vpop.f32.mrb[0].mxu0
  %v995 = vpop.f32.mrb[0].mxu0
  %v996 = vadd.f32 0.0, %v995
  %v997 = vpop.f32.mrb[0].mxu0
  %998 = vmatprep.mubr.bf16.mxu0 0
  %999 = vmatmul.mubr.bf16.gmra.mrb[0].mxu0 %v953
  %v1000 = vpop.f32.mrb[0].mxu0
  %v1001 = vadd.f32 0.0, %v1000
  %v1002 = vpop.f32.mrb[0].mxu0
  %v1003 = vpop.f32.mrb[0].mxu0
  %v1004 = vpop.f32.mrb[0].mxu0
  %1005 = vdwg.mxu0
  %1006 = vrot.lane.b32.xlu0 %v407, 56
  %v1007 = vpop.permute.xlu0 %1006
  %1008 = vrot.lane.b32.xlu0 %v408, 56
  %v1009 = vpop.permute.xlu0 %1008
  %v1012 = vsel %vm542, %v942, 0
  %v1015 = vsel %vm542, %v943, 0
  %v1018 = vsel %vm624, %v1009, 0
  %1020 = vmatprep.subr.bf16.mxu0 0
  %1021 = vmatpush1.bf16.msra.mxu0 %v1007
  %1022 = vmatprep.subr.bf16.mxu0 0
  %1023 = vmatpush1.bf16.msra.mxu0 %v1018
  %1024 = vmatprep.subr.bf16.mxu0 0
  %1025 = vmatpush1.bf16.msra.mxu0 0
  %1026 = vmatprep.subr.bf16.mxu0 0
  %1027 = vmatpush1.bf16.msra.mxu0 0
  %1028 = vmatprep.subr.bf16.mxu0 0
  %1029 = vmatpush1.bf16.msra.mxu0 0
  %1030 = vmatprep.subr.bf16.mxu0 0
  %1031 = vmatpush1.bf16.msra.mxu0 0
  %1032 = vmatprep.subr.bf16.mxu0 0
  %1033 = vmatpush1.bf16.msra.mxu0 0
  %1034 = vmatprep.subr.bf16.mxu0 0
  %1035 = vmatpush1.bf16.msra.mxu0 0
  %1036 = vmatprep.subr.bf16.mxu0 0
  %1037 = vmatpush1.bf16.msra.mxu0 0
  %1038 = vmatprep.subr.bf16.mxu0 0
  %1039 = vmatpush1.bf16.msra.mxu0 0
  %1040 = vmatprep.subr.bf16.mxu0 0
  %1041 = vmatpush1.bf16.msra.mxu0 0
  %1042 = vmatprep.subr.bf16.mxu0 0
  %1043 = vmatpush1.bf16.msra.mxu0 0
  %1044 = vmatprep.subr.bf16.mxu0 0
  %1045 = vmatpush1.bf16.msra.mxu0 0
  %1046 = vmatprep.subr.bf16.mxu0 0
  %1047 = vmatpush1.bf16.msra.mxu0 0
  %1048 = vmatprep.subr.bf16.mxu0 0
  %1049 = vmatpush1.bf16.msra.mxu0 0
  %1050 = vmatprep.subr.bf16.mxu0 0
  %1051 = vmatpush1.bf16.msra.mxu0 0
  %1052 = vmatprep.mubr.bf16.mxu0 0
  %1053 = vmatmul.mubr.bf16.gmra.mrb[0].mxu0 %v1012
  %v1054 = vpop.f32.mrb[0].mxu0
  %v1055 = vadd.f32 0.0, %v1054
  %v1056 = vpop.f32.mrb[0].mxu0
  %v1057 = vpop.f32.mrb[0].mxu0
  %v1058 = vadd.f32 0.0, %v1057
  %v1059 = vpop.f32.mrb[0].mxu0
  %1060 = vmatprep.mubr.bf16.mxu0 0
  %1061 = vmatmul.mubr.bf16.gmra.mrb[0].mxu0 %v1015
  %v1062 = vpop.f32.mrb[0].mxu0
  %v1063 = vadd.f32 0.0, %v1062
  %v1064 = vpop.f32.mrb[0].mxu0
  %v1065 = vpop.f32.mrb[0].mxu0
  %v1066 = vpop.f32.mrb[0].mxu0
  %1067 = vdwg.mxu0
  %1068 = vrot.lane.b32.xlu0 %v405, 112
  %v1069 = vpop.permute.xlu0 %1068
  %1070 = vrot.lane.b32.xlu0 %v406, 112
  %v1071 = vpop.permute.xlu0 %1070
  %1072 = vrot.lane.b32.xlu0 %v405, 80
  %v1073 = vpop.permute.xlu0 %1072
  %1074 = vrot.lane.b32.xlu0 %v406, 80
  %v1075 = vpop.permute.xlu0 %1074
  %v1077 = vsel %vm415, %v1069, 0
  %v1080 = vsel %vm415, %v1071, 0
  %v1083 = vsel %vm415, %v1073, 0
  %v1086 = vsel %vm415, %v1075, 0
  %1088 = vmatprep.subr.bf16.mxu0 0
  %1089 = vmatpush1.bf16.xpose.msra.mxu0 %v1083
  %1090 = vmatprep.subr.bf16.mxu0 0
  %1091 = vmatpush1.bf16.xpose.msra.mxu0 %v1086
  %1092 = vmatprep.subr.bf16.mxu0 0
  %1093 = vmatpush1.bf16.xpose.msra.mxu0 0
  %1094 = vmatprep.subr.bf16.mxu0 0
  %1095 = vmatpush1.bf16.xpose.msra.mxu0 0
  %1096 = vmatprep.subr.bf16.mxu0 0
  %1097 = vmatpush1.bf16.xpose.msra.mxu0 0
  %1098 = vmatprep.subr.bf16.mxu0 0
  %1099 = vmatpush1.bf16.xpose.msra.mxu0 0
  %1100 = vmatprep.subr.bf16.mxu0 0
  %1101 = vmatpush1.bf16.xpose.msra.mxu0 0
  %1102 = vmatprep.subr.bf16.mxu0 0
  %1103 = vmatpush1.bf16.xpose.msra.mxu0 0
  %1104 = vmatprep.subr.bf16.mxu0 0
  %1105 = vmatpush1.bf16.xpose.msra.mxu0 0
  %1106 = vmatprep.subr.bf16.mxu0 0
  %1107 = vmatpush1.bf16.xpose.msra.mxu0 0
  %1108 = vmatprep.subr.bf16.mxu0 0
  %1109 = vmatpush1.bf16.xpose.msra.mxu0 0
  %1110 = vmatprep.subr.bf16.mxu0 0
  %1111 = vmatpush1.bf16.xpose.msra.mxu0 0
  %1112 = vmatprep.subr.bf16.mxu0 0
  %1113 = vmatpush1.bf16.xpose.msra.mxu0 0
  %1114 = vmatprep.subr.bf16.mxu0 0
  %1115 = vmatpush1.bf16.xpose.msra.mxu0 0
  %1116 = vmatprep.subr.bf16.mxu0 0
  %1117 = vmatpush1.bf16.xpose.msra.mxu0 0
  %1118 = vmatprep.subr.bf16.mxu0 0
  %1119 = vmatpush1.bf16.xpose.msra.mxu0 0
  %1120 = vmatprep.mubr.bf16.mxu0 0
  %1121 = vmatmul.mubr.bf16.gmra.mrb[0].mxu0 %v1077
  %v1122 = vpop.f32.mrb[0].mxu0
  %v1123 = vadd.f32 %v232, %v1122
  %v1124 = vpop.f32.mrb[0].mxu0
  %v1125 = vpop.f32.mrb[0].mxu0
  %v1126 = vadd.f32 %v232, %v1125
  %v1127 = vpop.f32.mrb[0].mxu0
  %1128 = vmatprep.mubr.bf16.mxu0 0
  %1129 = vmatmul.mubr.bf16.gmra.mrb[0].mxu0 %v1080
  %v1130 = vpop.f32.mrb[0].mxu0
  %v1131 = vadd.f32 %v232, %v1130
  %v1132 = vpop.f32.mrb[0].mxu0
  %v1133 = vpop.f32.mrb[0].mxu0
  %v1134 = vpop.f32.mrb[0].mxu0
  %1135 = vdwg.mxu0
  %1136 = vrot.lane.b32.xlu0 %v407, 112
  %v1137 = vpop.permute.xlu0 %1136
  %1138 = vrot.lane.b32.xlu0 %v408, 112
  %v1139 = vpop.permute.xlu0 %1138
  %1140 = vrot.lane.b32.xlu0 %v407, 80
  %v1141 = vpop.permute.xlu0 %1140
  %1142 = vrot.lane.b32.xlu0 %v408, 80
  %v1143 = vpop.permute.xlu0 %1142
  %v1145 = vsel %vm415, %v1137, 0
  %v1148 = vsel %vm415, %v1139, 0
  %v1151 = vsel %vm415, %v1141, 0
  %v1154 = vsel %vm415, %v1143, 0
  %1156 = vmatprep.subr.bf16.mxu0 0
  %1157 = vmatpush1.bf16.xpose.msra.mxu0 %v1151
  %1158 = vmatprep.subr.bf16.mxu0 0
  %1159 = vmatpush1.bf16.xpose.msra.mxu0 %v1154
  %1160 = vmatprep.subr.bf16.mxu0 0
  %1161 = vmatpush1.bf16.xpose.msra.mxu0 0
  %1162 = vmatprep.subr.bf16.mxu0 0
  %1163 = vmatpush1.bf16.xpose.msra.mxu0 0
  %1164 = vmatprep.subr.bf16.mxu0 0
  %1165 = vmatpush1.bf16.xpose.msra.mxu0 0
  %1166 = vmatprep.subr.bf16.mxu0 0
  %1167 = vmatpush1.bf16.xpose.msra.mxu0 0
  %1168 = vmatprep.subr.bf16.mxu0 0
  %1169 = vmatpush1.bf16.xpose.msra.mxu0 0
  %1170 = vmatprep.subr.bf16.mxu0 0
  %1171 = vmatpush1.bf16.xpose.msra.mxu0 0
  %1172 = vmatprep.subr.bf16.mxu0 0
  %1173 = vmatpush1.bf16.xpose.msra.mxu0 0
  %1174 = vmatprep.subr.bf16.mxu0 0
  %1175 = vmatpush1.bf16.xpose.msra.mxu0 0
  %1176 = vmatprep.subr.bf16.mxu0 0
  %1177 = vmatpush1.bf16.xpose.msra.mxu0 0
  %1178 = vmatprep.subr.bf16.mxu0 0
  %1179 = vmatpush1.bf16.xpose.msra.mxu0 0
  %1180 = vmatprep.subr.bf16.mxu0 0
  %1181 = vmatpush1.bf16.xpose.msra.mxu0 0
  %1182 = vmatprep.subr.bf16.mxu0 0
  %1183 = vmatpush1.bf16.xpose.msra.mxu0 0
  %1184 = vmatprep.subr.bf16.mxu0 0
  %1185 = vmatpush1.bf16.xpose.msra.mxu0 0
  %1186 = vmatprep.subr.bf16.mxu0 0
  %1187 = vmatpush1.bf16.xpose.msra.mxu0 0
  %1188 = vmatprep.mubr.bf16.mxu0 0
  %1189 = vmatmul.mubr.bf16.gmra.mrb[0].mxu0 %v1145
  %v1190 = vpop.f32.mrb[0].mxu0
  %v1191 = vadd.f32 %v232, %v1190
  %v1192 = vpop.f32.mrb[0].mxu0
  %v1193 = vpop.f32.mrb[0].mxu0
  %v1194 = vadd.f32 %v232, %v1193
  %v1195 = vpop.f32.mrb[0].mxu0
  %1196 = vmatprep.mubr.bf16.mxu0 0
  %1197 = vmatmul.mubr.bf16.gmra.mrb[0].mxu0 %v1148
  %v1198 = vpop.f32.mrb[0].mxu0
  %v1199 = vadd.f32 %v232, %v1198
  %v1200 = vpop.f32.mrb[0].mxu0
  %v1201 = vpop.f32.mrb[0].mxu0
  %v1202 = vpop.f32.mrb[0].mxu0
  %1203 = vdwg.mxu0
  %v1204 = vsel %vm542, %v1123, -inf
  %1205 = vmax.xlane.f32.xlu0 %v1204
  %v1206 = vpop.xlane.xlu0 %1205
  %v1207 = vsel %vm542, %v1126, -inf
  %1208 = vmax.xlane.f32.xlu0 %v1207
  %v1209 = vpop.xlane.xlu0 %1208
  %v1210 = vsel %vm542, %v1131, -inf
  %1211 = vmax.xlane.f32.xlu0 %v1210
  %v1212 = vpop.xlane.xlu0 %1211
  %v1213 = vsel %vm542, %v1191, -inf
  %1214 = vmax.xlane.f32.xlu0 %v1213
  %v1215 = vpop.xlane.xlu0 %1214
  %v1216 = vsel %vm542, %v1194, -inf
  %1217 = vmax.xlane.f32.xlu0 %v1216
  %v1218 = vpop.xlane.xlu0 %1217
  %v1219 = vsel %vm542, %v1199, -inf
  %1220 = vmax.xlane.f32.xlu0 %v1219
  %v1221 = vpop.xlane.xlu0 %1220
  %v1222 = vsub.f32 %v1123, %v1206
  %v1223 = vsub.f32 %v1126, %v1209
  %v1224 = vsub.f32 %v1131, %v1212
  %v1225 = vsub.f32 %v1191, %v1215
  %v1226 = vsub.f32 %v1194, %v1218
  %v1227 = vsub.f32 %v1199, %v1221
  %v1228 = vmul.f32 %v1222, 1.442695
  %v1229 = vpow.pop %v1228
  %v1230 = vmul.f32 %v1223, 1.442695
  %v1231 = vpow.pop %v1230
  %v1232 = vmul.f32 %v1224, 1.442695
  %v1233 = vpow.pop %v1232
  %v1234 = vmul.f32 %v1225, 1.442695
  %v1235 = vpow.pop %v1234
  %v1236 = vmul.f32 %v1226, 1.442695
  %v1237 = vpow.pop %v1236
  %v1238 = vmul.f32 %v1227, 1.442695
  %v1239 = vpow.pop %v1238
  %v1240 = vsel %vm542, %v1229, 0.0
  %1241 = vadd.xlane.f32.xlu0 %v1240
  %v1242 = vpop.xlane.xlu0 %1241
  %v1243 = vsel %vm542, %v1231, 0.0
  %1244 = vadd.xlane.f32.xlu0 %v1243
  %v1245 = vpop.xlane.xlu0 %1244
  %v1246 = vsel %vm542, %v1233, 0.0
  %1247 = vadd.xlane.f32.xlu0 %v1246
  %v1248 = vpop.xlane.xlu0 %1247
  %v1249 = vsel %vm542, %v1235, 0.0
  %1250 = vadd.xlane.f32.xlu0 %v1249
  %v1251 = vpop.xlane.xlu0 %1250
  %v1252 = vsel %vm542, %v1237, 0.0
  %1253 = vadd.xlane.f32.xlu0 %v1252
  %v1254 = vpop.xlane.xlu0 %1253
  %v1255 = vsel %vm542, %v1239, 0.0
  %1256 = vadd.xlane.f32.xlu0 %v1255
  %v1257 = vpop.xlane.xlu0 %1256
  %v1258 = vrcp.pop %v1242
  %v1259 = vrcp.pop %v1245
  %v1260 = vrcp.pop %v1248
  %v1261 = vrcp.pop %v1251
  %v1262 = vrcp.pop %v1254
  %v1263 = vrcp.pop %v1257
  %v1264 = vmul.f32 %v1229, %v1258
  %v1265 = vmul.f32 %v1231, %v1259
  %v1266 = vmul.f32 %v1233, %v1260
  %v1267 = vmul.f32 %v1235, %v1261
  %v1268 = vmul.f32 %v1237, %v1262
  %v1269 = vmul.f32 %v1239, %v1263
  %v1270 = vpack.c.bf16 %v1265, %v1264
  %v1271 = vpack.c.bf16 %v1266, %v1266
  %v1272 = vpack.c.bf16 %v1268, %v1267
  %v1273 = vpack.c.bf16 %v1269, %v1269
  %1274 = vrot.lane.b32.xlu0 %v405, 48
  %v1275 = vpop.permute.xlu0 %1274
  %1276 = vrot.lane.b32.xlu0 %v406, 48
  %v1277 = vpop.permute.xlu0 %1276
  %v1280 = vsel %vm542, %v1270, 0
  %v1283 = vsel %vm542, %v1271, 0
  %v1286 = vsel %vm624, %v1277, 0
  %1288 = vmatprep.subr.bf16.mxu0 0
  %1289 = vmatpush1.bf16.msra.mxu0 %v1275
  %1290 = vmatprep.subr.bf16.mxu0 0
  %1291 = vmatpush1.bf16.msra.mxu0 %v1286
  %1292 = vmatprep.subr.bf16.mxu0 0
  %1293 = vmatpush1.bf16.msra.mxu0 0
  %1294 = vmatprep.subr.bf16.mxu0 0
  %1295 = vmatpush1.bf16.msra.mxu0 0
  %1296 = vmatprep.subr.bf16.mxu0 0
  %1297 = vmatpush1.bf16.msra.mxu0 0
  %1298 = vmatprep.subr.bf16.mxu0 0
  %1299 = vmatpush1.bf16.msra.mxu0 0
  %1300 = vmatprep.subr.bf16.mxu0 0
  %1301 = vmatpush1.bf16.msra.mxu0 0
  %1302 = vmatprep.subr.bf16.mxu0 0
  %1303 = vmatpush1.bf16.msra.mxu0 0
  %1304 = vmatprep.subr.bf16.mxu0 0
  %1305 = vmatpush1.bf16.msra.mxu0 0
  %1306 = vmatprep.subr.bf16.mxu0 0
  %1307 = vmatpush1.bf16.msra.mxu0 0
  %1308 = vmatprep.subr.bf16.mxu0 0
  %1309 = vmatpush1.bf16.msra.mxu0 0
  %1310 = vmatprep.subr.bf16.mxu0 0
  %1311 = vmatpush1.bf16.msra.mxu0 0
  %1312 = vmatprep.subr.bf16.mxu0 0
  %1313 = vmatpush1.bf16.msra.mxu0 0
  %1314 = vmatprep.subr.bf16.mxu0 0
  %1315 = vmatpush1.bf16.msra.mxu0 0
  %1316 = vmatprep.subr.bf16.mxu0 0
  %1317 = vmatpush1.bf16.msra.mxu0 0
  %1318 = vmatprep.subr.bf16.mxu0 0
  %1319 = vmatpush1.bf16.msra.mxu0 0
  %1320 = vmatprep.mubr.bf16.mxu0 0
  %1321 = vmatmul.mubr.bf16.gmra.mrb[0].mxu0 %v1280
  %v1322 = vpop.f32.mrb[0].mxu0
  %v1323 = vadd.f32 0.0, %v1322
  %v1324 = vpop.f32.mrb[0].mxu0
  %v1325 = vpop.f32.mrb[0].mxu0
  %v1326 = vadd.f32 0.0, %v1325
  %v1327 = vpop.f32.mrb[0].mxu0
  %1328 = vmatprep.mubr.bf16.mxu0 0
  %1329 = vmatmul.mubr.bf16.gmra.mrb[0].mxu0 %v1283
  %v1330 = vpop.f32.mrb[0].mxu0
  %v1331 = vadd.f32 0.0, %v1330
  %v1332 = vpop.f32.mrb[0].mxu0
  %v1333 = vpop.f32.mrb[0].mxu0
  %v1334 = vpop.f32.mrb[0].mxu0
  %1335 = vdwg.mxu0
  %1336 = vrot.lane.b32.xlu0 %v407, 48
  %v1337 = vpop.permute.xlu0 %1336
  %1338 = vrot.lane.b32.xlu0 %v408, 48
  %v1339 = vpop.permute.xlu0 %1338
  %v1342 = vsel %vm542, %v1272, 0
  %v1345 = vsel %vm542, %v1273, 0
  %v1348 = vsel %vm624, %v1339, 0
  %1350 = vmatprep.subr.bf16.mxu0 0
  %1351 = vmatpush1.bf16.msra.mxu0 %v1337
  %1352 = vmatprep.subr.bf16.mxu0 0
  %1353 = vmatpush1.bf16.msra.mxu0 %v1348
  %1354 = vmatprep.subr.bf16.mxu0 0
  %1355 = vmatpush1.bf16.msra.mxu0 0
  %1356 = vmatprep.subr.bf16.mxu0 0
  %1357 = vmatpush1.bf16.msra.mxu0 0
  %1358 = vmatprep.subr.bf16.mxu0 0
  %1359 = vmatpush1.bf16.msra.mxu0 0
  %1360 = vmatprep.subr.bf16.mxu0 0
  %1361 = vmatpush1.bf16.msra.mxu0 0
  %1362 = vmatprep.subr.bf16.mxu0 0
  %1363 = vmatpush1.bf16.msra.mxu0 0
  %1364 = vmatprep.subr.bf16.mxu0 0
  %1365 = vmatpush1.bf16.msra.mxu0 0
  %1366 = vmatprep.subr.bf16.mxu0 0
  %1367 = vmatpush1.bf16.msra.mxu0 0
  %1368 = vmatprep.subr.bf16.mxu0 0
  %1369 = vmatpush1.bf16.msra.mxu0 0
  %1370 = vmatprep.subr.bf16.mxu0 0
  %1371 = vmatpush1.bf16.msra.mxu0 0
  %1372 = vmatprep.subr.bf16.mxu0 0
  %1373 = vmatpush1.bf16.msra.mxu0 0
  %1374 = vmatprep.subr.bf16.mxu0 0
  %1375 = vmatpush1.bf16.msra.mxu0 0
  %1376 = vmatprep.subr.bf16.mxu0 0
  %1377 = vmatpush1.bf16.msra.mxu0 0
  %1378 = vmatprep.subr.bf16.mxu0 0
  %1379 = vmatpush1.bf16.msra.mxu0 0
  %1380 = vmatprep.subr.bf16.mxu0 0
  %1381 = vmatpush1.bf16.msra.mxu0 0
  %1382 = vmatprep.mubr.bf16.mxu0 0
  %1383 = vmatmul.mubr.bf16.gmra.mrb[0].mxu0 %v1342
  %v1384 = vpop.f32.mrb[0].mxu0
  %v1385 = vadd.f32 0.0, %v1384
  %v1386 = vpop.f32.mrb[0].mxu0
  %v1387 = vpop.f32.mrb[0].mxu0
  %v1388 = vadd.f32 0.0, %v1387
  %v1389 = vpop.f32.mrb[0].mxu0
  %1390 = vmatprep.mubr.bf16.mxu0 0
  %1391 = vmatmul.mubr.bf16.gmra.mrb[0].mxu0 %v1345
  %v1392 = vpop.f32.mrb[0].mxu0
  %v1393 = vadd.f32 0.0, %v1392
  %v1394 = vpop.f32.mrb[0].mxu0
  %v1395 = vpop.f32.mrb[0].mxu0
  %v1396 = vpop.f32.mrb[0].mxu0
  %1397 = vdwg.mxu0
  %1398 = vrot.lane.b32.xlu0 %v405, 104
  %v1399 = vpop.permute.xlu0 %1398
  %1400 = vrot.lane.b32.xlu0 %v406, 104
  %v1401 = vpop.permute.xlu0 %1400
  %1402 = vrot.lane.b32.xlu0 %v405, 72
  %v1403 = vpop.permute.xlu0 %1402
  %1404 = vrot.lane.b32.xlu0 %v406, 72
  %v1405 = vpop.permute.xlu0 %1404
  %v1407 = vsel %vm415, %v1399, 0
  %v1410 = vsel %vm415, %v1401, 0
  %v1413 = vsel %vm415, %v1403, 0
  %v1416 = vsel %vm415, %v1405, 0
  %1418 = vmatprep.subr.bf16.mxu0 0
  %1419 = vmatpush1.bf16.xpose.msra.mxu0 %v1413
  %1420 = vmatprep.subr.bf16.mxu0 0
  %1421 = vmatpush1.bf16.xpose.msra.mxu0 %v1416
  %1422 = vmatprep.subr.bf16.mxu0 0
  %1423 = vmatpush1.bf16.xpose.msra.mxu0 0
  %1424 = vmatprep.subr.bf16.mxu0 0
  %1425 = vmatpush1.bf16.xpose.msra.mxu0 0
  %1426 = vmatprep.subr.bf16.mxu0 0
  %1427 = vmatpush1.bf16.xpose.msra.mxu0 0
  %1428 = vmatprep.subr.bf16.mxu0 0
  %1429 = vmatpush1.bf16.xpose.msra.mxu0 0
  %1430 = vmatprep.subr.bf16.mxu0 0
  %1431 = vmatpush1.bf16.xpose.msra.mxu0 0
  %1432 = vmatprep.subr.bf16.mxu0 0
  %1433 = vmatpush1.bf16.xpose.msra.mxu0 0
  %1434 = vmatprep.subr.bf16.mxu0 0
  %1435 = vmatpush1.bf16.xpose.msra.mxu0 0
  %1436 = vmatprep.subr.bf16.mxu0 0
  %1437 = vmatpush1.bf16.xpose.msra.mxu0 0
  %1438 = vmatprep.subr.bf16.mxu0 0
  %1439 = vmatpush1.bf16.xpose.msra.mxu0 0
  %1440 = vmatprep.subr.bf16.mxu0 0
  %1441 = vmatpush1.bf16.xpose.msra.mxu0 0
  %1442 = vmatprep.subr.bf16.mxu0 0
  %1443 = vmatpush1.bf16.xpose.msra.mxu0 0
  %1444 = vmatprep.subr.bf16.mxu0 0
  %1445 = vmatpush1.bf16.xpose.msra.mxu0 0
  %1446 = vmatprep.subr.bf16.mxu0 0
  %1447 = vmatpush1.bf16.xpose.msra.mxu0 0
  %1448 = vmatprep.subr.bf16.mxu0 0
  %1449 = vmatpush1.bf16.xpose.msra.mxu0 0
  %1450 = vmatprep.mubr.bf16.mxu0 0
  %1451 = vmatmul.mubr.bf16.gmra.mrb[0].mxu0 %v1407
  %v1452 = vpop.f32.mrb[0].mxu0
  %v1453 = vadd.f32 %v232, %v1452
  %v1454 = vpop.f32.mrb[0].mxu0
  %v1455 = vpop.f32.mrb[0].mxu0
  %v1456 = vadd.f32 %v232, %v1455
  %v1457 = vpop.f32.mrb[0].mxu0
  %1458 = vmatprep.mubr.bf16.mxu0 0
  %1459 = vmatmul.mubr.bf16.gmra.mrb[0].mxu0 %v1410
  %v1460 = vpop.f32.mrb[0].mxu0
  %v1461 = vadd.f32 %v232, %v1460
  %v1462 = vpop.f32.mrb[0].mxu0
  %v1463 = vpop.f32.mrb[0].mxu0
  %v1464 = vpop.f32.mrb[0].mxu0
  %1465 = vdwg.mxu0
  %1466 = vrot.lane.b32.xlu0 %v407, 104
  %v1467 = vpop.permute.xlu0 %1466
  %1468 = vrot.lane.b32.xlu0 %v408, 104
  %v1469 = vpop.permute.xlu0 %1468
  %1470 = vrot.lane.b32.xlu0 %v407, 72
  %v1471 = vpop.permute.xlu0 %1470
  %1472 = vrot.lane.b32.xlu0 %v408, 72
  %v1473 = vpop.permute.xlu0 %1472
  %v1475 = vsel %vm415, %v1467, 0
  %v1478 = vsel %vm415, %v1469, 0
  %v1481 = vsel %vm415, %v1471, 0
  %v1484 = vsel %vm415, %v1473, 0
  %1486 = vmatprep.subr.bf16.mxu0 0
  %1487 = vmatpush1.bf16.xpose.msra.mxu0 %v1481
  %1488 = vmatprep.subr.bf16.mxu0 0
  %1489 = vmatpush1.bf16.xpose.msra.mxu0 %v1484
  %1490 = vmatprep.subr.bf16.mxu0 0
  %1491 = vmatpush1.bf16.xpose.msra.mxu0 0
  %1492 = vmatprep.subr.bf16.mxu0 0
  %1493 = vmatpush1.bf16.xpose.msra.mxu0 0
  %1494 = vmatprep.subr.bf16.mxu0 0
  %1495 = vmatpush1.bf16.xpose.msra.mxu0 0
  %1496 = vmatprep.subr.bf16.mxu0 0
  %1497 = vmatpush1.bf16.xpose.msra.mxu0 0
  %1498 = vmatprep.subr.bf16.mxu0 0
  %1499 = vmatpush1.bf16.xpose.msra.mxu0 0
  %1500 = vmatprep.subr.bf16.mxu0 0
  %1501 = vmatpush1.bf16.xpose.msra.mxu0 0
  %1502 = vmatprep.subr.bf16.mxu0 0
  %1503 = vmatpush1.bf16.xpose.msra.mxu0 0
  %1504 = vmatprep.subr.bf16.mxu0 0
  %1505 = vmatpush1.bf16.xpose.msra.mxu0 0
  %1506 = vmatprep.subr.bf16.mxu0 0
  %1507 = vmatpush1.bf16.xpose.msra.mxu0 0
  %1508 = vmatprep.subr.bf16.mxu0 0
  %1509 = vmatpush1.bf16.xpose.msra.mxu0 0
  %1510 = vmatprep.subr.bf16.mxu0 0
  %1511 = vmatpush1.bf16.xpose.msra.mxu0 0
  %1512 = vmatprep.subr.bf16.mxu0 0
  %1513 = vmatpush1.bf16.xpose.msra.mxu0 0
  %1514 = vmatprep.subr.bf16.mxu0 0
  %1515 = vmatpush1.bf16.xpose.msra.mxu0 0
  %1516 = vmatprep.subr.bf16.mxu0 0
  %1517 = vmatpush1.bf16.xpose.msra.mxu0 0
  %1518 = vmatprep.mubr.bf16.mxu0 0
  %1519 = vmatmul.mubr.bf16.gmra.mrb[0].mxu0 %v1475
  %v1520 = vpop.f32.mrb[0].mxu0
  %v1521 = vadd.f32 %v232, %v1520
  %v1522 = vpop.f32.mrb[0].mxu0
  %v1523 = vpop.f32.mrb[0].mxu0
  %v1524 = vadd.f32 %v232, %v1523
  %v1525 = vpop.f32.mrb[0].mxu0
  %1526 = vmatprep.mubr.bf16.mxu0 0
  %1527 = vmatmul.mubr.bf16.gmra.mrb[0].mxu0 %v1478
  %v1528 = vpop.f32.mrb[0].mxu0
  %v1529 = vadd.f32 %v232, %v1528
  %v1530 = vpop.f32.mrb[0].mxu0
  %v1531 = vpop.f32.mrb[0].mxu0
  %v1532 = vpop.f32.mrb[0].mxu0
  %1533 = vdwg.mxu0
  %v1534 = vsel %vm542, %v1453, -inf
  %1535 = vmax.xlane.f32.xlu0 %v1534
  %v1536 = vpop.xlane.xlu0 %1535
  %v1537 = vsel %vm542, %v1456, -inf
  %1538 = vmax.xlane.f32.xlu0 %v1537
  %v1539 = vpop.xlane.xlu0 %1538
  %v1540 = vsel %vm542, %v1461, -inf
  %1541 = vmax.xlane.f32.xlu0 %v1540
  %v1542 = vpop.xlane.xlu0 %1541
  %v1543 = vsel %vm542, %v1521, -inf
  %1544 = vmax.xlane.f32.xlu0 %v1543
  %v1545 = vpop.xlane.xlu0 %1544
  %v1546 = vsel %vm542, %v1524, -inf
  %1547 = vmax.xlane.f32.xlu0 %v1546
  %v1548 = vpop.xlane.xlu0 %1547
  %v1549 = vsel %vm542, %v1529, -inf
  %1550 = vmax.xlane.f32.xlu0 %v1549
  %v1551 = vpop.xlane.xlu0 %1550
  %v1552 = vsub.f32 %v1453, %v1536
  %v1553 = vsub.f32 %v1456, %v1539
  %v1554 = vsub.f32 %v1461, %v1542
  %v1555 = vsub.f32 %v1521, %v1545
  %v1556 = vsub.f32 %v1524, %v1548
  %v1557 = vsub.f32 %v1529, %v1551
  %v1558 = vmul.f32 %v1552, 1.442695
  %v1559 = vpow.pop %v1558
  %v1560 = vmul.f32 %v1553, 1.442695
  %v1561 = vpow.pop %v1560
  %v1562 = vmul.f32 %v1554, 1.442695
  %v1563 = vpow.pop %v1562
  %v1564 = vmul.f32 %v1555, 1.442695
  %v1565 = vpow.pop %v1564
  %v1566 = vmul.f32 %v1556, 1.442695
  %v1567 = vpow.pop %v1566
  %v1568 = vmul.f32 %v1557, 1.442695
  %v1569 = vpow.pop %v1568
  %v1570 = vsel %vm542, %v1559, 0.0
  %1571 = vadd.xlane.f32.xlu0 %v1570
  %v1572 = vpop.xlane.xlu0 %1571
  %v1573 = vsel %vm542, %v1561, 0.0
  %1574 = vadd.xlane.f32.xlu0 %v1573
  %v1575 = vpop.xlane.xlu0 %1574
  %v1576 = vsel %vm542, %v1563, 0.0
  %1577 = vadd.xlane.f32.xlu0 %v1576
  %v1578 = vpop.xlane.xlu0 %1577
  %v1579 = vsel %vm542, %v1565, 0.0
  %1580 = vadd.xlane.f32.xlu0 %v1579
  %v1581 = vpop.xlane.xlu0 %1580
  %v1582 = vsel %vm542, %v1567, 0.0
  %1583 = vadd.xlane.f32.xlu0 %v1582
  %v1584 = vpop.xlane.xlu0 %1583
  %v1585 = vsel %vm542, %v1569, 0.0
  %1586 = vadd.xlane.f32.xlu0 %v1585
  %v1587 = vpop.xlane.xlu0 %1586
  %v1588 = vrcp.pop %v1572
  %v1589 = vrcp.pop %v1575
  %v1590 = vrcp.pop %v1578
  %v1591 = vrcp.pop %v1581
  %v1592 = vrcp.pop %v1584
  %v1593 = vrcp.pop %v1587
  %v1594 = vmul.f32 %v1559, %v1588
  %v1595 = vmul.f32 %v1561, %v1589
  %v1596 = vmul.f32 %v1563, %v1590
  %v1597 = vmul.f32 %v1565, %v1591
  %v1598 = vmul.f32 %v1567, %v1592
  %v1599 = vmul.f32 %v1569, %v1593
  %v1600 = vpack.c.bf16 %v1595, %v1594
  %v1601 = vpack.c.bf16 %v1596, %v1596
  %v1602 = vpack.c.bf16 %v1598, %v1597
  %v1603 = vpack.c.bf16 %v1599, %v1599
  %1604 = vrot.lane.b32.xlu0 %v405, 40
  %v1605 = vpop.permute.xlu0 %1604
  %1606 = vrot.lane.b32.xlu0 %v406, 40
  %v1607 = vpop.permute.xlu0 %1606
  %v1610 = vsel %vm542, %v1600, 0
  %v1613 = vsel %vm542, %v1601, 0
  %v1616 = vsel %vm624, %v1607, 0
  %1618 = vmatprep.subr.bf16.mxu0 0
  %1619 = vmatpush1.bf16.msra.mxu0 %v1605
  %1620 = vmatprep.subr.bf16.mxu0 0
  %1621 = vmatpush1.bf16.msra.mxu0 %v1616
  %1622 = vmatprep.subr.bf16.mxu0 0
  %1623 = vmatpush1.bf16.msra.mxu0 0
  %1624 = vmatprep.subr.bf16.mxu0 0
  %1625 = vmatpush1.bf16.msra.mxu0 0
  %1626 = vmatprep.subr.bf16.mxu0 0
  %1627 = vmatpush1.bf16.msra.mxu0 0
  %1628 = vmatprep.subr.bf16.mxu0 0
  %1629 = vmatpush1.bf16.msra.mxu0 0
  %1630 = vmatprep.subr.bf16.mxu0 0
  %1631 = vmatpush1.bf16.msra.mxu0 0
  %1632 = vmatprep.subr.bf16.mxu0 0
  %1633 = vmatpush1.bf16.msra.mxu0 0
  %1634 = vmatprep.subr.bf16.mxu0 0
  %1635 = vmatpush1.bf16.msra.mxu0 0
  %1636 = vmatprep.subr.bf16.mxu0 0
  %1637 = vmatpush1.bf16.msra.mxu0 0
  %1638 = vmatprep.subr.bf16.mxu0 0
  %1639 = vmatpush1.bf16.msra.mxu0 0
  %1640 = vmatprep.subr.bf16.mxu0 0
  %1641 = vmatpush1.bf16.msra.mxu0 0
  %1642 = vmatprep.subr.bf16.mxu0 0
  %1643 = vmatpush1.bf16.msra.mxu0 0
  %1644 = vmatprep.subr.bf16.mxu0 0
  %1645 = vmatpush1.bf16.msra.mxu0 0
  %1646 = vmatprep.subr.bf16.mxu0 0
  %1647 = vmatpush1.bf16.msra.mxu0 0
  %1648 = vmatprep.subr.bf16.mxu0 0
  %1649 = vmatpush1.bf16.msra.mxu0 0
  %1650 = vmatprep.mubr.bf16.mxu0 0
  %1651 = vmatmul.mubr.bf16.gmra.mrb[0].mxu0 %v1610
  %v1652 = vpop.f32.mrb[0].mxu0
  %v1653 = vadd.f32 0.0, %v1652
  %v1654 = vpop.f32.mrb[0].mxu0
  %v1655 = vpop.f32.mrb[0].mxu0
  %v1656 = vadd.f32 0.0, %v1655
  %v1657 = vpop.f32.mrb[0].mxu0
  %1658 = vmatprep.mubr.bf16.mxu0 0
  %1659 = vmatmul.mubr.bf16.gmra.mrb[0].mxu0 %v1613
  %v1660 = vpop.f32.mrb[0].mxu0
  %v1661 = vadd.f32 0.0, %v1660
  %v1662 = vpop.f32.mrb[0].mxu0
  %v1663 = vpop.f32.mrb[0].mxu0
  %v1664 = vpop.f32.mrb[0].mxu0
  %1665 = vdwg.mxu0
  %1666 = vrot.lane.b32.xlu0 %v407, 40
  %v1667 = vpop.permute.xlu0 %1666
  %1668 = vrot.lane.b32.xlu0 %v408, 40
  %v1669 = vpop.permute.xlu0 %1668
  %v1672 = vsel %vm542, %v1602, 0
  %v1675 = vsel %vm542, %v1603, 0
  %v1678 = vsel %vm624, %v1669, 0
  %1680 = vmatprep.subr.bf16.mxu0 0
  %1681 = vmatpush1.bf16.msra.mxu0 %v1667
  %1682 = vmatprep.subr.bf16.mxu0 0
  %1683 = vmatpush1.bf16.msra.mxu0 %v1678
  %1684 = vmatprep.subr.bf16.mxu0 0
  %1685 = vmatpush1.bf16.msra.mxu0 0
  %1686 = vmatprep.subr.bf16.mxu0 0
  %1687 = vmatpush1.bf16.msra.mxu0 0
  %1688 = vmatprep.subr.bf16.mxu0 0
  %1689 = vmatpush1.bf16.msra.mxu0 0
  %1690 = vmatprep.subr.bf16.mxu0 0
  %1691 = vmatpush1.bf16.msra.mxu0 0
  %1692 = vmatprep.subr.bf16.mxu0 0
  %1693 = vmatpush1.bf16.msra.mxu0 0
  %1694 = vmatprep.subr.bf16.mxu0 0
  %1695 = vmatpush1.bf16.msra.mxu0 0
  %1696 = vmatprep.subr.bf16.mxu0 0
  %1697 = vmatpush1.bf16.msra.mxu0 0
  %1698 = vmatprep.subr.bf16.mxu0 0
  %1699 = vmatpush1.bf16.msra.mxu0 0
  %1700 = vmatprep.subr.bf16.mxu0 0
  %1701 = vmatpush1.bf16.msra.mxu0 0
  %1702 = vmatprep.subr.bf16.mxu0 0
  %1703 = vmatpush1.bf16.msra.mxu0 0
  %1704 = vmatprep.subr.bf16.mxu0 0
  %1705 = vmatpush1.bf16.msra.mxu0 0
  %1706 = vmatprep.subr.bf16.mxu0 0
  %1707 = vmatpush1.bf16.msra.mxu0 0
  %1708 = vmatprep.subr.bf16.mxu0 0
  %1709 = vmatpush1.bf16.msra.mxu0 0
  %1710 = vmatprep.subr.bf16.mxu0 0
  %1711 = vmatpush1.bf16.msra.mxu0 0
  %1712 = vmatprep.mubr.bf16.mxu0 0
  %1713 = vmatmul.mubr.bf16.gmra.mrb[0].mxu0 %v1672
  %v1714 = vpop.f32.mrb[0].mxu0
  %v1715 = vadd.f32 0.0, %v1714
  %v1716 = vpop.f32.mrb[0].mxu0
  %v1717 = vpop.f32.mrb[0].mxu0
  %v1718 = vadd.f32 0.0, %v1717
  %v1719 = vpop.f32.mrb[0].mxu0
  %1720 = vmatprep.mubr.bf16.mxu0 0
  %1721 = vmatmul.mubr.bf16.gmra.mrb[0].mxu0 %v1675
  %v1722 = vpop.f32.mrb[0].mxu0
  %v1723 = vadd.f32 0.0, %v1722
  %v1724 = vpop.f32.mrb[0].mxu0
  %v1725 = vpop.f32.mrb[0].mxu0
  %v1726 = vpop.f32.mrb[0].mxu0
  %1727 = vdwg.mxu0
  %1734 = vrot.lane.b32.xlu0 %v993, 8
  %v1735 = vpop.permute.xlu0 %1734
  %1736 = vrot.lane.b32.xlu0 %v996, 8
  %v1737 = vpop.permute.xlu0 %1736
  %1738 = vrot.lane.b32.xlu0 %v1001, 8
  %v1739 = vpop.permute.xlu0 %1738
  %1740 = vrot.lane.b32.xlu0 %v1055, 8
  %v1741 = vpop.permute.xlu0 %1740
  %1742 = vrot.lane.b32.xlu0 %v1058, 8
  %v1743 = vpop.permute.xlu0 %1742
  %1744 = vrot.lane.b32.xlu0 %v1063, 8
  %v1745 = vpop.permute.xlu0 %1744
  %1758 = vrot.lane.b32.xlu0 %v1323, 16
  %v1759 = vpop.permute.xlu0 %1758
  %1760 = vrot.lane.b32.xlu0 %v1326, 16
  %v1761 = vpop.permute.xlu0 %1760
  %1762 = vrot.lane.b32.xlu0 %v1331, 16
  %v1763 = vpop.permute.xlu0 %1762
  %1764 = vrot.lane.b32.xlu0 %v1385, 16
  %v1765 = vpop.permute.xlu0 %1764
  %1766 = vrot.lane.b32.xlu0 %v1388, 16
  %v1767 = vpop.permute.xlu0 %1766
  %1768 = vrot.lane.b32.xlu0 %v1393, 16
  %v1769 = vpop.permute.xlu0 %1768
  %1782 = vrot.lane.b32.xlu0 %v1653, 24
  %v1783 = vpop.permute.xlu0 %1782
  %1784 = vrot.lane.b32.xlu0 %v1656, 24
  %v1785 = vpop.permute.xlu0 %1784
  %1786 = vrot.lane.b32.xlu0 %v1661, 24
  %v1787 = vpop.permute.xlu0 %1786
  %1788 = vrot.lane.b32.xlu0 %v1715, 24
  %v1789 = vpop.permute.xlu0 %1788
  %1790 = vrot.lane.b32.xlu0 %v1718, 24
  %v1791 = vpop.permute.xlu0 %1790
  %1792 = vrot.lane.b32.xlu0 %v1723, 24
  %v1793 = vpop.permute.xlu0 %1792
  %v1800 = vsel %vm415, %v663, %v1735
  %v1801 = vsel %vm415, %v666, %v1737
  %v1802 = vsel %vm415, %v671, %v1739
  %v1803 = vsel %vm415, %v725, %v1741
  %v1804 = vsel %vm415, %v728, %v1743
  %v1805 = vsel %vm415, %v733, %v1745
  %vm1806 = vcmask 130048
  %v1807 = vsel %vm1806, %v1800, %v1759
  %v1808 = vsel %vm1806, %v1801, %v1761
  %v1809 = vsel %vm1806, %v1802, %v1763
  %v1810 = vsel %vm1806, %v1803, %v1765
  %v1811 = vsel %vm1806, %v1804, %v1767
  %v1812 = vsel %vm1806, %v1805, %v1769
  %v1813 = vsel %vm542, %v1807, %v1783
  %v1814 = vsel %vm542, %v1808, %v1785
  %v1815 = vsel %vm542, %v1809, %v1787
  %v1816 = vsel %vm542, %v1810, %v1789
  %v1817 = vsel %vm542, %v1811, %v1791
  %v1818 = vsel %vm542, %v1812, %v1793
  %v1819 = vpack.c.bf16 %v1814, %v1813
  %v1820 = vpack.c.bf16 %v1816, %v1815
  %v1821 = vpack.c.bf16 %v1818, %v1817
  %v1822 = vld [vmem:[%s4] sm:$0xf]
  %v1823 = vld [vmem:[%s4 + $0x4] sm:$0xf]
  %v1824 = vld [vmem:[%s4 + $0x8] sm:$0xf]
  %v1825 = vld [vmem:[%s4 + $0xc] sm:$0xf]
  %v1830 = vunpack.c.l.b16 %v1822
  %v1831 = vunpack.c.l.b16 %v1823
  %v1832 = vunpack.c.l.b16 %v1824
  %v1833 = vunpack.c.l.b16 %v1825
  %v1834 = vpack.c.b16 %v1831, %v1830
  %v1835 = vpack.c.b16 %v1833, %v1832
  %v1839 = vsel %vm144, %v1819, 0
  %v1842 = vsel %vm144, %v1820, 0
  %v1845 = vsel %vm144, %v1821, 0
  %1847 = vmatprep.subr.bf16.mxu0 0
  %1848 = vmatpush1.bf16.msra.mxu0 %v1834
  %1849 = vmatprep.subr.bf16.mxu0 0
  %1850 = vmatpush1.bf16.msra.mxu0 %v1835
  %1851 = vmatprep.subr.bf16.mxu0 0
  %1852 = vmatpush1.bf16.msra.mxu0 0
  %1853 = vmatprep.subr.bf16.mxu0 0
  %1854 = vmatpush1.bf16.msra.mxu0 0
  %1855 = vmatprep.subr.bf16.mxu0 0
  %1856 = vmatpush1.bf16.msra.mxu0 0
  %1857 = vmatprep.subr.bf16.mxu0 0
  %1858 = vmatpush1.bf16.msra.mxu0 0
  %1859 = vmatprep.subr.bf16.mxu0 0
  %1860 = vmatpush1.bf16.msra.mxu0 0
  %1861 = vmatprep.subr.bf16.mxu0 0
  %1862 = vmatpush1.bf16.msra.mxu0 0
  %1863 = vmatprep.subr.bf16.mxu0 0
  %1864 = vmatpush1.bf16.msra.mxu0 0
  %1865 = vmatprep.subr.bf16.mxu0 0
  %1866 = vmatpush1.bf16.msra.mxu0 0
  %1867 = vmatprep.subr.bf16.mxu0 0
  %1868 = vmatpush1.bf16.msra.mxu0 0
  %1869 = vmatprep.subr.bf16.mxu0 0
  %1870 = vmatpush1.bf16.msra.mxu0 0
  %1871 = vmatprep.subr.bf16.mxu0 0
  %1872 = vmatpush1.bf16.msra.mxu0 0
  %1873 = vmatprep.subr.bf16.mxu0 0
  %1874 = vmatpush1.bf16.msra.mxu0 0
  %1875 = vmatprep.subr.bf16.mxu0 0
  %1876 = vmatpush1.bf16.msra.mxu0 0
  %1877 = vmatprep.subr.bf16.mxu0 0
  %1878 = vmatpush1.bf16.msra.mxu0 0
  %1879 = vmatprep.mubr.bf16.mxu0 0
  %1880 = vmatmul.mubr.bf16.gmra.mrb[0].mxu0 %v1839
  %v1881 = vpop.f32.mrb[0].mxu0
  %v1882 = vadd.f32 0.0, %v1881
  %v1883 = vpop.f32.mrb[0].mxu0
  %v1884 = vpop.f32.mrb[0].mxu0
  %v1885 = vadd.f32 0.0, %v1884
  %v1886 = vpop.f32.mrb[0].mxu0
  %1887 = vmatprep.mubr.bf16.mxu0 0
  %1888 = vmatmul.mubr.bf16.gmra.mrb[0].mxu0 %v1842
  %v1889 = vpop.f32.mrb[0].mxu0
  %v1890 = vadd.f32 0.0, %v1889
  %v1891 = vpop.f32.mrb[0].mxu0
  %v1892 = vpop.f32.mrb[0].mxu0
  %v1893 = vadd.f32 0.0, %v1892
  %v1894 = vpop.f32.mrb[0].mxu0
  %1895 = vmatprep.mubr.bf16.mxu0 0
  %1896 = vmatmul.mubr.bf16.gmra.mrb[0].mxu0 %v1845
  %v1897 = vpop.f32.mrb[0].mxu0
  %v1898 = vadd.f32 0.0, %v1897
  %v1899 = vpop.f32.mrb[0].mxu0
  %v1900 = vpop.f32.mrb[0].mxu0
  %v1901 = vadd.f32 0.0, %v1900
  %v1902 = vpop.f32.mrb[0].mxu0
  %1903 = vdwg.mxu0
  %v1904 = vadd.f32 %v224, %v1882
  %v1905 = vadd.f32 %v225, %v1885
  %v1906 = vadd.f32 %v226, %v1890
  %v1907 = vadd.f32 %v227, %v1893
  %v1908 = vadd.f32 %v228, %v1898
  %v1909 = vadd.f32 %v226, %v1901
  %v1910 = vlaneseq
  %v1911 = vshrl.u32 %v1910, 7
  %v1912 = vsub.s32 4, %v1911
  %v1913 = vrot.slane %v31, %v1912
  %v1914 = vadd.f32 %v1904, %v1913
  %v1915 = vadd.f32 %v1905, %v1913
  %v1916 = vadd.f32 %v1906, %v1913
  %v1917 = vadd.f32 %v1907, %v1913
  %v1918 = vadd.f32 %v1908, %v1913
  %v1919 = vadd.f32 %v1909, %v1913
  %v1920 = vsel %vm144, %v1914, 0.0
  %1921 = vadd.xlane.f32.xlu0 %v1920
  %v1922 = vpop.xlane.xlu0 %1921
  %v1923 = vsel %vm144, %v1915, 0.0
  %1924 = vadd.xlane.f32.xlu0 %v1923
  %v1925 = vpop.xlane.xlu0 %1924
  %v1926 = vsel %vm144, %v1916, 0.0
  %1927 = vadd.xlane.f32.xlu0 %v1926
  %v1928 = vpop.xlane.xlu0 %1927
  %v1929 = vsel %vm144, %v1917, 0.0
  %1930 = vadd.xlane.f32.xlu0 %v1929
  %v1931 = vpop.xlane.xlu0 %1930
  %v1932 = vsel %vm144, %v1918, 0.0
  %1933 = vadd.xlane.f32.xlu0 %v1932
  %v1934 = vpop.xlane.xlu0 %1933
  %v1935 = vsel %vm144, %v1919, 0.0
  %1936 = vadd.xlane.f32.xlu0 %v1935
  %v1937 = vpop.xlane.xlu0 %1936
  %v1938 = vmul.f32 %v1922, %v160
  %v1939 = vmul.f32 %v1925, %v160
  %v1940 = vmul.f32 %v1928, %v160
  %v1941 = vmul.f32 %v1931, %v160
  %v1942 = vmul.f32 %v1934, %v160
  %v1943 = vmul.f32 %v1937, %v160
  %v1944 = vsub.f32 %v1914, %v1938
  %v1945 = vsub.f32 %v1915, %v1939
  %v1946 = vsub.f32 %v1916, %v1940
  %v1947 = vsub.f32 %v1917, %v1941
  %v1948 = vsub.f32 %v1918, %v1942
  %v1949 = vsub.f32 %v1919, %v1943
  %v1950 = vmul.f32 %v1944, %v1944
  %v1951 = vmul.f32 %v1945, %v1945
  %v1952 = vmul.f32 %v1946, %v1946
  %v1953 = vmul.f32 %v1947, %v1947
  %v1954 = vmul.f32 %v1948, %v1948
  %v1955 = vmul.f32 %v1949, %v1949
  %v1956 = vsel %vm144, %v1950, 0.0
  %1957 = vadd.xlane.f32.xlu0 %v1956
  %v1958 = vpop.xlane.xlu0 %1957
  %v1959 = vsel %vm144, %v1951, 0.0
  %1960 = vadd.xlane.f32.xlu0 %v1959
  %v1961 = vpop.xlane.xlu0 %1960
  %v1962 = vsel %vm144, %v1952, 0.0
  %1963 = vadd.xlane.f32.xlu0 %v1962
  %v1964 = vpop.xlane.xlu0 %1963
  %v1965 = vsel %vm144, %v1953, 0.0
  %1966 = vadd.xlane.f32.xlu0 %v1965
  %v1967 = vpop.xlane.xlu0 %1966
  %v1968 = vsel %vm144, %v1954, 0.0
  %1969 = vadd.xlane.f32.xlu0 %v1968
  %v1970 = vpop.xlane.xlu0 %1969
  %v1971 = vsel %vm144, %v1955, 0.0
  %1972 = vadd.xlane.f32.xlu0 %v1971
  %v1973 = vpop.xlane.xlu0 %1972
  %v1974 = vmul.f32 %v1958, %v160
  %v1975 = vmul.f32 %v1961, %v160
  %v1976 = vmul.f32 %v1964, %v160
  %v1977 = vmul.f32 %v1967, %v160
  %v1978 = vmul.f32 %v1970, %v160
  %v1979 = vmul.f32 %v1973, %v160
  %v1980 = vadd.f32 %v1974, 1e-06
  %v1981 = vadd.f32 %v1975, 1e-06
  %v1982 = vadd.f32 %v1976, 1e-06
  %v1983 = vadd.f32 %v1977, 1e-06
  %v1984 = vadd.f32 %v1978, 1e-06
  %v1985 = vadd.f32 %v1979, 1e-06
  %v1986 = vrsqrt.pop %v1980
  %v1987 = vrsqrt.pop %v1981
  %v1988 = vrsqrt.pop %v1982
  %v1989 = vrsqrt.pop %v1983
  %v1990 = vrsqrt.pop %v1984
  %v1991 = vrsqrt.pop %v1985
  %v1992 = vmul.f32 %v1944, %v1986
  %v1993 = vmul.f32 %v1945, %v1987
  %v1994 = vmul.f32 %v1946, %v1988
  %v1995 = vmul.f32 %v1947, %v1989
  %v1996 = vmul.f32 %v1948, %v1990
  %v1997 = vmul.f32 %v1949, %v1991
  %v1998 = vlaneseq
  %v1999 = vshrl.u32 %v1998, 7
  %v2000 = vsub.s32 2, %v1999
  %v2001 = vrot.slane %v31, %v2000
  %v2002 = vmul.f32 %v1992, %v2001
  %v2003 = vmul.f32 %v1993, %v2001
  %v2004 = vmul.f32 %v1994, %v2001
  %v2005 = vmul.f32 %v1995, %v2001
  %v2006 = vmul.f32 %v1996, %v2001
  %v2007 = vmul.f32 %v1997, %v2001
  %v2008 = vlaneseq
  %v2009 = vshrl.u32 %v2008, 7
  %v2010 = vsub.s32 3, %v2009
  %v2011 = vrot.slane %v31, %v2010
  %v2012 = vadd.f32 %v2002, %v2011
  %v2013 = vadd.f32 %v2003, %v2011
  %v2014 = vadd.f32 %v2004, %v2011
  %v2015 = vadd.f32 %v2005, %v2011
  %v2016 = vadd.f32 %v2006, %v2011
  %v2017 = vadd.f32 %v2007, %v2011
  %v2018 = vpack.c.bf16 %v2013, %v2012
  %v2019 = vpack.c.bf16 %v2015, %v2014
  %v2020 = vpack.c.bf16 %v2017, %v2016
  %v2021 = vld [vmem:[%s5] sm:$0xf]
  %v2022 = vld [vmem:[%s5 + $0x4] sm:$0xf]
  %v2023 = vld [vmem:[%s5 + $0x8] sm:$0xf]
  %v2024 = vld [vmem:[%s5 + $0xc] sm:$0xf]
  %v2025 = vlaneseq
  %v2026 = vshrl.u32 %v2025, 7
  %v2027 = vsub.s32 7, %v2026
  %v2028 = vrot.slane %v31, %v2027
  %v2033 = vunpack.c.l.b16 %v2021
  %v2034 = vunpack.c.l.b16 %v2022
  %v2035 = vunpack.c.l.b16 %v2023
  %v2036 = vunpack.c.l.b16 %v2024
  %v2037 = vpack.c.b16 %v2034, %v2033
  %v2038 = vpack.c.b16 %v2036, %v2035
  %v2042 = vsel %vm144, %v2018, 0
  %v2045 = vsel %vm144, %v2019, 0
  %v2048 = vsel %vm144, %v2020, 0
  %2050 = vmatprep.subr.bf16.mxu0 0
  %2051 = vmatpush1.bf16.msra.mxu0 %v2037
  %2052 = vmatprep.subr.bf16.mxu0 0
  %2053 = vmatpush1.bf16.msra.mxu0 %v2038
  %2054 = vmatprep.subr.bf16.mxu0 0
  %2055 = vmatpush1.bf16.msra.mxu0 0
  %2056 = vmatprep.subr.bf16.mxu0 0
  %2057 = vmatpush1.bf16.msra.mxu0 0
  %2058 = vmatprep.subr.bf16.mxu0 0
  %2059 = vmatpush1.bf16.msra.mxu0 0
  %2060 = vmatprep.subr.bf16.mxu0 0
  %2061 = vmatpush1.bf16.msra.mxu0 0
  %2062 = vmatprep.subr.bf16.mxu0 0
  %2063 = vmatpush1.bf16.msra.mxu0 0
  %2064 = vmatprep.subr.bf16.mxu0 0
  %2065 = vmatpush1.bf16.msra.mxu0 0
  %2066 = vmatprep.subr.bf16.mxu0 0
  %2067 = vmatpush1.bf16.msra.mxu0 0
  %2068 = vmatprep.subr.bf16.mxu0 0
  %2069 = vmatpush1.bf16.msra.mxu0 0
  %2070 = vmatprep.subr.bf16.mxu0 0
  %2071 = vmatpush1.bf16.msra.mxu0 0
  %2072 = vmatprep.subr.bf16.mxu0 0
  %2073 = vmatpush1.bf16.msra.mxu0 0
  %2074 = vmatprep.subr.bf16.mxu0 0
  %2075 = vmatpush1.bf16.msra.mxu0 0
  %2076 = vmatprep.subr.bf16.mxu0 0
  %2077 = vmatpush1.bf16.msra.mxu0 0
  %2078 = vmatprep.subr.bf16.mxu0 0
  %2079 = vmatpush1.bf16.msra.mxu0 0
  %2080 = vmatprep.subr.bf16.mxu0 0
  %2081 = vmatpush1.bf16.msra.mxu0 0
  %2082 = vmatprep.mubr.bf16.mxu0 0
  %2083 = vmatmul.mubr.bf16.gmra.mrb[0].mxu0 %v2042
  %v2084 = vpop.f32.mrb[0].mxu0
  %v2085 = vadd.f32 %v2028, %v2084
  %v2086 = vpop.f32.mrb[0].mxu0
  %v2087 = vpop.f32.mrb[0].mxu0
  %v2088 = vadd.f32 %v2028, %v2087
  %v2089 = vpop.f32.mrb[0].mxu0
  %2090 = vmatprep.mubr.bf16.mxu0 0
  %2091 = vmatmul.mubr.bf16.gmra.mrb[0].mxu0 %v2045
  %v2092 = vpop.f32.mrb[0].mxu0
  %v2093 = vadd.f32 %v2028, %v2092
  %v2094 = vpop.f32.mrb[0].mxu0
  %v2095 = vpop.f32.mrb[0].mxu0
  %v2096 = vadd.f32 %v2028, %v2095
  %v2097 = vpop.f32.mrb[0].mxu0
  %2098 = vmatprep.mubr.bf16.mxu0 0
  %2099 = vmatmul.mubr.bf16.gmra.mrb[0].mxu0 %v2048
  %v2100 = vpop.f32.mrb[0].mxu0
  %v2101 = vadd.f32 %v2028, %v2100
  %v2102 = vpop.f32.mrb[0].mxu0
  %v2103 = vpop.f32.mrb[0].mxu0
  %v2104 = vadd.f32 %v2028, %v2103
  %v2105 = vpop.f32.mrb[0].mxu0
  %2106 = vdwg.mxu0
  %v2107 = vmul.f32 %v2085, %v2085
  %v2108 = vmul.f32 %v2088, %v2088
  %v2109 = vmul.f32 %v2093, %v2093
  %v2110 = vmul.f32 %v2096, %v2096
  %v2111 = vmul.f32 %v2101, %v2101
  %v2112 = vmul.f32 %v2104, %v2104
  %v2113 = vmul.f32 %v2085, %v2107
  %v2114 = vmul.f32 %v2088, %v2108
  %v2115 = vmul.f32 %v2093, %v2109
  %v2116 = vmul.f32 %v2096, %v2110
  %v2117 = vmul.f32 %v2101, %v2111
  %v2118 = vmul.f32 %v2104, %v2112
  %v2119 = vmul.f32 %v2113, 0.044715
  %v2120 = vmul.f32 %v2114, 0.044715
  %v2121 = vmul.f32 %v2115, 0.044715
  %v2122 = vmul.f32 %v2116, 0.044715
  %v2123 = vmul.f32 %v2117, 0.044715
  %v2124 = vmul.f32 %v2118, 0.044715
  %v2125 = vadd.f32 %v2085, %v2119
  %v2126 = vadd.f32 %v2088, %v2120
  %v2127 = vadd.f32 %v2093, %v2121
  %v2128 = vadd.f32 %v2096, %v2122
  %v2129 = vadd.f32 %v2101, %v2123
  %v2130 = vadd.f32 %v2104, %v2124
  %v2131 = vmul.f32 %v2125, 0.7978846
  %v2132 = vmul.f32 %v2126, 0.7978846
  %v2133 = vmul.f32 %v2127, 0.7978846
  %v2134 = vmul.f32 %v2128, 0.7978846
  %v2135 = vmul.f32 %v2129, 0.7978846
  %v2136 = vmul.f32 %v2130, 0.7978846
  %v2137 = vtanh.pop %v2131
  %v2138 = vtanh.pop %v2132
  %v2139 = vtanh.pop %v2133
  %v2140 = vtanh.pop %v2134
  %v2141 = vtanh.pop %v2135
  %v2142 = vtanh.pop %v2136
  %v2143 = vadd.f32 %v2137, 1.0
  %v2144 = vadd.f32 %v2138, 1.0
  %v2145 = vadd.f32 %v2139, 1.0
  %v2146 = vadd.f32 %v2140, 1.0
  %v2147 = vadd.f32 %v2141, 1.0
  %v2148 = vadd.f32 %v2142, 1.0
  %v2149 = vmul.f32 %v2143, 0.5
  %v2150 = vmul.f32 %v2144, 0.5
  %v2151 = vmul.f32 %v2145, 0.5
  %v2152 = vmul.f32 %v2146, 0.5
  %v2153 = vmul.f32 %v2147, 0.5
  %v2154 = vmul.f32 %v2148, 0.5
  %v2155 = vmul.f32 %v2085, %v2149
  %v2156 = vmul.f32 %v2088, %v2150
  %v2157 = vmul.f32 %v2093, %v2151
  %v2158 = vmul.f32 %v2096, %v2152
  %v2159 = vmul.f32 %v2101, %v2153
  %v2160 = vmul.f32 %v2104, %v2154
  %v2161 = vpack.c.bf16 %v2156, %v2155
  %v2162 = vpack.c.bf16 %v2158, %v2157
  %v2163 = vpack.c.bf16 %v2160, %v2159
  %v2164 = vld [vmem:[%s6] sm:$0xf]
  %v2165 = vld [vmem:[%s6 + $0x4] sm:$0xf]
  %v2166 = vld [vmem:[%s6 + $0x8] sm:$0xf]
  %v2167 = vld [vmem:[%s6 + $0xc] sm:$0xf]
  %v2168 = vld [vmem:[%s6 + $0x10] sm:$0xf]
  %v2169 = vld [vmem:[%s6 + $0x14] sm:$0xf]
  %v2170 = vld [vmem:[%s6 + $0x18] sm:$0xf]
  %v2171 = vld [vmem:[%s6 + $0x1c] sm:$0xf]
  %v2172 = vld [vmem:[%s6 + $0x20] sm:$0xf]
  %v2173 = vld [vmem:[%s6 + $0x24] sm:$0xf]
  %v2174 = vld [vmem:[%s6 + $0x28] sm:$0xf]
  %v2175 = vld [vmem:[%s6 + $0x2c] sm:$0xf]
  %v2176 = vld [vmem:[%s6 + $0x30] sm:$0xf]
  %v2177 = vld [vmem:[%s6 + $0x34] sm:$0xf]
  %v2178 = vld [vmem:[%s6 + $0x38] sm:$0xf]
  %v2179 = vld [vmem:[%s6 + $0x3c] sm:$0xf]
  %v2196 = vunpack.c.l.b16 %v2164
  %v2197 = vunpack.c.l.b16 %v2165
  %v2198 = vunpack.c.l.b16 %v2166
  %v2199 = vunpack.c.l.b16 %v2167
  %v2200 = vunpack.c.l.b16 %v2168
  %v2201 = vunpack.c.l.b16 %v2169
  %v2202 = vunpack.c.l.b16 %v2170
  %v2203 = vunpack.c.l.b16 %v2171
  %v2204 = vunpack.c.l.b16 %v2172
  %v2205 = vunpack.c.l.b16 %v2173
  %v2206 = vunpack.c.l.b16 %v2174
  %v2207 = vunpack.c.l.b16 %v2175
  %v2208 = vunpack.c.l.b16 %v2176
  %v2209 = vunpack.c.l.b16 %v2177
  %v2210 = vunpack.c.l.b16 %v2178
  %v2211 = vunpack.c.l.b16 %v2179
  %v2212 = vpack.c.b16 %v2197, %v2196
  %v2213 = vpack.c.b16 %v2199, %v2198
  %v2214 = vpack.c.b16 %v2201, %v2200
  %v2215 = vpack.c.b16 %v2203, %v2202
  %v2216 = vpack.c.b16 %v2205, %v2204
  %v2217 = vpack.c.b16 %v2207, %v2206
  %v2218 = vpack.c.b16 %v2209, %v2208
  %v2219 = vpack.c.b16 %v2211, %v2210
  %2228 = vmatprep.subr.bf16.mxu0 0
  %2229 = vmatpush1.bf16.msra.mxu0 %v2212
  %2230 = vmatprep.subr.bf16.mxu0 0
  %2231 = vmatpush1.bf16.msra.mxu0 %v2213
  %2232 = vmatprep.subr.bf16.mxu0 0
  %2233 = vmatpush1.bf16.msra.mxu0 %v2214
  %2234 = vmatprep.subr.bf16.mxu0 0
  %2235 = vmatpush1.bf16.msra.mxu0 %v2215
  %2236 = vmatprep.subr.bf16.mxu0 0
  %2237 = vmatpush1.bf16.msra.mxu0 %v2216
  %2238 = vmatprep.subr.bf16.mxu0 0
  %2239 = vmatpush1.bf16.msra.mxu0 %v2217
  %2240 = vmatprep.subr.bf16.mxu0 0
  %2241 = vmatpush1.bf16.msra.mxu0 %v2218
  %2242 = vmatprep.subr.bf16.mxu0 0
  %2243 = vmatpush1.bf16.msra.mxu0 %v2219
  %2244 = vmatprep.subr.bf16.mxu0 0
  %2245 = vmatpush1.bf16.msra.mxu0 0
  %2246 = vmatprep.subr.bf16.mxu0 0
  %2247 = vmatpush1.bf16.msra.mxu0 0
  %2248 = vmatprep.subr.bf16.mxu0 0
  %2249 = vmatpush1.bf16.msra.mxu0 0
  %2250 = vmatprep.subr.bf16.mxu0 0
  %2251 = vmatpush1.bf16.msra.mxu0 0
  %2252 = vmatprep.subr.bf16.mxu0 0
  %2253 = vmatpush1.bf16.msra.mxu0 0
  %2254 = vmatprep.subr.bf16.mxu0 0
  %2255 = vmatpush1.bf16.msra.mxu0 0
  %2256 = vmatprep.subr.bf16.mxu0 0
  %2257 = vmatpush1.bf16.msra.mxu0 0
  %2258 = vmatprep.subr.bf16.mxu0 0
  %2259 = vmatpush1.bf16.msra.mxu0 0
  %2260 = vmatprep.mubr.bf16.mxu0 0
  %2261 = vmatmul.mubr.bf16.gmra.mrb[0].mxu0 %v2161
  %v2262 = vpop.f32.mrb[0].mxu0
  %v2263 = vadd.f32 0.0, %v2262
  %v2264 = vpop.f32.mrb[0].mxu0
  %v2265 = vpop.f32.mrb[0].mxu0
  %v2266 = vadd.f32 0.0, %v2265
  %v2267 = vpop.f32.mrb[0].mxu0
  %2268 = vmatprep.mubr.bf16.mxu0 0
  %2269 = vmatmul.mubr.bf16.gmra.mrb[0].mxu0 %v2162
  %v2270 = vpop.f32.mrb[0].mxu0
  %v2271 = vadd.f32 0.0, %v2270
  %v2272 = vpop.f32.mrb[0].mxu0
  %v2273 = vpop.f32.mrb[0].mxu0
  %v2274 = vadd.f32 0.0, %v2273
  %v2275 = vpop.f32.mrb[0].mxu0
  %2276 = vmatprep.mubr.bf16.mxu0 0
  %2277 = vmatmul.mubr.bf16.gmra.mrb[0].mxu0 %v2163
  %v2278 = vpop.f32.mrb[0].mxu0
  %v2279 = vadd.f32 0.0, %v2278
  %v2280 = vpop.f32.mrb[0].mxu0
  %v2281 = vpop.f32.mrb[0].mxu0
  %v2282 = vadd.f32 0.0, %v2281
  %v2283 = vpop.f32.mrb[0].mxu0
  %2284 = vdwg.mxu0
  %v2285 = vadd.f32 %v1914, %v2263
  %v2286 = vadd.f32 %v1915, %v2266
  %v2287 = vadd.f32 %v1916, %v2271
  %v2288 = vadd.f32 %v1917, %v2274
  %v2289 = vadd.f32 %v1918, %v2279
  %v2290 = vadd.f32 %v1919, %v2282
  %v2291 = vlaneseq
  %v2292 = vshrl.u32 %v2291, 7
  %v2293 = vsub.s32 5, %v2292
  %v2294 = vrot.slane %v31, %v2293
  %v2295 = vadd.f32 %v2285, %v2294
  %v2296 = vadd.f32 %v2286, %v2294
  %v2297 = vadd.f32 %v2287, %v2294
  %v2298 = vadd.f32 %v2288, %v2294
  %v2299 = vadd.f32 %v2289, %v2294
  %v2300 = vadd.f32 %v2290, %v2294
  %v2301 = vsel %vm144, %v2295, 0.0
  %2302 = vadd.xlane.f32.xlu0 %v2301
  %v2303 = vpop.xlane.xlu0 %2302
  %v2304 = vsel %vm144, %v2296, 0.0
  %2305 = vadd.xlane.f32.xlu0 %v2304
  %v2306 = vpop.xlane.xlu0 %2305
  %v2307 = vsel %vm144, %v2297, 0.0
  %2308 = vadd.xlane.f32.xlu0 %v2307
  %v2309 = vpop.xlane.xlu0 %2308
  %v2310 = vsel %vm144, %v2298, 0.0
  %2311 = vadd.xlane.f32.xlu0 %v2310
  %v2312 = vpop.xlane.xlu0 %2311
  %v2313 = vsel %vm144, %v2299, 0.0
  %2314 = vadd.xlane.f32.xlu0 %v2313
  %v2315 = vpop.xlane.xlu0 %2314
  %v2316 = vsel %vm144, %v2300, 0.0
  %2317 = vadd.xlane.f32.xlu0 %v2316
  %v2318 = vpop.xlane.xlu0 %2317
  %v2319 = vmul.f32 %v2303, %v160
  %v2320 = vmul.f32 %v2306, %v160
  %v2321 = vmul.f32 %v2309, %v160
  %v2322 = vmul.f32 %v2312, %v160
  %v2323 = vmul.f32 %v2315, %v160
  %v2324 = vmul.f32 %v2318, %v160
  %v2325 = vsub.f32 %v2295, %v2319
  %v2326 = vsub.f32 %v2296, %v2320
  %v2327 = vsub.f32 %v2297, %v2321
  %v2328 = vsub.f32 %v2298, %v2322
  %v2329 = vsub.f32 %v2299, %v2323
  %v2330 = vsub.f32 %v2300, %v2324
  %v2331 = vmul.f32 %v2325, %v2325
  %v2332 = vmul.f32 %v2326, %v2326
  %v2333 = vmul.f32 %v2327, %v2327
  %v2334 = vmul.f32 %v2328, %v2328
  %v2335 = vmul.f32 %v2329, %v2329
  %v2336 = vmul.f32 %v2330, %v2330
  %v2337 = vsel %vm144, %v2331, 0.0
  %2338 = vadd.xlane.f32.xlu0 %v2337
  %v2339 = vpop.xlane.xlu0 %2338
  %v2340 = vsel %vm144, %v2332, 0.0
  %2341 = vadd.xlane.f32.xlu0 %v2340
  %v2342 = vpop.xlane.xlu0 %2341
  %v2343 = vsel %vm144, %v2333, 0.0
  %2344 = vadd.xlane.f32.xlu0 %v2343
  %v2345 = vpop.xlane.xlu0 %2344
  %v2346 = vsel %vm144, %v2334, 0.0
  %2347 = vadd.xlane.f32.xlu0 %v2346
  %v2348 = vpop.xlane.xlu0 %2347
  %v2349 = vsel %vm144, %v2335, 0.0
  %2350 = vadd.xlane.f32.xlu0 %v2349
  %v2351 = vpop.xlane.xlu0 %2350
  %v2352 = vsel %vm144, %v2336, 0.0
  %2353 = vadd.xlane.f32.xlu0 %v2352
  %v2354 = vpop.xlane.xlu0 %2353
  %v2355 = vmul.f32 %v2339, %v160
  %v2356 = vmul.f32 %v2342, %v160
  %v2357 = vmul.f32 %v2345, %v160
  %v2358 = vmul.f32 %v2348, %v160
  %v2359 = vmul.f32 %v2351, %v160
  %v2360 = vmul.f32 %v2354, %v160
  %v2361 = vadd.f32 %v2355, 1e-06
  %v2362 = vadd.f32 %v2356, 1e-06
  %v2363 = vadd.f32 %v2357, 1e-06
  %v2364 = vadd.f32 %v2358, 1e-06
  %v2365 = vadd.f32 %v2359, 1e-06
  %v2366 = vadd.f32 %v2360, 1e-06
  %v2367 = vrsqrt.pop %v2361
  %v2368 = vrsqrt.pop %v2362
  %v2369 = vrsqrt.pop %v2363
  %v2370 = vrsqrt.pop %v2364
  %v2371 = vrsqrt.pop %v2365
  %v2372 = vrsqrt.pop %v2366
  %v2373 = vmul.f32 %v2325, %v2367
  %v2374 = vmul.f32 %v2326, %v2368
  %v2375 = vmul.f32 %v2327, %v2369
  %v2376 = vmul.f32 %v2328, %v2370
  %v2377 = vmul.f32 %v2329, %v2371
  %v2378 = vmul.f32 %v2330, %v2372
  %v2379 = vlaneseq
  %v2380 = vshrl.u32 %v2379, 7
  %v2381 = vsub.s32 0, %v2380
  %v2382 = vrot.slane %v32, %v2381
  %v2383 = vmul.f32 %v2373, %v2382
  %v2384 = vmul.f32 %v2374, %v2382
  %v2385 = vmul.f32 %v2375, %v2382
  %v2386 = vmul.f32 %v2376, %v2382
  %v2387 = vmul.f32 %v2377, %v2382
  %v2388 = vmul.f32 %v2378, %v2382
  %v2389 = vlaneseq
  %v2390 = vshrl.u32 %v2389, 7
  %v2391 = vsub.s32 1, %v2390
  %v2392 = vrot.slane %v32, %v2391
  %v2393 = vadd.f32 %v2383, %v2392
  %v2394 = vadd.f32 %v2384, %v2392
  %v2395 = vadd.f32 %v2385, %v2392
  %v2396 = vadd.f32 %v2386, %v2392
  %v2397 = vadd.f32 %v2387, %v2392
  %v2398 = vadd.f32 %v2388, %v2392
  %v2399 = vpack.c.bf16 %v2394, %v2393
  %v2400 = vpack.c.bf16 %v2396, %v2395
  %v2401 = vpack.c.bf16 %v2398, %v2397
  %s2402 = scalar_lea.vmem %s3, 16
  %v2403 = vld [vmem:[%s2402] sm:$0xf]
  %v2404 = vld [vmem:[%s2402 + $0x4] sm:$0xf]
  %v2405 = vld [vmem:[%s2402 + $0x8] sm:$0xf]
  %v2406 = vld [vmem:[%s2402 + $0xc] sm:$0xf]
  %v2407 = vlaneseq
  %v2408 = vshrl.u32 %v2407, 7
  %v2409 = vsub.s32 6, %v2408
  %v2410 = vrot.slane %v32, %v2409
  %v2415 = vunpack.c.l.b16 %v2403
  %v2416 = vunpack.c.l.b16 %v2404
  %v2417 = vunpack.c.l.b16 %v2405
  %v2418 = vunpack.c.l.b16 %v2406
  %v2419 = vpack.c.b16 %v2416, %v2415
  %v2420 = vpack.c.b16 %v2418, %v2417
  %v2424 = vsel %vm144, %v2399, 0
  %v2427 = vsel %vm144, %v2400, 0
  %v2430 = vsel %vm144, %v2401, 0
  %2432 = vmatprep.subr.bf16.mxu0 0
  %2433 = vmatpush1.bf16.msra.mxu0 %v2419
  %2434 = vmatprep.subr.bf16.mxu0 0
  %2435 = vmatpush1.bf16.msra.mxu0 %v2420
  %2436 = vmatprep.subr.bf16.mxu0 0
  %2437 = vmatpush1.bf16.msra.mxu0 0
  %2438 = vmatprep.subr.bf16.mxu0 0
  %2439 = vmatpush1.bf16.msra.mxu0 0
  %2440 = vmatprep.subr.bf16.mxu0 0
  %2441 = vmatpush1.bf16.msra.mxu0 0
  %2442 = vmatprep.subr.bf16.mxu0 0
  %2443 = vmatpush1.bf16.msra.mxu0 0
  %2444 = vmatprep.subr.bf16.mxu0 0
  %2445 = vmatpush1.bf16.msra.mxu0 0
  %2446 = vmatprep.subr.bf16.mxu0 0
  %2447 = vmatpush1.bf16.msra.mxu0 0
  %2448 = vmatprep.subr.bf16.mxu0 0
  %2449 = vmatpush1.bf16.msra.mxu0 0
  %2450 = vmatprep.subr.bf16.mxu0 0
  %2451 = vmatpush1.bf16.msra.mxu0 0
  %2452 = vmatprep.subr.bf16.mxu0 0
  %2453 = vmatpush1.bf16.msra.mxu0 0
  %2454 = vmatprep.subr.bf16.mxu0 0
  %2455 = vmatpush1.bf16.msra.mxu0 0
  %2456 = vmatprep.subr.bf16.mxu0 0
  %2457 = vmatpush1.bf16.msra.mxu0 0
  %2458 = vmatprep.subr.bf16.mxu0 0
  %2459 = vmatpush1.bf16.msra.mxu0 0
  %2460 = vmatprep.subr.bf16.mxu0 0
  %2461 = vmatpush1.bf16.msra.mxu0 0
  %2462 = vmatprep.subr.bf16.mxu0 0
  %2463 = vmatpush1.bf16.msra.mxu0 0
  %2464 = vmatprep.mubr.bf16.mxu0 0
  %2465 = vmatmul.mubr.bf16.gmra.mrb[0].mxu0 %v2424
  %v2466 = vpop.f32.mrb[0].mxu0
  %v2467 = vadd.f32 %v2410, %v2466
  %v2468 = vpop.f32.mrb[0].mxu0
  %v2469 = vpop.f32.mrb[0].mxu0
  %v2470 = vadd.f32 %v2410, %v2469
  %v2471 = vpop.f32.mrb[0].mxu0
  %2472 = vmatprep.mubr.bf16.mxu0 0
  %2473 = vmatmul.mubr.bf16.gmra.mrb[0].mxu0 %v2427
  %v2474 = vpop.f32.mrb[0].mxu0
  %v2475 = vadd.f32 %v2410, %v2474
  %v2476 = vpop.f32.mrb[0].mxu0
  %v2477 = vpop.f32.mrb[0].mxu0
  %v2478 = vadd.f32 %v2410, %v2477
  %v2479 = vpop.f32.mrb[0].mxu0
  %2480 = vmatprep.mubr.bf16.mxu0 0
  %2481 = vmatmul.mubr.bf16.gmra.mrb[0].mxu0 %v2430
  %v2482 = vpop.f32.mrb[0].mxu0
  %v2483 = vadd.f32 %v2410, %v2482
  %v2484 = vpop.f32.mrb[0].mxu0
  %v2485 = vpop.f32.mrb[0].mxu0
  %v2486 = vadd.f32 %v2410, %v2485
  %v2487 = vpop.f32.mrb[0].mxu0
  %2488 = vdwg.mxu0
  %v2489 = vpack.c.bf16 %v2470, %v2467
  %v2490 = vpack.c.bf16 %v2475, %v2475
  %v2491 = vpack.c.bf16 %v2483, %v2478
  %v2492 = vpack.c.bf16 %v2486, %v2486
  %2495 = vrot.lane.b32.xlu0 %v2489, 96
  %v2496 = vpop.permute.xlu0 %2495
  %2497 = vrot.lane.b32.xlu0 %v2490, 96
  %v2498 = vpop.permute.xlu0 %2497
  %v2500 = vsel %vm415, %v2489, 0
  %v2503 = vsel %vm415, %v2490, 0
  %v2506 = vsel %vm415, %v2496, 0
  %v2509 = vsel %vm415, %v2498, 0
  %2511 = vmatprep.subr.bf16.mxu0 0
  %2512 = vmatpush1.bf16.xpose.msra.mxu0 %v2506
  %2513 = vmatprep.subr.bf16.mxu0 0
  %2514 = vmatpush1.bf16.xpose.msra.mxu0 %v2509
  %2515 = vmatprep.subr.bf16.mxu0 0
  %2516 = vmatpush1.bf16.xpose.msra.mxu0 0
  %2517 = vmatprep.subr.bf16.mxu0 0
  %2518 = vmatpush1.bf16.xpose.msra.mxu0 0
  %2519 = vmatprep.subr.bf16.mxu0 0
  %2520 = vmatpush1.bf16.xpose.msra.mxu0 0
  %2521 = vmatprep.subr.bf16.mxu0 0
  %2522 = vmatpush1.bf16.xpose.msra.mxu0 0
  %2523 = vmatprep.subr.bf16.mxu0 0
  %2524 = vmatpush1.bf16.xpose.msra.mxu0 0
  %2525 = vmatprep.subr.bf16.mxu0 0
  %2526 = vmatpush1.bf16.xpose.msra.mxu0 0
  %2527 = vmatprep.subr.bf16.mxu0 0
  %2528 = vmatpush1.bf16.xpose.msra.mxu0 0
  %2529 = vmatprep.subr.bf16.mxu0 0
  %2530 = vmatpush1.bf16.xpose.msra.mxu0 0
  %2531 = vmatprep.subr.bf16.mxu0 0
  %2532 = vmatpush1.bf16.xpose.msra.mxu0 0
  %2533 = vmatprep.subr.bf16.mxu0 0
  %2534 = vmatpush1.bf16.xpose.msra.mxu0 0
  %2535 = vmatprep.subr.bf16.mxu0 0
  %2536 = vmatpush1.bf16.xpose.msra.mxu0 0
  %2537 = vmatprep.subr.bf16.mxu0 0
  %2538 = vmatpush1.bf16.xpose.msra.mxu0 0
  %2539 = vmatprep.subr.bf16.mxu0 0
  %2540 = vmatpush1.bf16.xpose.msra.mxu0 0
  %2541 = vmatprep.subr.bf16.mxu0 0
  %2542 = vmatpush1.bf16.xpose.msra.mxu0 0
  %2543 = vmatprep.mubr.bf16.mxu0 0
  %2544 = vmatmul.mubr.bf16.gmra.mrb[0].mxu0 %v2500
  %v2545 = vpop.f32.mrb[0].mxu0
  %v2546 = vadd.f32 %v232, %v2545
  %v2547 = vpop.f32.mrb[0].mxu0
  %v2548 = vpop.f32.mrb[0].mxu0
  %v2549 = vadd.f32 %v232, %v2548
  %v2550 = vpop.f32.mrb[0].mxu0
  %2551 = vmatprep.mubr.bf16.mxu0 0
  %2552 = vmatmul.mubr.bf16.gmra.mrb[0].mxu0 %v2503
  %v2553 = vpop.f32.mrb[0].mxu0
  %v2554 = vadd.f32 %v232, %v2553
  %v2555 = vpop.f32.mrb[0].mxu0
  %v2556 = vpop.f32.mrb[0].mxu0
  %v2557 = vpop.f32.mrb[0].mxu0
  %2558 = vdwg.mxu0
  %2561 = vrot.lane.b32.xlu0 %v2491, 96
  %v2562 = vpop.permute.xlu0 %2561
  %2563 = vrot.lane.b32.xlu0 %v2492, 96
  %v2564 = vpop.permute.xlu0 %2563
  %v2566 = vsel %vm415, %v2491, 0
  %v2569 = vsel %vm415, %v2492, 0
  %v2572 = vsel %vm415, %v2562, 0
  %v2575 = vsel %vm415, %v2564, 0
  %2577 = vmatprep.subr.bf16.mxu0 0
  %2578 = vmatpush1.bf16.xpose.msra.mxu0 %v2572
  %2579 = vmatprep.subr.bf16.mxu0 0
  %2580 = vmatpush1.bf16.xpose.msra.mxu0 %v2575
  %2581 = vmatprep.subr.bf16.mxu0 0
  %2582 = vmatpush1.bf16.xpose.msra.mxu0 0
  %2583 = vmatprep.subr.bf16.mxu0 0
  %2584 = vmatpush1.bf16.xpose.msra.mxu0 0
  %2585 = vmatprep.subr.bf16.mxu0 0
  %2586 = vmatpush1.bf16.xpose.msra.mxu0 0
  %2587 = vmatprep.subr.bf16.mxu0 0
  %2588 = vmatpush1.bf16.xpose.msra.mxu0 0
  %2589 = vmatprep.subr.bf16.mxu0 0
  %2590 = vmatpush1.bf16.xpose.msra.mxu0 0
  %2591 = vmatprep.subr.bf16.mxu0 0
  %2592 = vmatpush1.bf16.xpose.msra.mxu0 0
  %2593 = vmatprep.subr.bf16.mxu0 0
  %2594 = vmatpush1.bf16.xpose.msra.mxu0 0
  %2595 = vmatprep.subr.bf16.mxu0 0
  %2596 = vmatpush1.bf16.xpose.msra.mxu0 0
  %2597 = vmatprep.subr.bf16.mxu0 0
  %2598 = vmatpush1.bf16.xpose.msra.mxu0 0
  %2599 = vmatprep.subr.bf16.mxu0 0
  %2600 = vmatpush1.bf16.xpose.msra.mxu0 0
  %2601 = vmatprep.subr.bf16.mxu0 0
  %2602 = vmatpush1.bf16.xpose.msra.mxu0 0
  %2603 = vmatprep.subr.bf16.mxu0 0
  %2604 = vmatpush1.bf16.xpose.msra.mxu0 0
  %2605 = vmatprep.subr.bf16.mxu0 0
  %2606 = vmatpush1.bf16.xpose.msra.mxu0 0
  %2607 = vmatprep.subr.bf16.mxu0 0
  %2608 = vmatpush1.bf16.xpose.msra.mxu0 0
  %2609 = vmatprep.mubr.bf16.mxu0 0
  %2610 = vmatmul.mubr.bf16.gmra.mrb[0].mxu0 %v2566
  %v2611 = vpop.f32.mrb[0].mxu0
  %v2612 = vadd.f32 %v232, %v2611
  %v2613 = vpop.f32.mrb[0].mxu0
  %v2614 = vpop.f32.mrb[0].mxu0
  %v2615 = vadd.f32 %v232, %v2614
  %v2616 = vpop.f32.mrb[0].mxu0
  %2617 = vmatprep.mubr.bf16.mxu0 0
  %2618 = vmatmul.mubr.bf16.gmra.mrb[0].mxu0 %v2569
  %v2619 = vpop.f32.mrb[0].mxu0
  %v2620 = vadd.f32 %v232, %v2619
  %v2621 = vpop.f32.mrb[0].mxu0
  %v2622 = vpop.f32.mrb[0].mxu0
  %v2623 = vpop.f32.mrb[0].mxu0
  %2624 = vdwg.mxu0
  %v2625 = vsel %vm542, %v2546, -inf
  %2626 = vmax.xlane.f32.xlu0 %v2625
  %v2627 = vpop.xlane.xlu0 %2626
  %v2628 = vsel %vm542, %v2549, -inf
  %2629 = vmax.xlane.f32.xlu0 %v2628
  %v2630 = vpop.xlane.xlu0 %2629
  %v2631 = vsel %vm542, %v2554, -inf
  %2632 = vmax.xlane.f32.xlu0 %v2631
  %v2633 = vpop.xlane.xlu0 %2632
  %v2634 = vsel %vm542, %v2612, -inf
  %2635 = vmax.xlane.f32.xlu0 %v2634
  %v2636 = vpop.xlane.xlu0 %2635
  %v2637 = vsel %vm542, %v2615, -inf
  %2638 = vmax.xlane.f32.xlu0 %v2637
  %v2639 = vpop.xlane.xlu0 %2638
  %v2640 = vsel %vm542, %v2620, -inf
  %2641 = vmax.xlane.f32.xlu0 %v2640
  %v2642 = vpop.xlane.xlu0 %2641
  %v2643 = vsub.f32 %v2546, %v2627
  %v2644 = vsub.f32 %v2549, %v2630
  %v2645 = vsub.f32 %v2554, %v2633
  %v2646 = vsub.f32 %v2612, %v2636
  %v2647 = vsub.f32 %v2615, %v2639
  %v2648 = vsub.f32 %v2620, %v2642
  %v2649 = vmul.f32 %v2643, 1.442695
  %v2650 = vpow.pop %v2649
  %v2651 = vmul.f32 %v2644, 1.442695
  %v2652 = vpow.pop %v2651
  %v2653 = vmul.f32 %v2645, 1.442695
  %v2654 = vpow.pop %v2653
  %v2655 = vmul.f32 %v2646, 1.442695
  %v2656 = vpow.pop %v2655
  %v2657 = vmul.f32 %v2647, 1.442695
  %v2658 = vpow.pop %v2657
  %v2659 = vmul.f32 %v2648, 1.442695
  %v2660 = vpow.pop %v2659
  %v2661 = vsel %vm542, %v2650, 0.0
  %2662 = vadd.xlane.f32.xlu0 %v2661
  %v2663 = vpop.xlane.xlu0 %2662
  %v2664 = vsel %vm542, %v2652, 0.0
  %2665 = vadd.xlane.f32.xlu0 %v2664
  %v2666 = vpop.xlane.xlu0 %2665
  %v2667 = vsel %vm542, %v2654, 0.0
  %2668 = vadd.xlane.f32.xlu0 %v2667
  %v2669 = vpop.xlane.xlu0 %2668
  %v2670 = vsel %vm542, %v2656, 0.0
  %2671 = vadd.xlane.f32.xlu0 %v2670
  %v2672 = vpop.xlane.xlu0 %2671
  %v2673 = vsel %vm542, %v2658, 0.0
  %2674 = vadd.xlane.f32.xlu0 %v2673
  %v2675 = vpop.xlane.xlu0 %2674
  %v2676 = vsel %vm542, %v2660, 0.0
  %2677 = vadd.xlane.f32.xlu0 %v2676
  %v2678 = vpop.xlane.xlu0 %2677
  %v2679 = vrcp.pop %v2663
  %v2680 = vrcp.pop %v2666
  %v2681 = vrcp.pop %v2669
  %v2682 = vrcp.pop %v2672
  %v2683 = vrcp.pop %v2675
  %v2684 = vrcp.pop %v2678
  %v2685 = vmul.f32 %v2650, %v2679
  %v2686 = vmul.f32 %v2652, %v2680
  %v2687 = vmul.f32 %v2654, %v2681
  %v2688 = vmul.f32 %v2656, %v2682
  %v2689 = vmul.f32 %v2658, %v2683
  %v2690 = vmul.f32 %v2660, %v2684
  %v2691 = vpack.c.bf16 %v2686, %v2685
  %v2692 = vpack.c.bf16 %v2687, %v2687
  %v2693 = vpack.c.bf16 %v2689, %v2688
  %v2694 = vpack.c.bf16 %v2690, %v2690
  %2695 = vrot.lane.b32.xlu0 %v2489, 64
  %v2696 = vpop.permute.xlu0 %2695
  %2697 = vrot.lane.b32.xlu0 %v2490, 64
  %v2698 = vpop.permute.xlu0 %2697
  %v2701 = vsel %vm542, %v2691, 0
  %v2704 = vsel %vm542, %v2692, 0
  %v2707 = vsel %vm624, %v2698, 0
  %2709 = vmatprep.subr.bf16.mxu0 0
  %2710 = vmatpush1.bf16.msra.mxu0 %v2696
  %2711 = vmatprep.subr.bf16.mxu0 0
  %2712 = vmatpush1.bf16.msra.mxu0 %v2707
  %2713 = vmatprep.subr.bf16.mxu0 0
  %2714 = vmatpush1.bf16.msra.mxu0 0
  %2715 = vmatprep.subr.bf16.mxu0 0
  %2716 = vmatpush1.bf16.msra.mxu0 0
  %2717 = vmatprep.subr.bf16.mxu0 0
  %2718 = vmatpush1.bf16.msra.mxu0 0
  %2719 = vmatprep.subr.bf16.mxu0 0
  %2720 = vmatpush1.bf16.msra.mxu0 0
  %2721 = vmatprep.subr.bf16.mxu0 0
  %2722 = vmatpush1.bf16.msra.mxu0 0
  %2723 = vmatprep.subr.bf16.mxu0 0
  %2724 = vmatpush1.bf16.msra.mxu0 0
  %2725 = vmatprep.subr.bf16.mxu0 0
  %2726 = vmatpush1.bf16.msra.mxu0 0
  %2727 = vmatprep.subr.bf16.mxu0 0
  %2728 = vmatpush1.bf16.msra.mxu0 0
  %2729 = vmatprep.subr.bf16.mxu0 0
  %2730 = vmatpush1.bf16.msra.mxu0 0
  %2731 = vmatprep.subr.bf16.mxu0 0
  %2732 = vmatpush1.bf16.msra.mxu0 0
  %2733 = vmatprep.subr.bf16.mxu0 0
  %2734 = vmatpush1.bf16.msra.mxu0 0
  %2735 = vmatprep.subr.bf16.mxu0 0
  %2736 = vmatpush1.bf16.msra.mxu0 0
  %2737 = vmatprep.subr.bf16.mxu0 0
  %2738 = vmatpush1.bf16.msra.mxu0 0
  %2739 = vmatprep.subr.bf16.mxu0 0
  %2740 = vmatpush1.bf16.msra.mxu0 0
  %2741 = vmatprep.mubr.bf16.mxu0 0
  %2742 = vmatmul.mubr.bf16.gmra.mrb[0].mxu0 %v2701
  %v2743 = vpop.f32.mrb[0].mxu0
  %v2744 = vadd.f32 0.0, %v2743
  %v2745 = vpop.f32.mrb[0].mxu0
  %v2746 = vpop.f32.mrb[0].mxu0
  %v2747 = vadd.f32 0.0, %v2746
  %v2748 = vpop.f32.mrb[0].mxu0
  %2749 = vmatprep.mubr.bf16.mxu0 0
  %2750 = vmatmul.mubr.bf16.gmra.mrb[0].mxu0 %v2704
  %v2751 = vpop.f32.mrb[0].mxu0
  %v2752 = vadd.f32 0.0, %v2751
  %v2753 = vpop.f32.mrb[0].mxu0
  %v2754 = vpop.f32.mrb[0].mxu0
  %v2755 = vpop.f32.mrb[0].mxu0
  %2756 = vdwg.mxu0
  %2757 = vrot.lane.b32.xlu0 %v2491, 64
  %v2758 = vpop.permute.xlu0 %2757
  %2759 = vrot.lane.b32.xlu0 %v2492, 64
  %v2760 = vpop.permute.xlu0 %2759
  %v2763 = vsel %vm542, %v2693, 0
  %v2766 = vsel %vm542, %v2694, 0
  %v2769 = vsel %vm624, %v2760, 0
  %2771 = vmatprep.subr.bf16.mxu0 0
  %2772 = vmatpush1.bf16.msra.mxu0 %v2758
  %2773 = vmatprep.subr.bf16.mxu0 0
  %2774 = vmatpush1.bf16.msra.mxu0 %v2769
  %2775 = vmatprep.subr.bf16.mxu0 0
  %2776 = vmatpush1.bf16.msra.mxu0 0
  %2777 = vmatprep.subr.bf16.mxu0 0
  %2778 = vmatpush1.bf16.msra.mxu0 0
  %2779 = vmatprep.subr.bf16.mxu0 0
  %2780 = vmatpush1.bf16.msra.mxu0 0
  %2781 = vmatprep.subr.bf16.mxu0 0
  %2782 = vmatpush1.bf16.msra.mxu0 0
  %2783 = vmatprep.subr.bf16.mxu0 0
  %2784 = vmatpush1.bf16.msra.mxu0 0
  %2785 = vmatprep.subr.bf16.mxu0 0
  %2786 = vmatpush1.bf16.msra.mxu0 0
  %2787 = vmatprep.subr.bf16.mxu0 0
  %2788 = vmatpush1.bf16.msra.mxu0 0
  %2789 = vmatprep.subr.bf16.mxu0 0
  %2790 = vmatpush1.bf16.msra.mxu0 0
  %2791 = vmatprep.subr.bf16.mxu0 0
  %2792 = vmatpush1.bf16.msra.mxu0 0
  %2793 = vmatprep.subr.bf16.mxu0 0
  %2794 = vmatpush1.bf16.msra.mxu0 0
  %2795 = vmatprep.subr.bf16.mxu0 0
  %2796 = vmatpush1.bf16.msra.mxu0 0
  %2797 = vmatprep.subr.bf16.mxu0 0
  %2798 = vmatpush1.bf16.msra.mxu0 0
  %2799 = vmatprep.subr.bf16.mxu0 0
  %2800 = vmatpush1.bf16.msra.mxu0 0
  %2801 = vmatprep.subr.bf16.mxu0 0
  %2802 = vmatpush1.bf16.msra.mxu0 0
  %2803 = vmatprep.mubr.bf16.mxu0 0
  %2804 = vmatmul.mubr.bf16.gmra.mrb[0].mxu0 %v2763
  %v2805 = vpop.f32.mrb[0].mxu0
  %v2806 = vadd.f32 0.0, %v2805
  %v2807 = vpop.f32.mrb[0].mxu0
  %v2808 = vpop.f32.mrb[0].mxu0
  %v2809 = vadd.f32 0.0, %v2808
  %v2810 = vpop.f32.mrb[0].mxu0
  %2811 = vmatprep.mubr.bf16.mxu0 0
  %2812 = vmatmul.mubr.bf16.gmra.mrb[0].mxu0 %v2766
  %v2813 = vpop.f32.mrb[0].mxu0
  %v2814 = vadd.f32 0.0, %v2813
  %v2815 = vpop.f32.mrb[0].mxu0
  %v2816 = vpop.f32.mrb[0].mxu0
  %v2817 = vpop.f32.mrb[0].mxu0
  %2818 = vdwg.mxu0
  %2819 = vrot.lane.b32.xlu0 %v2489, 120
  %v2820 = vpop.permute.xlu0 %2819
  %2821 = vrot.lane.b32.xlu0 %v2490, 120
  %v2822 = vpop.permute.xlu0 %2821
  %2823 = vrot.lane.b32.xlu0 %v2489, 88
  %v2824 = vpop.permute.xlu0 %2823
  %2825 = vrot.lane.b32.xlu0 %v2490, 88
  %v2826 = vpop.permute.xlu0 %2825
  %v2828 = vsel %vm415, %v2820, 0
  %v2831 = vsel %vm415, %v2822, 0
  %v2834 = vsel %vm415, %v2824, 0
  %v2837 = vsel %vm415, %v2826, 0
  %2839 = vmatprep.subr.bf16.mxu0 0
  %2840 = vmatpush1.bf16.xpose.msra.mxu0 %v2834
  %2841 = vmatprep.subr.bf16.mxu0 0
  %2842 = vmatpush1.bf16.xpose.msra.mxu0 %v2837
  %2843 = vmatprep.subr.bf16.mxu0 0
  %2844 = vmatpush1.bf16.xpose.msra.mxu0 0
  %2845 = vmatprep.subr.bf16.mxu0 0
  %2846 = vmatpush1.bf16.xpose.msra.mxu0 0
  %2847 = vmatprep.subr.bf16.mxu0 0
  %2848 = vmatpush1.bf16.xpose.msra.mxu0 0
  %2849 = vmatprep.subr.bf16.mxu0 0
  %2850 = vmatpush1.bf16.xpose.msra.mxu0 0
  %2851 = vmatprep.subr.bf16.mxu0 0
  %2852 = vmatpush1.bf16.xpose.msra.mxu0 0
  %2853 = vmatprep.subr.bf16.mxu0 0
  %2854 = vmatpush1.bf16.xpose.msra.mxu0 0
  %2855 = vmatprep.subr.bf16.mxu0 0
  %2856 = vmatpush1.bf16.xpose.msra.mxu0 0
  %2857 = vmatprep.subr.bf16.mxu0 0
  %2858 = vmatpush1.bf16.xpose.msra.mxu0 0
  %2859 = vmatprep.subr.bf16.mxu0 0
  %2860 = vmatpush1.bf16.xpose.msra.mxu0 0
  %2861 = vmatprep.subr.bf16.mxu0 0
  %2862 = vmatpush1.bf16.xpose.msra.mxu0 0
  %2863 = vmatprep.subr.bf16.mxu0 0
  %2864 = vmatpush1.bf16.xpose.msra.mxu0 0
  %2865 = vmatprep.subr.bf16.mxu0 0
  %2866 = vmatpush1.bf16.xpose.msra.mxu0 0
  %2867 = vmatprep.subr.bf16.mxu0 0
  %2868 = vmatpush1.bf16.xpose.msra.mxu0 0
  %2869 = vmatprep.subr.bf16.mxu0 0
  %2870 = vmatpush1.bf16.xpose.msra.mxu0 0
  %2871 = vmatprep.mubr.bf16.mxu0 0
  %2872 = vmatmul.mubr.bf16.gmra.mrb[0].mxu0 %v2828
  %v2873 = vpop.f32.mrb[0].mxu0
  %v2874 = vadd.f32 %v232, %v2873
  %v2875 = vpop.f32.mrb[0].mxu0
  %v2876 = vpop.f32.mrb[0].mxu0
  %v2877 = vadd.f32 %v232, %v2876
  %v2878 = vpop.f32.mrb[0].mxu0
  %2879 = vmatprep.mubr.bf16.mxu0 0
  %2880 = vmatmul.mubr.bf16.gmra.mrb[0].mxu0 %v2831
  %v2881 = vpop.f32.mrb[0].mxu0
  %v2882 = vadd.f32 %v232, %v2881
  %v2883 = vpop.f32.mrb[0].mxu0
  %v2884 = vpop.f32.mrb[0].mxu0
  %v2885 = vpop.f32.mrb[0].mxu0
  %2886 = vdwg.mxu0
  %2887 = vrot.lane.b32.xlu0 %v2491, 120
  %v2888 = vpop.permute.xlu0 %2887
  %2889 = vrot.lane.b32.xlu0 %v2492, 120
  %v2890 = vpop.permute.xlu0 %2889
  %2891 = vrot.lane.b32.xlu0 %v2491, 88
  %v2892 = vpop.permute.xlu0 %2891
  %2893 = vrot.lane.b32.xlu0 %v2492, 88
  %v2894 = vpop.permute.xlu0 %2893
  %v2896 = vsel %vm415, %v2888, 0
  %v2899 = vsel %vm415, %v2890, 0
  %v2902 = vsel %vm415, %v2892, 0
  %v2905 = vsel %vm415, %v2894, 0
  %2907 = vmatprep.subr.bf16.mxu0 0
  %2908 = vmatpush1.bf16.xpose.msra.mxu0 %v2902
  %2909 = vmatprep.subr.bf16.mxu0 0
  %2910 = vmatpush1.bf16.xpose.msra.mxu0 %v2905
  %2911 = vmatprep.subr.bf16.mxu0 0
  %2912 = vmatpush1.bf16.xpose.msra.mxu0 0
  %2913 = vmatprep.subr.bf16.mxu0 0
  %2914 = vmatpush1.bf16.xpose.msra.mxu0 0
  %2915 = vmatprep.subr.bf16.mxu0 0
  %2916 = vmatpush1.bf16.xpose.msra.mxu0 0
  %2917 = vmatprep.subr.bf16.mxu0 0
  %2918 = vmatpush1.bf16.xpose.msra.mxu0 0
  %2919 = vmatprep.subr.bf16.mxu0 0
  %2920 = vmatpush1.bf16.xpose.msra.mxu0 0
  %2921 = vmatprep.subr.bf16.mxu0 0
  %2922 = vmatpush1.bf16.xpose.msra.mxu0 0
  %2923 = vmatprep.subr.bf16.mxu0 0
  %2924 = vmatpush1.bf16.xpose.msra.mxu0 0
  %2925 = vmatprep.subr.bf16.mxu0 0
  %2926 = vmatpush1.bf16.xpose.msra.mxu0 0
  %2927 = vmatprep.subr.bf16.mxu0 0
  %2928 = vmatpush1.bf16.xpose.msra.mxu0 0
  %2929 = vmatprep.subr.bf16.mxu0 0
  %2930 = vmatpush1.bf16.xpose.msra.mxu0 0
  %2931 = vmatprep.subr.bf16.mxu0 0
  %2932 = vmatpush1.bf16.xpose.msra.mxu0 0
  %2933 = vmatprep.subr.bf16.mxu0 0
  %2934 = vmatpush1.bf16.xpose.msra.mxu0 0
  %2935 = vmatprep.subr.bf16.mxu0 0
  %2936 = vmatpush1.bf16.xpose.msra.mxu0 0
  %2937 = vmatprep.subr.bf16.mxu0 0
  %2938 = vmatpush1.bf16.xpose.msra.mxu0 0
  %2939 = vmatprep.mubr.bf16.mxu0 0
  %2940 = vmatmul.mubr.bf16.gmra.mrb[0].mxu0 %v2896
  %v2941 = vpop.f32.mrb[0].mxu0
  %v2942 = vadd.f32 %v232, %v2941
  %v2943 = vpop.f32.mrb[0].mxu0
  %v2944 = vpop.f32.mrb[0].mxu0
  %v2945 = vadd.f32 %v232, %v2944
  %v2946 = vpop.f32.mrb[0].mxu0
  %2947 = vmatprep.mubr.bf16.mxu0 0
  %2948 = vmatmul.mubr.bf16.gmra.mrb[0].mxu0 %v2899
  %v2949 = vpop.f32.mrb[0].mxu0
  %v2950 = vadd.f32 %v232, %v2949
  %v2951 = vpop.f32.mrb[0].mxu0
  %v2952 = vpop.f32.mrb[0].mxu0
  %v2953 = vpop.f32.mrb[0].mxu0
  %2954 = vdwg.mxu0
  %v2955 = vsel %vm542, %v2874, -inf
  %2956 = vmax.xlane.f32.xlu0 %v2955
  %v2957 = vpop.xlane.xlu0 %2956
  %v2958 = vsel %vm542, %v2877, -inf
  %2959 = vmax.xlane.f32.xlu0 %v2958
  %v2960 = vpop.xlane.xlu0 %2959
  %v2961 = vsel %vm542, %v2882, -inf
  %2962 = vmax.xlane.f32.xlu0 %v2961
  %v2963 = vpop.xlane.xlu0 %2962
  %v2964 = vsel %vm542, %v2942, -inf
  %2965 = vmax.xlane.f32.xlu0 %v2964
  %v2966 = vpop.xlane.xlu0 %2965
  %v2967 = vsel %vm542, %v2945, -inf
  %2968 = vmax.xlane.f32.xlu0 %v2967
  %v2969 = vpop.xlane.xlu0 %2968
  %v2970 = vsel %vm542, %v2950, -inf
  %2971 = vmax.xlane.f32.xlu0 %v2970
  %v2972 = vpop.xlane.xlu0 %2971
  %v2973 = vsub.f32 %v2874, %v2957
  %v2974 = vsub.f32 %v2877, %v2960
  %v2975 = vsub.f32 %v2882, %v2963
  %v2976 = vsub.f32 %v2942, %v2966
  %v2977 = vsub.f32 %v2945, %v2969
  %v2978 = vsub.f32 %v2950, %v2972
  %v2979 = vmul.f32 %v2973, 1.442695
  %v2980 = vpow.pop %v2979
  %v2981 = vmul.f32 %v2974, 1.442695
  %v2982 = vpow.pop %v2981
  %v2983 = vmul.f32 %v2975, 1.442695
  %v2984 = vpow.pop %v2983
  %v2985 = vmul.f32 %v2976, 1.442695
  %v2986 = vpow.pop %v2985
  %v2987 = vmul.f32 %v2977, 1.442695
  %v2988 = vpow.pop %v2987
  %v2989 = vmul.f32 %v2978, 1.442695
  %v2990 = vpow.pop %v2989
  %v2991 = vsel %vm542, %v2980, 0.0
  %2992 = vadd.xlane.f32.xlu0 %v2991
  %v2993 = vpop.xlane.xlu0 %2992
  %v2994 = vsel %vm542, %v2982, 0.0
  %2995 = vadd.xlane.f32.xlu0 %v2994
  %v2996 = vpop.xlane.xlu0 %2995
  %v2997 = vsel %vm542, %v2984, 0.0
  %2998 = vadd.xlane.f32.xlu0 %v2997
  %v2999 = vpop.xlane.xlu0 %2998
  %v3000 = vsel %vm542, %v2986, 0.0
  %3001 = vadd.xlane.f32.xlu0 %v3000
  %v3002 = vpop.xlane.xlu0 %3001
  %v3003 = vsel %vm542, %v2988, 0.0
  %3004 = vadd.xlane.f32.xlu0 %v3003
  %v3005 = vpop.xlane.xlu0 %3004
  %v3006 = vsel %vm542, %v2990, 0.0
  %3007 = vadd.xlane.f32.xlu0 %v3006
  %v3008 = vpop.xlane.xlu0 %3007
  %v3009 = vrcp.pop %v2993
  %v3010 = vrcp.pop %v2996
  %v3011 = vrcp.pop %v2999
  %v3012 = vrcp.pop %v3002
  %v3013 = vrcp.pop %v3005
  %v3014 = vrcp.pop %v3008
  %v3015 = vmul.f32 %v2980, %v3009
  %v3016 = vmul.f32 %v2982, %v3010
  %v3017 = vmul.f32 %v2984, %v3011
  %v3018 = vmul.f32 %v2986, %v3012
  %v3019 = vmul.f32 %v2988, %v3013
  %v3020 = vmul.f32 %v2990, %v3014
  %v3021 = vpack.c.bf16 %v3016, %v3015
  %v3022 = vpack.c.bf16 %v3017, %v3017
  %v3023 = vpack.c.bf16 %v3019, %v3018
  %v3024 = vpack.c.bf16 %v3020, %v3020
  %3025 = vrot.lane.b32.xlu0 %v2489, 56
  %v3026 = vpop.permute.xlu0 %3025
  %3027 = vrot.lane.b32.xlu0 %v2490, 56
  %v3028 = vpop.permute.xlu0 %3027
  %v3031 = vsel %vm542, %v3021, 0
  %v3034 = vsel %vm542, %v3022, 0
  %v3037 = vsel %vm624, %v3028, 0
  %3039 = vmatprep.subr.bf16.mxu0 0
  %3040 = vmatpush1.bf16.msra.mxu0 %v3026
  %3041 = vmatprep.subr.bf16.mxu0 0
  %3042 = vmatpush1.bf16.msra.mxu0 %v3037
  %3043 = vmatprep.subr.bf16.mxu0 0
  %3044 = vmatpush1.bf16.msra.mxu0 0
  %3045 = vmatprep.subr.bf16.mxu0 0
  %3046 = vmatpush1.bf16.msra.mxu0 0
  %3047 = vmatprep.subr.bf16.mxu0 0
  %3048 = vmatpush1.bf16.msra.mxu0 0
  %3049 = vmatprep.subr.bf16.mxu0 0
  %3050 = vmatpush1.bf16.msra.mxu0 0
  %3051 = vmatprep.subr.bf16.mxu0 0
  %3052 = vmatpush1.bf16.msra.mxu0 0
  %3053 = vmatprep.subr.bf16.mxu0 0
  %3054 = vmatpush1.bf16.msra.mxu0 0
  %3055 = vmatprep.subr.bf16.mxu0 0
  %3056 = vmatpush1.bf16.msra.mxu0 0
  %3057 = vmatprep.subr.bf16.mxu0 0
  %3058 = vmatpush1.bf16.msra.mxu0 0
  %3059 = vmatprep.subr.bf16.mxu0 0
  %3060 = vmatpush1.bf16.msra.mxu0 0
  %3061 = vmatprep.subr.bf16.mxu0 0
  %3062 = vmatpush1.bf16.msra.mxu0 0
  %3063 = vmatprep.subr.bf16.mxu0 0
  %3064 = vmatpush1.bf16.msra.mxu0 0
  %3065 = vmatprep.subr.bf16.mxu0 0
  %3066 = vmatpush1.bf16.msra.mxu0 0
  %3067 = vmatprep.subr.bf16.mxu0 0
  %3068 = vmatpush1.bf16.msra.mxu0 0
  %3069 = vmatprep.subr.bf16.mxu0 0
  %3070 = vmatpush1.bf16.msra.mxu0 0
  %3071 = vmatprep.mubr.bf16.mxu0 0
  %3072 = vmatmul.mubr.bf16.gmra.mrb[0].mxu0 %v3031
  %v3073 = vpop.f32.mrb[0].mxu0
  %v3074 = vadd.f32 0.0, %v3073
  %v3075 = vpop.f32.mrb[0].mxu0
  %v3076 = vpop.f32.mrb[0].mxu0
  %v3077 = vadd.f32 0.0, %v3076
  %v3078 = vpop.f32.mrb[0].mxu0
  %3079 = vmatprep.mubr.bf16.mxu0 0
  %3080 = vmatmul.mubr.bf16.gmra.mrb[0].mxu0 %v3034
  %v3081 = vpop.f32.mrb[0].mxu0
  %v3082 = vadd.f32 0.0, %v3081
  %v3083 = vpop.f32.mrb[0].mxu0
  %v3084 = vpop.f32.mrb[0].mxu0
  %v3085 = vpop.f32.mrb[0].mxu0
  %3086 = vdwg.mxu0
  %3087 = vrot.lane.b32.xlu0 %v2491, 56
  %v3088 = vpop.permute.xlu0 %3087
  %3089 = vrot.lane.b32.xlu0 %v2492, 56
  %v3090 = vpop.permute.xlu0 %3089
  %v3093 = vsel %vm542, %v3023, 0
  %v3096 = vsel %vm542, %v3024, 0
  %v3099 = vsel %vm624, %v3090, 0
  %3101 = vmatprep.subr.bf16.mxu0 0
  %3102 = vmatpush1.bf16.msra.mxu0 %v3088
  %3103 = vmatprep.subr.bf16.mxu0 0
  %3104 = vmatpush1.bf16.msra.mxu0 %v3099
  %3105 = vmatprep.subr.bf16.mxu0 0
  %3106 = vmatpush1.bf16.msra.mxu0 0
  %3107 = vmatprep.subr.bf16.mxu0 0
  %3108 = vmatpush1.bf16.msra.mxu0 0
  %3109 = vmatprep.subr.bf16.mxu0 0
  %3110 = vmatpush1.bf16.msra.mxu0 0
  %3111 = vmatprep.subr.bf16.mxu0 0
  %3112 = vmatpush1.bf16.msra.mxu0 0
  %3113 = vmatprep.subr.bf16.mxu0 0
  %3114 = vmatpush1.bf16.msra.mxu0 0
  %3115 = vmatprep.subr.bf16.mxu0 0
  %3116 = vmatpush1.bf16.msra.mxu0 0
  %3117 = vmatprep.subr.bf16.mxu0 0
  %3118 = vmatpush1.bf16.msra.mxu0 0
  %3119 = vmatprep.subr.bf16.mxu0 0
  %3120 = vmatpush1.bf16.msra.mxu0 0
  %3121 = vmatprep.subr.bf16.mxu0 0
  %3122 = vmatpush1.bf16.msra.mxu0 0
  %3123 = vmatprep.subr.bf16.mxu0 0
  %3124 = vmatpush1.bf16.msra.mxu0 0
  %3125 = vmatprep.subr.bf16.mxu0 0
  %3126 = vmatpush1.bf16.msra.mxu0 0
  %3127 = vmatprep.subr.bf16.mxu0 0
  %3128 = vmatpush1.bf16.msra.mxu0 0
  %3129 = vmatprep.subr.bf16.mxu0 0
  %3130 = vmatpush1.bf16.msra.mxu0 0
  %3131 = vmatprep.subr.bf16.mxu0 0
  %3132 = vmatpush1.bf16.msra.mxu0 0
  %3133 = vmatprep.mubr.bf16.mxu0 0
  %3134 = vmatmul.mubr.bf16.gmra.mrb[0].mxu0 %v3093
  %v3135 = vpop.f32.mrb[0].mxu0
  %v3136 = vadd.f32 0.0, %v3135
  %v3137 = vpop.f32.mrb[0].mxu0
  %v3138 = vpop.f32.mrb[0].mxu0
  %v3139 = vadd.f32 0.0, %v3138
  %v3140 = vpop.f32.mrb[0].mxu0
  %3141 = vmatprep.mubr.bf16.mxu0 0
  %3142 = vmatmul.mubr.bf16.gmra.mrb[0].mxu0 %v3096
  %v3143 = vpop.f32.mrb[0].mxu0
  %v3144 = vadd.f32 0.0, %v3143
  %v3145 = vpop.f32.mrb[0].mxu0
  %v3146 = vpop.f32.mrb[0].mxu0
  %v3147 = vpop.f32.mrb[0].mxu0
  %3148 = vdwg.mxu0
  %3149 = vrot.lane.b32.xlu0 %v2489, 112
  %v3150 = vpop.permute.xlu0 %3149
  %3151 = vrot.lane.b32.xlu0 %v2490, 112
  %v3152 = vpop.permute.xlu0 %3151
  %3153 = vrot.lane.b32.xlu0 %v2489, 80
  %v3154 = vpop.permute.xlu0 %3153
  %3155 = vrot.lane.b32.xlu0 %v2490, 80
  %v3156 = vpop.permute.xlu0 %3155
  %v3158 = vsel %vm415, %v3150, 0
  %v3161 = vsel %vm415, %v3152, 0
  %v3164 = vsel %vm415, %v3154, 0
  %v3167 = vsel %vm415, %v3156, 0
  %3169 = vmatprep.subr.bf16.mxu0 0
  %3170 = vmatpush1.bf16.xpose.msra.mxu0 %v3164
  %3171 = vmatprep.subr.bf16.mxu0 0
  %3172 = vmatpush1.bf16.xpose.msra.mxu0 %v3167
  %3173 = vmatprep.subr.bf16.mxu0 0
  %3174 = vmatpush1.bf16.xpose.msra.mxu0 0
  %3175 = vmatprep.subr.bf16.mxu0 0
  %3176 = vmatpush1.bf16.xpose.msra.mxu0 0
  %3177 = vmatprep.subr.bf16.mxu0 0
  %3178 = vmatpush1.bf16.xpose.msra.mxu0 0
  %3179 = vmatprep.subr.bf16.mxu0 0
  %3180 = vmatpush1.bf16.xpose.msra.mxu0 0
  %3181 = vmatprep.subr.bf16.mxu0 0
  %3182 = vmatpush1.bf16.xpose.msra.mxu0 0
  %3183 = vmatprep.subr.bf16.mxu0 0
  %3184 = vmatpush1.bf16.xpose.msra.mxu0 0
  %3185 = vmatprep.subr.bf16.mxu0 0
  %3186 = vmatpush1.bf16.xpose.msra.mxu0 0
  %3187 = vmatprep.subr.bf16.mxu0 0
  %3188 = vmatpush1.bf16.xpose.msra.mxu0 0
  %3189 = vmatprep.subr.bf16.mxu0 0
  %3190 = vmatpush1.bf16.xpose.msra.mxu0 0
  %3191 = vmatprep.subr.bf16.mxu0 0
  %3192 = vmatpush1.bf16.xpose.msra.mxu0 0
  %3193 = vmatprep.subr.bf16.mxu0 0
  %3194 = vmatpush1.bf16.xpose.msra.mxu0 0
  %3195 = vmatprep.subr.bf16.mxu0 0
  %3196 = vmatpush1.bf16.xpose.msra.mxu0 0
  %3197 = vmatprep.subr.bf16.mxu0 0
  %3198 = vmatpush1.bf16.xpose.msra.mxu0 0
  %3199 = vmatprep.subr.bf16.mxu0 0
  %3200 = vmatpush1.bf16.xpose.msra.mxu0 0
  %3201 = vmatprep.mubr.bf16.mxu0 0
  %3202 = vmatmul.mubr.bf16.gmra.mrb[0].mxu0 %v3158
  %v3203 = vpop.f32.mrb[0].mxu0
  %v3204 = vadd.f32 %v232, %v3203
  %v3205 = vpop.f32.mrb[0].mxu0
  %v3206 = vpop.f32.mrb[0].mxu0
  %v3207 = vadd.f32 %v232, %v3206
  %v3208 = vpop.f32.mrb[0].mxu0
  %3209 = vmatprep.mubr.bf16.mxu0 0
  %3210 = vmatmul.mubr.bf16.gmra.mrb[0].mxu0 %v3161
  %v3211 = vpop.f32.mrb[0].mxu0
  %v3212 = vadd.f32 %v232, %v3211
  %v3213 = vpop.f32.mrb[0].mxu0
  %v3214 = vpop.f32.mrb[0].mxu0
  %v3215 = vpop.f32.mrb[0].mxu0
  %3216 = vdwg.mxu0
  %3217 = vrot.lane.b32.xlu0 %v2491, 112
  %v3218 = vpop.permute.xlu0 %3217
  %3219 = vrot.lane.b32.xlu0 %v2492, 112
  %v3220 = vpop.permute.xlu0 %3219
  %3221 = vrot.lane.b32.xlu0 %v2491, 80
  %v3222 = vpop.permute.xlu0 %3221
  %3223 = vrot.lane.b32.xlu0 %v2492, 80
  %v3224 = vpop.permute.xlu0 %3223
  %v3226 = vsel %vm415, %v3218, 0
  %v3229 = vsel %vm415, %v3220, 0
  %v3232 = vsel %vm415, %v3222, 0
  %v3235 = vsel %vm415, %v3224, 0
  %3237 = vmatprep.subr.bf16.mxu0 0
  %3238 = vmatpush1.bf16.xpose.msra.mxu0 %v3232
  %3239 = vmatprep.subr.bf16.mxu0 0
  %3240 = vmatpush1.bf16.xpose.msra.mxu0 %v3235
  %3241 = vmatprep.subr.bf16.mxu0 0
  %3242 = vmatpush1.bf16.xpose.msra.mxu0 0
  %3243 = vmatprep.subr.bf16.mxu0 0
  %3244 = vmatpush1.bf16.xpose.msra.mxu0 0
  %3245 = vmatprep.subr.bf16.mxu0 0
  %3246 = vmatpush1.bf16.xpose.msra.mxu0 0
  %3247 = vmatprep.subr.bf16.mxu0 0
  %3248 = vmatpush1.bf16.xpose.msra.mxu0 0
  %3249 = vmatprep.subr.bf16.mxu0 0
  %3250 = vmatpush1.bf16.xpose.msra.mxu0 0
  %3251 = vmatprep.subr.bf16.mxu0 0
  %3252 = vmatpush1.bf16.xpose.msra.mxu0 0
  %3253 = vmatprep.subr.bf16.mxu0 0
  %3254 = vmatpush1.bf16.xpose.msra.mxu0 0
  %3255 = vmatprep.subr.bf16.mxu0 0
  %3256 = vmatpush1.bf16.xpose.msra.mxu0 0
  %3257 = vmatprep.subr.bf16.mxu0 0
  %3258 = vmatpush1.bf16.xpose.msra.mxu0 0
  %3259 = vmatprep.subr.bf16.mxu0 0
  %3260 = vmatpush1.bf16.xpose.msra.mxu0 0
  %3261 = vmatprep.subr.bf16.mxu0 0
  %3262 = vmatpush1.bf16.xpose.msra.mxu0 0
  %3263 = vmatprep.subr.bf16.mxu0 0
  %3264 = vmatpush1.bf16.xpose.msra.mxu0 0
  %3265 = vmatprep.subr.bf16.mxu0 0
  %3266 = vmatpush1.bf16.xpose.msra.mxu0 0
  %3267 = vmatprep.subr.bf16.mxu0 0
  %3268 = vmatpush1.bf16.xpose.msra.mxu0 0
  %3269 = vmatprep.mubr.bf16.mxu0 0
  %3270 = vmatmul.mubr.bf16.gmra.mrb[0].mxu0 %v3226
  %v3271 = vpop.f32.mrb[0].mxu0
  %v3272 = vadd.f32 %v232, %v3271
  %v3273 = vpop.f32.mrb[0].mxu0
  %v3274 = vpop.f32.mrb[0].mxu0
  %v3275 = vadd.f32 %v232, %v3274
  %v3276 = vpop.f32.mrb[0].mxu0
  %3277 = vmatprep.mubr.bf16.mxu0 0
  %3278 = vmatmul.mubr.bf16.gmra.mrb[0].mxu0 %v3229
  %v3279 = vpop.f32.mrb[0].mxu0
  %v3280 = vadd.f32 %v232, %v3279
  %v3281 = vpop.f32.mrb[0].mxu0
  %v3282 = vpop.f32.mrb[0].mxu0
  %v3283 = vpop.f32.mrb[0].mxu0
  %3284 = vdwg.mxu0
  %v3285 = vsel %vm542, %v3204, -inf
  %3286 = vmax.xlane.f32.xlu0 %v3285
  %v3287 = vpop.xlane.xlu0 %3286
  %v3288 = vsel %vm542, %v3207, -inf
  %3289 = vmax.xlane.f32.xlu0 %v3288
  %v3290 = vpop.xlane.xlu0 %3289
  %v3291 = vsel %vm542, %v3212, -inf
  %3292 = vmax.xlane.f32.xlu0 %v3291
  %v3293 = vpop.xlane.xlu0 %3292
  %v3294 = vsel %vm542, %v3272, -inf
  %3295 = vmax.xlane.f32.xlu0 %v3294
  %v3296 = vpop.xlane.xlu0 %3295
  %v3297 = vsel %vm542, %v3275, -inf
  %3298 = vmax.xlane.f32.xlu0 %v3297
  %v3299 = vpop.xlane.xlu0 %3298
  %v3300 = vsel %vm542, %v3280, -inf
  %3301 = vmax.xlane.f32.xlu0 %v3300
  %v3302 = vpop.xlane.xlu0 %3301
  %v3303 = vsub.f32 %v3204, %v3287
  %v3304 = vsub.f32 %v3207, %v3290
  %v3305 = vsub.f32 %v3212, %v3293
  %v3306 = vsub.f32 %v3272, %v3296
  %v3307 = vsub.f32 %v3275, %v3299
  %v3308 = vsub.f32 %v3280, %v3302
  %v3309 = vmul.f32 %v3303, 1.442695
  %v3310 = vpow.pop %v3309
  %v3311 = vmul.f32 %v3304, 1.442695
  %v3312 = vpow.pop %v3311
  %v3313 = vmul.f32 %v3305, 1.442695
  %v3314 = vpow.pop %v3313
  %v3315 = vmul.f32 %v3306, 1.442695
  %v3316 = vpow.pop %v3315
  %v3317 = vmul.f32 %v3307, 1.442695
  %v3318 = vpow.pop %v3317
  %v3319 = vmul.f32 %v3308, 1.442695
  %v3320 = vpow.pop %v3319
  %v3321 = vsel %vm542, %v3310, 0.0
  %3322 = vadd.xlane.f32.xlu0 %v3321
  %v3323 = vpop.xlane.xlu0 %3322
  %v3324 = vsel %vm542, %v3312, 0.0
  %3325 = vadd.xlane.f32.xlu0 %v3324
  %v3326 = vpop.xlane.xlu0 %3325
  %v3327 = vsel %vm542, %v3314, 0.0
  %3328 = vadd.xlane.f32.xlu0 %v3327
  %v3329 = vpop.xlane.xlu0 %3328
  %v3330 = vsel %vm542, %v3316, 0.0
  %3331 = vadd.xlane.f32.xlu0 %v3330
  %v3332 = vpop.xlane.xlu0 %3331
  %v3333 = vsel %vm542, %v3318, 0.0
  %3334 = vadd.xlane.f32.xlu0 %v3333
  %v3335 = vpop.xlane.xlu0 %3334
  %v3336 = vsel %vm542, %v3320, 0.0
  %3337 = vadd.xlane.f32.xlu0 %v3336
  %v3338 = vpop.xlane.xlu0 %3337
  %v3339 = vrcp.pop %v3323
  %v3340 = vrcp.pop %v3326
  %v3341 = vrcp.pop %v3329
  %v3342 = vrcp.pop %v3332
  %v3343 = vrcp.pop %v3335
  %v3344 = vrcp.pop %v3338
  %v3345 = vmul.f32 %v3310, %v3339
  %v3346 = vmul.f32 %v3312, %v3340
  %v3347 = vmul.f32 %v3314, %v3341
  %v3348 = vmul.f32 %v3316, %v3342
  %v3349 = vmul.f32 %v3318, %v3343
  %v3350 = vmul.f32 %v3320, %v3344
  %v3351 = vpack.c.bf16 %v3346, %v3345
  %v3352 = vpack.c.bf16 %v3347, %v3347
  %v3353 = vpack.c.bf16 %v3349, %v3348
  %v3354 = vpack.c.bf16 %v3350, %v3350
  %3355 = vrot.lane.b32.xlu0 %v2489, 48
  %v3356 = vpop.permute.xlu0 %3355
  %3357 = vrot.lane.b32.xlu0 %v2490, 48
  %v3358 = vpop.permute.xlu0 %3357
  %v3361 = vsel %vm542, %v3351, 0
  %v3364 = vsel %vm542, %v3352, 0
  %v3367 = vsel %vm624, %v3358, 0
  %3369 = vmatprep.subr.bf16.mxu0 0
  %3370 = vmatpush1.bf16.msra.mxu0 %v3356
  %3371 = vmatprep.subr.bf16.mxu0 0
  %3372 = vmatpush1.bf16.msra.mxu0 %v3367
  %3373 = vmatprep.subr.bf16.mxu0 0
  %3374 = vmatpush1.bf16.msra.mxu0 0
  %3375 = vmatprep.subr.bf16.mxu0 0
  %3376 = vmatpush1.bf16.msra.mxu0 0
  %3377 = vmatprep.subr.bf16.mxu0 0
  %3378 = vmatpush1.bf16.msra.mxu0 0
  %3379 = vmatprep.subr.bf16.mxu0 0
  %3380 = vmatpush1.bf16.msra.mxu0 0
  %3381 = vmatprep.subr.bf16.mxu0 0
  %3382 = vmatpush1.bf16.msra.mxu0 0
  %3383 = vmatprep.subr.bf16.mxu0 0
  %3384 = vmatpush1.bf16.msra.mxu0 0
  %3385 = vmatprep.subr.bf16.mxu0 0
  %3386 = vmatpush1.bf16.msra.mxu0 0
  %3387 = vmatprep.subr.bf16.mxu0 0
  %3388 = vmatpush1.bf16.msra.mxu0 0
  %3389 = vmatprep.subr.bf16.mxu0 0
  %3390 = vmatpush1.bf16.msra.mxu0 0
  %3391 = vmatprep.subr.bf16.mxu0 0
  %3392 = vmatpush1.bf16.msra.mxu0 0
  %3393 = vmatprep.subr.bf16.mxu0 0
  %3394 = vmatpush1.bf16.msra.mxu0 0
  %3395 = vmatprep.subr.bf16.mxu0 0
  %3396 = vmatpush1.bf16.msra.mxu0 0
  %3397 = vmatprep.subr.bf16.mxu0 0
  %3398 = vmatpush1.bf16.msra.mxu0 0
  %3399 = vmatprep.subr.bf16.mxu0 0
  %3400 = vmatpush1.bf16.msra.mxu0 0
  %3401 = vmatprep.mubr.bf16.mxu0 0
  %3402 = vmatmul.mubr.bf16.gmra.mrb[0].mxu0 %v3361
  %v3403 = vpop.f32.mrb[0].mxu0
  %v3404 = vadd.f32 0.0, %v3403
  %v3405 = vpop.f32.mrb[0].mxu0
  %v3406 = vpop.f32.mrb[0].mxu0
  %v3407 = vadd.f32 0.0, %v3406
  %v3408 = vpop.f32.mrb[0].mxu0
  %3409 = vmatprep.mubr.bf16.mxu0 0
  %3410 = vmatmul.mubr.bf16.gmra.mrb[0].mxu0 %v3364
  %v3411 = vpop.f32.mrb[0].mxu0
  %v3412 = vadd.f32 0.0, %v3411
  %v3413 = vpop.f32.mrb[0].mxu0
  %v3414 = vpop.f32.mrb[0].mxu0
  %v3415 = vpop.f32.mrb[0].mxu0
  %3416 = vdwg.mxu0
  %3417 = vrot.lane.b32.xlu0 %v2491, 48
  %v3418 = vpop.permute.xlu0 %3417
  %3419 = vrot.lane.b32.xlu0 %v2492, 48
  %v3420 = vpop.permute.xlu0 %3419
  %v3423 = vsel %vm542, %v3353, 0
  %v3426 = vsel %vm542, %v3354, 0
  %v3429 = vsel %vm624, %v3420, 0
  %3431 = vmatprep.subr.bf16.mxu0 0
  %3432 = vmatpush1.bf16.msra.mxu0 %v3418
  %3433 = vmatprep.subr.bf16.mxu0 0
  %3434 = vmatpush1.bf16.msra.mxu0 %v3429
  %3435 = vmatprep.subr.bf16.mxu0 0
  %3436 = vmatpush1.bf16.msra.mxu0 0
  %3437 = vmatprep.subr.bf16.mxu0 0
  %3438 = vmatpush1.bf16.msra.mxu0 0
  %3439 = vmatprep.subr.bf16.mxu0 0
  %3440 = vmatpush1.bf16.msra.mxu0 0
  %3441 = vmatprep.subr.bf16.mxu0 0
  %3442 = vmatpush1.bf16.msra.mxu0 0
  %3443 = vmatprep.subr.bf16.mxu0 0
  %3444 = vmatpush1.bf16.msra.mxu0 0
  %3445 = vmatprep.subr.bf16.mxu0 0
  %3446 = vmatpush1.bf16.msra.mxu0 0
  %3447 = vmatprep.subr.bf16.mxu0 0
  %3448 = vmatpush1.bf16.msra.mxu0 0
  %3449 = vmatprep.subr.bf16.mxu0 0
  %3450 = vmatpush1.bf16.msra.mxu0 0
  %3451 = vmatprep.subr.bf16.mxu0 0
  %3452 = vmatpush1.bf16.msra.mxu0 0
  %3453 = vmatprep.subr.bf16.mxu0 0
  %3454 = vmatpush1.bf16.msra.mxu0 0
  %3455 = vmatprep.subr.bf16.mxu0 0
  %3456 = vmatpush1.bf16.msra.mxu0 0
  %3457 = vmatprep.subr.bf16.mxu0 0
  %3458 = vmatpush1.bf16.msra.mxu0 0
  %3459 = vmatprep.subr.bf16.mxu0 0
  %3460 = vmatpush1.bf16.msra.mxu0 0
  %3461 = vmatprep.subr.bf16.mxu0 0
  %3462 = vmatpush1.bf16.msra.mxu0 0
  %3463 = vmatprep.mubr.bf16.mxu0 0
  %3464 = vmatmul.mubr.bf16.gmra.mrb[0].mxu0 %v3423
  %v3465 = vpop.f32.mrb[0].mxu0
  %v3466 = vadd.f32 0.0, %v3465
  %v3467 = vpop.f32.mrb[0].mxu0
  %v3468 = vpop.f32.mrb[0].mxu0
  %v3469 = vadd.f32 0.0, %v3468
  %v3470 = vpop.f32.mrb[0].mxu0
  %3471 = vmatprep.mubr.bf16.mxu0 0
  %3472 = vmatmul.mubr.bf16.gmra.mrb[0].mxu0 %v3426
  %v3473 = vpop.f32.mrb[0].mxu0
  %v3474 = vadd.f32 0.0, %v3473
  %v3475 = vpop.f32.mrb[0].mxu0
  %v3476 = vpop.f32.mrb[0].mxu0
  %v3477 = vpop.f32.mrb[0].mxu0
  %3478 = vdwg.mxu0
  %3479 = vrot.lane.b32.xlu0 %v2489, 104
  %v3480 = vpop.permute.xlu0 %3479
  %3481 = vrot.lane.b32.xlu0 %v2490, 104
  %v3482 = vpop.permute.xlu0 %3481
  %3483 = vrot.lane.b32.xlu0 %v2489, 72
  %v3484 = vpop.permute.xlu0 %3483
  %3485 = vrot.lane.b32.xlu0 %v2490, 72
  %v3486 = vpop.permute.xlu0 %3485
  %v3488 = vsel %vm415, %v3480, 0
  %v3491 = vsel %vm415, %v3482, 0
  %v3494 = vsel %vm415, %v3484, 0
  %v3497 = vsel %vm415, %v3486, 0
  %3499 = vmatprep.subr.bf16.mxu0 0
  %3500 = vmatpush1.bf16.xpose.msra.mxu0 %v3494
  %3501 = vmatprep.subr.bf16.mxu0 0
  %3502 = vmatpush1.bf16.xpose.msra.mxu0 %v3497
  %3503 = vmatprep.subr.bf16.mxu0 0
  %3504 = vmatpush1.bf16.xpose.msra.mxu0 0
  %3505 = vmatprep.subr.bf16.mxu0 0
  %3506 = vmatpush1.bf16.xpose.msra.mxu0 0
  %3507 = vmatprep.subr.bf16.mxu0 0
  %3508 = vmatpush1.bf16.xpose.msra.mxu0 0
  %3509 = vmatprep.subr.bf16.mxu0 0
  %3510 = vmatpush1.bf16.xpose.msra.mxu0 0
  %3511 = vmatprep.subr.bf16.mxu0 0
  %3512 = vmatpush1.bf16.xpose.msra.mxu0 0
  %3513 = vmatprep.subr.bf16.mxu0 0
  %3514 = vmatpush1.bf16.xpose.msra.mxu0 0
  %3515 = vmatprep.subr.bf16.mxu0 0
  %3516 = vmatpush1.bf16.xpose.msra.mxu0 0
  %3517 = vmatprep.subr.bf16.mxu0 0
  %3518 = vmatpush1.bf16.xpose.msra.mxu0 0
  %3519 = vmatprep.subr.bf16.mxu0 0
  %3520 = vmatpush1.bf16.xpose.msra.mxu0 0
  %3521 = vmatprep.subr.bf16.mxu0 0
  %3522 = vmatpush1.bf16.xpose.msra.mxu0 0
  %3523 = vmatprep.subr.bf16.mxu0 0
  %3524 = vmatpush1.bf16.xpose.msra.mxu0 0
  %3525 = vmatprep.subr.bf16.mxu0 0
  %3526 = vmatpush1.bf16.xpose.msra.mxu0 0
  %3527 = vmatprep.subr.bf16.mxu0 0
  %3528 = vmatpush1.bf16.xpose.msra.mxu0 0
  %3529 = vmatprep.subr.bf16.mxu0 0
  %3530 = vmatpush1.bf16.xpose.msra.mxu0 0
  %3531 = vmatprep.mubr.bf16.mxu0 0
  %3532 = vmatmul.mubr.bf16.gmra.mrb[0].mxu0 %v3488
  %v3533 = vpop.f32.mrb[0].mxu0
  %v3534 = vadd.f32 %v232, %v3533
  %v3535 = vpop.f32.mrb[0].mxu0
  %v3536 = vpop.f32.mrb[0].mxu0
  %v3537 = vadd.f32 %v232, %v3536
  %v3538 = vpop.f32.mrb[0].mxu0
  %3539 = vmatprep.mubr.bf16.mxu0 0
  %3540 = vmatmul.mubr.bf16.gmra.mrb[0].mxu0 %v3491
  %v3541 = vpop.f32.mrb[0].mxu0
  %v3542 = vadd.f32 %v232, %v3541
  %v3543 = vpop.f32.mrb[0].mxu0
  %v3544 = vpop.f32.mrb[0].mxu0
  %v3545 = vpop.f32.mrb[0].mxu0
  %3546 = vdwg.mxu0
  %3547 = vrot.lane.b32.xlu0 %v2491, 104
  %v3548 = vpop.permute.xlu0 %3547
  %3549 = vrot.lane.b32.xlu0 %v2492, 104
  %v3550 = vpop.permute.xlu0 %3549
  %3551 = vrot.lane.b32.xlu0 %v2491, 72
  %v3552 = vpop.permute.xlu0 %3551
  %3553 = vrot.lane.b32.xlu0 %v2492, 72
  %v3554 = vpop.permute.xlu0 %3553
  %v3556 = vsel %vm415, %v3548, 0
  %v3559 = vsel %vm415, %v3550, 0
  %v3562 = vsel %vm415, %v3552, 0
  %v3565 = vsel %vm415, %v3554, 0
  %3567 = vmatprep.subr.bf16.mxu0 0
  %3568 = vmatpush1.bf16.xpose.msra.mxu0 %v3562
  %3569 = vmatprep.subr.bf16.mxu0 0
  %3570 = vmatpush1.bf16.xpose.msra.mxu0 %v3565
  %3571 = vmatprep.subr.bf16.mxu0 0
  %3572 = vmatpush1.bf16.xpose.msra.mxu0 0
  %3573 = vmatprep.subr.bf16.mxu0 0
  %3574 = vmatpush1.bf16.xpose.msra.mxu0 0
  %3575 = vmatprep.subr.bf16.mxu0 0
  %3576 = vmatpush1.bf16.xpose.msra.mxu0 0
  %3577 = vmatprep.subr.bf16.mxu0 0
  %3578 = vmatpush1.bf16.xpose.msra.mxu0 0
  %3579 = vmatprep.subr.bf16.mxu0 0
  %3580 = vmatpush1.bf16.xpose.msra.mxu0 0
  %3581 = vmatprep.subr.bf16.mxu0 0
  %3582 = vmatpush1.bf16.xpose.msra.mxu0 0
  %3583 = vmatprep.subr.bf16.mxu0 0
  %3584 = vmatpush1.bf16.xpose.msra.mxu0 0
  %3585 = vmatprep.subr.bf16.mxu0 0
  %3586 = vmatpush1.bf16.xpose.msra.mxu0 0
  %3587 = vmatprep.subr.bf16.mxu0 0
  %3588 = vmatpush1.bf16.xpose.msra.mxu0 0
  %3589 = vmatprep.subr.bf16.mxu0 0
  %3590 = vmatpush1.bf16.xpose.msra.mxu0 0
  %3591 = vmatprep.subr.bf16.mxu0 0
  %3592 = vmatpush1.bf16.xpose.msra.mxu0 0
  %3593 = vmatprep.subr.bf16.mxu0 0
  %3594 = vmatpush1.bf16.xpose.msra.mxu0 0
  %3595 = vmatprep.subr.bf16.mxu0 0
  %3596 = vmatpush1.bf16.xpose.msra.mxu0 0
  %3597 = vmatprep.subr.bf16.mxu0 0
  %3598 = vmatpush1.bf16.xpose.msra.mxu0 0
  %3599 = vmatprep.mubr.bf16.mxu0 0
  %3600 = vmatmul.mubr.bf16.gmra.mrb[0].mxu0 %v3556
  %v3601 = vpop.f32.mrb[0].mxu0
  %v3602 = vadd.f32 %v232, %v3601
  %v3603 = vpop.f32.mrb[0].mxu0
  %v3604 = vpop.f32.mrb[0].mxu0
  %v3605 = vadd.f32 %v232, %v3604
  %v3606 = vpop.f32.mrb[0].mxu0
  %3607 = vmatprep.mubr.bf16.mxu0 0
  %3608 = vmatmul.mubr.bf16.gmra.mrb[0].mxu0 %v3559
  %v3609 = vpop.f32.mrb[0].mxu0
  %v3610 = vadd.f32 %v232, %v3609
  %v3611 = vpop.f32.mrb[0].mxu0
  %v3612 = vpop.f32.mrb[0].mxu0
  %v3613 = vpop.f32.mrb[0].mxu0
  %3614 = vdwg.mxu0
  %v3615 = vsel %vm542, %v3534, -inf
  %3616 = vmax.xlane.f32.xlu0 %v3615
  %v3617 = vpop.xlane.xlu0 %3616
  %v3618 = vsel %vm542, %v3537, -inf
  %3619 = vmax.xlane.f32.xlu0 %v3618
  %v3620 = vpop.xlane.xlu0 %3619
  %v3621 = vsel %vm542, %v3542, -inf
  %3622 = vmax.xlane.f32.xlu0 %v3621
  %v3623 = vpop.xlane.xlu0 %3622
  %v3624 = vsel %vm542, %v3602, -inf
  %3625 = vmax.xlane.f32.xlu0 %v3624
  %v3626 = vpop.xlane.xlu0 %3625
  %v3627 = vsel %vm542, %v3605, -inf
  %3628 = vmax.xlane.f32.xlu0 %v3627
  %v3629 = vpop.xlane.xlu0 %3628
  %v3630 = vsel %vm542, %v3610, -inf
  %3631 = vmax.xlane.f32.xlu0 %v3630
  %v3632 = vpop.xlane.xlu0 %3631
  %v3633 = vsub.f32 %v3534, %v3617
  %v3634 = vsub.f32 %v3537, %v3620
  %v3635 = vsub.f32 %v3542, %v3623
  %v3636 = vsub.f32 %v3602, %v3626
  %v3637 = vsub.f32 %v3605, %v3629
  %v3638 = vsub.f32 %v3610, %v3632
  %v3639 = vmul.f32 %v3633, 1.442695
  %v3640 = vpow.pop %v3639
  %v3641 = vmul.f32 %v3634, 1.442695
  %v3642 = vpow.pop %v3641
  %v3643 = vmul.f32 %v3635, 1.442695
  %v3644 = vpow.pop %v3643
  %v3645 = vmul.f32 %v3636, 1.442695
  %v3646 = vpow.pop %v3645
  %v3647 = vmul.f32 %v3637, 1.442695
  %v3648 = vpow.pop %v3647
  %v3649 = vmul.f32 %v3638, 1.442695
  %v3650 = vpow.pop %v3649
  %v3651 = vsel %vm542, %v3640, 0.0
  %3652 = vadd.xlane.f32.xlu0 %v3651
  %v3653 = vpop.xlane.xlu0 %3652
  %v3654 = vsel %vm542, %v3642, 0.0
  %3655 = vadd.xlane.f32.xlu0 %v3654
  %v3656 = vpop.xlane.xlu0 %3655
  %v3657 = vsel %vm542, %v3644, 0.0
  %3658 = vadd.xlane.f32.xlu0 %v3657
  %v3659 = vpop.xlane.xlu0 %3658
  %v3660 = vsel %vm542, %v3646, 0.0
  %3661 = vadd.xlane.f32.xlu0 %v3660
  %v3662 = vpop.xlane.xlu0 %3661
  %v3663 = vsel %vm542, %v3648, 0.0
  %3664 = vadd.xlane.f32.xlu0 %v3663
  %v3665 = vpop.xlane.xlu0 %3664
  %v3666 = vsel %vm542, %v3650, 0.0
  %3667 = vadd.xlane.f32.xlu0 %v3666
  %v3668 = vpop.xlane.xlu0 %3667
  %v3669 = vrcp.pop %v3653
  %v3670 = vrcp.pop %v3656
  %v3671 = vrcp.pop %v3659
  %v3672 = vrcp.pop %v3662
  %v3673 = vrcp.pop %v3665
  %v3674 = vrcp.pop %v3668
  %v3675 = vmul.f32 %v3640, %v3669
  %v3676 = vmul.f32 %v3642, %v3670
  %v3677 = vmul.f32 %v3644, %v3671
  %v3678 = vmul.f32 %v3646, %v3672
  %v3679 = vmul.f32 %v3648, %v3673
  %v3680 = vmul.f32 %v3650, %v3674
  %v3681 = vpack.c.bf16 %v3676, %v3675
  %v3682 = vpack.c.bf16 %v3677, %v3677
  %v3683 = vpack.c.bf16 %v3679, %v3678
  %v3684 = vpack.c.bf16 %v3680, %v3680
  %3685 = vrot.lane.b32.xlu0 %v2489, 40
  %v3686 = vpop.permute.xlu0 %3685
  %3687 = vrot.lane.b32.xlu0 %v2490, 40
  %v3688 = vpop.permute.xlu0 %3687
  %v3691 = vsel %vm542, %v3681, 0
  %v3694 = vsel %vm542, %v3682, 0
  %v3697 = vsel %vm624, %v3688, 0
  %3699 = vmatprep.subr.bf16.mxu0 0
  %3700 = vmatpush1.bf16.msra.mxu0 %v3686
  %3701 = vmatprep.subr.bf16.mxu0 0
  %3702 = vmatpush1.bf16.msra.mxu0 %v3697
  %3703 = vmatprep.subr.bf16.mxu0 0
  %3704 = vmatpush1.bf16.msra.mxu0 0
  %3705 = vmatprep.subr.bf16.mxu0 0
  %3706 = vmatpush1.bf16.msra.mxu0 0
  %3707 = vmatprep.subr.bf16.mxu0 0
  %3708 = vmatpush1.bf16.msra.mxu0 0
  %3709 = vmatprep.subr.bf16.mxu0 0
  %3710 = vmatpush1.bf16.msra.mxu0 0
  %3711 = vmatprep.subr.bf16.mxu0 0
  %3712 = vmatpush1.bf16.msra.mxu0 0
  %3713 = vmatprep.subr.bf16.mxu0 0
  %3714 = vmatpush1.bf16.msra.mxu0 0
  %3715 = vmatprep.subr.bf16.mxu0 0
  %3716 = vmatpush1.bf16.msra.mxu0 0
  %3717 = vmatprep.subr.bf16.mxu0 0
  %3718 = vmatpush1.bf16.msra.mxu0 0
  %3719 = vmatprep.subr.bf16.mxu0 0
  %3720 = vmatpush1.bf16.msra.mxu0 0
  %3721 = vmatprep.subr.bf16.mxu0 0
  %3722 = vmatpush1.bf16.msra.mxu0 0
  %3723 = vmatprep.subr.bf16.mxu0 0
  %3724 = vmatpush1.bf16.msra.mxu0 0
  %3725 = vmatprep.subr.bf16.mxu0 0
  %3726 = vmatpush1.bf16.msra.mxu0 0
  %3727 = vmatprep.subr.bf16.mxu0 0
  %3728 = vmatpush1.bf16.msra.mxu0 0
  %3729 = vmatprep.subr.bf16.mxu0 0
  %3730 = vmatpush1.bf16.msra.mxu0 0
  %3731 = vmatprep.mubr.bf16.mxu0 0
  %3732 = vmatmul.mubr.bf16.gmra.mrb[0].mxu0 %v3691
  %v3733 = vpop.f32.mrb[0].mxu0
  %v3734 = vadd.f32 0.0, %v3733
  %v3735 = vpop.f32.mrb[0].mxu0
  %v3736 = vpop.f32.mrb[0].mxu0
  %v3737 = vadd.f32 0.0, %v3736
  %v3738 = vpop.f32.mrb[0].mxu0
  %3739 = vmatprep.mubr.bf16.mxu0 0
  %3740 = vmatmul.mubr.bf16.gmra.mrb[0].mxu0 %v3694
  %v3741 = vpop.f32.mrb[0].mxu0
  %v3742 = vadd.f32 0.0, %v3741
  %v3743 = vpop.f32.mrb[0].mxu0
  %v3744 = vpop.f32.mrb[0].mxu0
  %v3745 = vpop.f32.mrb[0].mxu0
  %3746 = vdwg.mxu0
  %3747 = vrot.lane.b32.xlu0 %v2491, 40
  %v3748 = vpop.permute.xlu0 %3747
  %3749 = vrot.lane.b32.xlu0 %v2492, 40
  %v3750 = vpop.permute.xlu0 %3749
  %v3753 = vsel %vm542, %v3683, 0
  %v3756 = vsel %vm542, %v3684, 0
  %v3759 = vsel %vm624, %v3750, 0
  %3761 = vmatprep.subr.bf16.mxu0 0
  %3762 = vmatpush1.bf16.msra.mxu0 %v3748
  %3763 = vmatprep.subr.bf16.mxu0 0
  %3764 = vmatpush1.bf16.msra.mxu0 %v3759
  %3765 = vmatprep.subr.bf16.mxu0 0
  %3766 = vmatpush1.bf16.msra.mxu0 0
  %3767 = vmatprep.subr.bf16.mxu0 0
  %3768 = vmatpush1.bf16.msra.mxu0 0
  %3769 = vmatprep.subr.bf16.mxu0 0
  %3770 = vmatpush1.bf16.msra.mxu0 0
  %3771 = vmatprep.subr.bf16.mxu0 0
  %3772 = vmatpush1.bf16.msra.mxu0 0
  %3773 = vmatprep.subr.bf16.mxu0 0
  %3774 = vmatpush1.bf16.msra.mxu0 0
  %3775 = vmatprep.subr.bf16.mxu0 0
  %3776 = vmatpush1.bf16.msra.mxu0 0
  %3777 = vmatprep.subr.bf16.mxu0 0
  %3778 = vmatpush1.bf16.msra.mxu0 0
  %3779 = vmatprep.subr.bf16.mxu0 0
  %3780 = vmatpush1.bf16.msra.mxu0 0
  %3781 = vmatprep.subr.bf16.mxu0 0
  %3782 = vmatpush1.bf16.msra.mxu0 0
  %3783 = vmatprep.subr.bf16.mxu0 0
  %3784 = vmatpush1.bf16.msra.mxu0 0
  %3785 = vmatprep.subr.bf16.mxu0 0
  %3786 = vmatpush1.bf16.msra.mxu0 0
  %3787 = vmatprep.subr.bf16.mxu0 0
  %3788 = vmatpush1.bf16.msra.mxu0 0
  %3789 = vmatprep.subr.bf16.mxu0 0
  %3790 = vmatpush1.bf16.msra.mxu0 0
  %3791 = vmatprep.subr.bf16.mxu0 0
  %3792 = vmatpush1.bf16.msra.mxu0 0
  %3793 = vmatprep.mubr.bf16.mxu0 0
  %3794 = vmatmul.mubr.bf16.gmra.mrb[0].mxu0 %v3753
  %v3795 = vpop.f32.mrb[0].mxu0
  %v3796 = vadd.f32 0.0, %v3795
  %v3797 = vpop.f32.mrb[0].mxu0
  %v3798 = vpop.f32.mrb[0].mxu0
  %v3799 = vadd.f32 0.0, %v3798
  %v3800 = vpop.f32.mrb[0].mxu0
  %3801 = vmatprep.mubr.bf16.mxu0 0
  %3802 = vmatmul.mubr.bf16.gmra.mrb[0].mxu0 %v3756
  %v3803 = vpop.f32.mrb[0].mxu0
  %v3804 = vadd.f32 0.0, %v3803
  %v3805 = vpop.f32.mrb[0].mxu0
  %v3806 = vpop.f32.mrb[0].mxu0
  %v3807 = vpop.f32.mrb[0].mxu0
  %3808 = vdwg.mxu0
  %3815 = vrot.lane.b32.xlu0 %v3074, 8
  %v3816 = vpop.permute.xlu0 %3815
  %3817 = vrot.lane.b32.xlu0 %v3077, 8
  %v3818 = vpop.permute.xlu0 %3817
  %3819 = vrot.lane.b32.xlu0 %v3082, 8
  %v3820 = vpop.permute.xlu0 %3819
  %3821 = vrot.lane.b32.xlu0 %v3136, 8
  %v3822 = vpop.permute.xlu0 %3821
  %3823 = vrot.lane.b32.xlu0 %v3139, 8
  %v3824 = vpop.permute.xlu0 %3823
  %3825 = vrot.lane.b32.xlu0 %v3144, 8
  %v3826 = vpop.permute.xlu0 %3825
  %3839 = vrot.lane.b32.xlu0 %v3404, 16
  %v3840 = vpop.permute.xlu0 %3839
  %3841 = vrot.lane.b32.xlu0 %v3407, 16
  %v3842 = vpop.permute.xlu0 %3841
  %3843 = vrot.lane.b32.xlu0 %v3412, 16
  %v3844 = vpop.permute.xlu0 %3843
  %3845 = vrot.lane.b32.xlu0 %v3466, 16
  %v3846 = vpop.permute.xlu0 %3845
  %3847 = vrot.lane.b32.xlu0 %v3469, 16
  %v3848 = vpop.permute.xlu0 %3847
  %3849 = vrot.lane.b32.xlu0 %v3474, 16
  %v3850 = vpop.permute.xlu0 %3849
  %3863 = vrot.lane.b32.xlu0 %v3734, 24
  %v3864 = vpop.permute.xlu0 %3863
  %3865 = vrot.lane.b32.xlu0 %v3737, 24
  %v3866 = vpop.permute.xlu0 %3865
  %3867 = vrot.lane.b32.xlu0 %v3742, 24
  %v3868 = vpop.permute.xlu0 %3867
  %3869 = vrot.lane.b32.xlu0 %v3796, 24
  %v3870 = vpop.permute.xlu0 %3869
  %3871 = vrot.lane.b32.xlu0 %v3799, 24
  %v3872 = vpop.permute.xlu0 %3871
  %3873 = vrot.lane.b32.xlu0 %v3804, 24
  %v3874 = vpop.permute.xlu0 %3873
  %v3881 = vsel %vm415, %v2744, %v3816
  %v3882 = vsel %vm415, %v2747, %v3818
  %v3883 = vsel %vm415, %v2752, %v3820
  %v3884 = vsel %vm415, %v2806, %v3822
  %v3885 = vsel %vm415, %v2809, %v3824
  %v3886 = vsel %vm415, %v2814, %v3826
  %v3887 = vsel %vm1806, %v3881, %v3840
  %v3888 = vsel %vm1806, %v3882, %v3842
  %v3889 = vsel %vm1806, %v3883, %v3844
  %v3890 = vsel %vm1806, %v3884, %v3846
  %v3891 = vsel %vm1806, %v3885, %v3848
  %v3892 = vsel %vm1806, %v3886, %v3850
  %v3893 = vsel %vm542, %v3887, %v3864
  %v3894 = vsel %vm542, %v3888, %v3866
  %v3895 = vsel %vm542, %v3889, %v3868
  %v3896 = vsel %vm542, %v3890, %v3870
  %v3897 = vsel %vm542, %v3891, %v3872
  %v3898 = vsel %vm542, %v3892, %v3874
  %v3899 = vpack.c.bf16 %v3894, %v3893
  %v3900 = vpack.c.bf16 %v3896, %v3895
  %v3901 = vpack.c.bf16 %v3898, %v3897
  %s3902 = scalar_lea.vmem %s4, 16
  %v3903 = vld [vmem:[%s3902] sm:$0xf]
  %v3904 = vld [vmem:[%s3902 + $0x4] sm:$0xf]
  %v3905 = vld [vmem:[%s3902 + $0x8] sm:$0xf]
  %v3906 = vld [vmem:[%s3902 + $0xc] sm:$0xf]
  %v3911 = vunpack.c.l.b16 %v3903
  %v3912 = vunpack.c.l.b16 %v3904
  %v3913 = vunpack.c.l.b16 %v3905
  %v3914 = vunpack.c.l.b16 %v3906
  %v3915 = vpack.c.b16 %v3912, %v3911
  %v3916 = vpack.c.b16 %v3914, %v3913
  %v3920 = vsel %vm144, %v3899, 0
  %v3923 = vsel %vm144, %v3900, 0
  %v3926 = vsel %vm144, %v3901, 0
  %3928 = vmatprep.subr.bf16.mxu0 0
  %3929 = vmatpush1.bf16.msra.mxu0 %v3915
  %3930 = vmatprep.subr.bf16.mxu0 0
  %3931 = vmatpush1.bf16.msra.mxu0 %v3916
  %3932 = vmatprep.subr.bf16.mxu0 0
  %3933 = vmatpush1.bf16.msra.mxu0 0
  %3934 = vmatprep.subr.bf16.mxu0 0
  %3935 = vmatpush1.bf16.msra.mxu0 0
  %3936 = vmatprep.subr.bf16.mxu0 0
  %3937 = vmatpush1.bf16.msra.mxu0 0
  %3938 = vmatprep.subr.bf16.mxu0 0
  %3939 = vmatpush1.bf16.msra.mxu0 0
  %3940 = vmatprep.subr.bf16.mxu0 0
  %3941 = vmatpush1.bf16.msra.mxu0 0
  %3942 = vmatprep.subr.bf16.mxu0 0
  %3943 = vmatpush1.bf16.msra.mxu0 0
  %3944 = vmatprep.subr.bf16.mxu0 0
  %3945 = vmatpush1.bf16.msra.mxu0 0
  %3946 = vmatprep.subr.bf16.mxu0 0
  %3947 = vmatpush1.bf16.msra.mxu0 0
  %3948 = vmatprep.subr.bf16.mxu0 0
  %3949 = vmatpush1.bf16.msra.mxu0 0
  %3950 = vmatprep.subr.bf16.mxu0 0
  %3951 = vmatpush1.bf16.msra.mxu0 0
  %3952 = vmatprep.subr.bf16.mxu0 0
  %3953 = vmatpush1.bf16.msra.mxu0 0
  %3954 = vmatprep.subr.bf16.mxu0 0
  %3955 = vmatpush1.bf16.msra.mxu0 0
  %3956 = vmatprep.subr.bf16.mxu0 0
  %3957 = vmatpush1.bf16.msra.mxu0 0
  %3958 = vmatprep.subr.bf16.mxu0 0
  %3959 = vmatpush1.bf16.msra.mxu0 0
  %3960 = vmatprep.mubr.bf16.mxu0 0
  %3961 = vmatmul.mubr.bf16.gmra.mrb[0].mxu0 %v3920
  %v3962 = vpop.f32.mrb[0].mxu0
  %v3963 = vadd.f32 0.0, %v3962
  %v3964 = vpop.f32.mrb[0].mxu0
  %v3965 = vpop.f32.mrb[0].mxu0
  %v3966 = vadd.f32 0.0, %v3965
  %v3967 = vpop.f32.mrb[0].mxu0
  %3968 = vmatprep.mubr.bf16.mxu0 0
  %3969 = vmatmul.mubr.bf16.gmra.mrb[0].mxu0 %v3923
  %v3970 = vpop.f32.mrb[0].mxu0
  %v3971 = vadd.f32 0.0, %v3970
  %v3972 = vpop.f32.mrb[0].mxu0
  %v3973 = vpop.f32.mrb[0].mxu0
  %v3974 = vadd.f32 0.0, %v3973
  %v3975 = vpop.f32.mrb[0].mxu0
  %3976 = vmatprep.mubr.bf16.mxu0 0
  %3977 = vmatmul.mubr.bf16.gmra.mrb[0].mxu0 %v3926
  %v3978 = vpop.f32.mrb[0].mxu0
  %v3979 = vadd.f32 0.0, %v3978
  %v3980 = vpop.f32.mrb[0].mxu0
  %v3981 = vpop.f32.mrb[0].mxu0
  %v3982 = vadd.f32 0.0, %v3981
  %v3983 = vpop.f32.mrb[0].mxu0
  %3984 = vdwg.mxu0
  %v3985 = vadd.f32 %v2295, %v3963
  %v3986 = vadd.f32 %v2296, %v3966
  %v3987 = vadd.f32 %v2297, %v3971
  %v3988 = vadd.f32 %v2298, %v3974
  %v3989 = vadd.f32 %v2299, %v3979
  %v3990 = vadd.f32 %v2300, %v3982
  %v3991 = vlaneseq
  %v3992 = vshrl.u32 %v3991, 7
  %v3993 = vsub.s32 4, %v3992
  %v3994 = vrot.slane %v32, %v3993
  %v3995 = vadd.f32 %v3985, %v3994
  %v3996 = vadd.f32 %v3986, %v3994
  %v3997 = vadd.f32 %v3987, %v3994
  %v3998 = vadd.f32 %v3988, %v3994
  %v3999 = vadd.f32 %v3989, %v3994
  %v4000 = vadd.f32 %v3990, %v3994
  %v4001 = vsel %vm144, %v3995, 0.0
  %4002 = vadd.xlane.f32.xlu0 %v4001
  %v4003 = vpop.xlane.xlu0 %4002
  %v4004 = vsel %vm144, %v3996, 0.0
  %4005 = vadd.xlane.f32.xlu0 %v4004
  %v4006 = vpop.xlane.xlu0 %4005
  %v4007 = vsel %vm144, %v3997, 0.0
  %4008 = vadd.xlane.f32.xlu0 %v4007
  %v4009 = vpop.xlane.xlu0 %4008
  %v4010 = vsel %vm144, %v3998, 0.0
  %4011 = vadd.xlane.f32.xlu0 %v4010
  %v4012 = vpop.xlane.xlu0 %4011
  %v4013 = vsel %vm144, %v3999, 0.0
  %4014 = vadd.xlane.f32.xlu0 %v4013
  %v4015 = vpop.xlane.xlu0 %4014
  %v4016 = vsel %vm144, %v4000, 0.0
  %4017 = vadd.xlane.f32.xlu0 %v4016
  %v4018 = vpop.xlane.xlu0 %4017
  %v4019 = vmul.f32 %v4003, %v160
  %v4020 = vmul.f32 %v4006, %v160
  %v4021 = vmul.f32 %v4009, %v160
  %v4022 = vmul.f32 %v4012, %v160
  %v4023 = vmul.f32 %v4015, %v160
  %v4024 = vmul.f32 %v4018, %v160
  %v4025 = vsub.f32 %v3995, %v4019
  %v4026 = vsub.f32 %v3996, %v4020
  %v4027 = vsub.f32 %v3997, %v4021
  %v4028 = vsub.f32 %v3998, %v4022
  %v4029 = vsub.f32 %v3999, %v4023
  %v4030 = vsub.f32 %v4000, %v4024
  %v4031 = vmul.f32 %v4025, %v4025
  %v4032 = vmul.f32 %v4026, %v4026
  %v4033 = vmul.f32 %v4027, %v4027
  %v4034 = vmul.f32 %v4028, %v4028
  %v4035 = vmul.f32 %v4029, %v4029
  %v4036 = vmul.f32 %v4030, %v4030
  %v4037 = vsel %vm144, %v4031, 0.0
  %4038 = vadd.xlane.f32.xlu0 %v4037
  %v4039 = vpop.xlane.xlu0 %4038
  %v4040 = vsel %vm144, %v4032, 0.0
  %4041 = vadd.xlane.f32.xlu0 %v4040
  %v4042 = vpop.xlane.xlu0 %4041
  %v4043 = vsel %vm144, %v4033, 0.0
  %4044 = vadd.xlane.f32.xlu0 %v4043
  %v4045 = vpop.xlane.xlu0 %4044
  %v4046 = vsel %vm144, %v4034, 0.0
  %4047 = vadd.xlane.f32.xlu0 %v4046
  %v4048 = vpop.xlane.xlu0 %4047
  %v4049 = vsel %vm144, %v4035, 0.0
  %4050 = vadd.xlane.f32.xlu0 %v4049
  %v4051 = vpop.xlane.xlu0 %4050
  %v4052 = vsel %vm144, %v4036, 0.0
  %4053 = vadd.xlane.f32.xlu0 %v4052
  %v4054 = vpop.xlane.xlu0 %4053
  %v4055 = vmul.f32 %v4039, %v160
  %v4056 = vmul.f32 %v4042, %v160
  %v4057 = vmul.f32 %v4045, %v160
  %v4058 = vmul.f32 %v4048, %v160
  %v4059 = vmul.f32 %v4051, %v160
  %v4060 = vmul.f32 %v4054, %v160
  %v4061 = vadd.f32 %v4055, 1e-06
  %v4062 = vadd.f32 %v4056, 1e-06
  %v4063 = vadd.f32 %v4057, 1e-06
  %v4064 = vadd.f32 %v4058, 1e-06
  %v4065 = vadd.f32 %v4059, 1e-06
  %v4066 = vadd.f32 %v4060, 1e-06
  %v4067 = vrsqrt.pop %v4061
  %v4068 = vrsqrt.pop %v4062
  %v4069 = vrsqrt.pop %v4063
  %v4070 = vrsqrt.pop %v4064
  %v4071 = vrsqrt.pop %v4065
  %v4072 = vrsqrt.pop %v4066
  %v4073 = vmul.f32 %v4025, %v4067
  %v4074 = vmul.f32 %v4026, %v4068
  %v4075 = vmul.f32 %v4027, %v4069
  %v4076 = vmul.f32 %v4028, %v4070
  %v4077 = vmul.f32 %v4029, %v4071
  %v4078 = vmul.f32 %v4030, %v4072
  %v4079 = vlaneseq
  %v4080 = vshrl.u32 %v4079, 7
  %v4081 = vsub.s32 2, %v4080
  %v4082 = vrot.slane %v32, %v4081
  %v4083 = vmul.f32 %v4073, %v4082
  %v4084 = vmul.f32 %v4074, %v4082
  %v4085 = vmul.f32 %v4075, %v4082
  %v4086 = vmul.f32 %v4076, %v4082
  %v4087 = vmul.f32 %v4077, %v4082
  %v4088 = vmul.f32 %v4078, %v4082
  %v4089 = vlaneseq
  %v4090 = vshrl.u32 %v4089, 7
  %v4091 = vsub.s32 3, %v4090
  %v4092 = vrot.slane %v32, %v4091
  %v4093 = vadd.f32 %v4083, %v4092
  %v4094 = vadd.f32 %v4084, %v4092
  %v4095 = vadd.f32 %v4085, %v4092
  %v4096 = vadd.f32 %v4086, %v4092
  %v4097 = vadd.f32 %v4087, %v4092
  %v4098 = vadd.f32 %v4088, %v4092
  %v4099 = vpack.c.bf16 %v4094, %v4093
  %v4100 = vpack.c.bf16 %v4096, %v4095
  %v4101 = vpack.c.bf16 %v4098, %v4097
  %s4102 = scalar_lea.vmem %s5, 16
  %v4103 = vld [vmem:[%s4102] sm:$0xf]
  %v4104 = vld [vmem:[%s4102 + $0x4] sm:$0xf]
  %v4105 = vld [vmem:[%s4102 + $0x8] sm:$0xf]
  %v4106 = vld [vmem:[%s4102 + $0xc] sm:$0xf]
  %v4107 = vlaneseq
  %v4108 = vshrl.u32 %v4107, 7
  %v4109 = vsub.s32 7, %v4108
  %v4110 = vrot.slane %v32, %v4109
  %v4115 = vunpack.c.l.b16 %v4103
  %v4116 = vunpack.c.l.b16 %v4104
  %v4117 = vunpack.c.l.b16 %v4105
  %v4118 = vunpack.c.l.b16 %v4106
  %v4119 = vpack.c.b16 %v4116, %v4115
  %v4120 = vpack.c.b16 %v4118, %v4117
  %v4124 = vsel %vm144, %v4099, 0
  %v4127 = vsel %vm144, %v4100, 0
  %v4130 = vsel %vm144, %v4101, 0
  %4132 = vmatprep.subr.bf16.mxu0 0
  %4133 = vmatpush1.bf16.msra.mxu0 %v4119
  %4134 = vmatprep.subr.bf16.mxu0 0
  %4135 = vmatpush1.bf16.msra.mxu0 %v4120
  %4136 = vmatprep.subr.bf16.mxu0 0
  %4137 = vmatpush1.bf16.msra.mxu0 0
  %4138 = vmatprep.subr.bf16.mxu0 0
  %4139 = vmatpush1.bf16.msra.mxu0 0
  %4140 = vmatprep.subr.bf16.mxu0 0
  %4141 = vmatpush1.bf16.msra.mxu0 0
  %4142 = vmatprep.subr.bf16.mxu0 0
  %4143 = vmatpush1.bf16.msra.mxu0 0
  %4144 = vmatprep.subr.bf16.mxu0 0
  %4145 = vmatpush1.bf16.msra.mxu0 0
  %4146 = vmatprep.subr.bf16.mxu0 0
  %4147 = vmatpush1.bf16.msra.mxu0 0
  %4148 = vmatprep.subr.bf16.mxu0 0
  %4149 = vmatpush1.bf16.msra.mxu0 0
  %4150 = vmatprep.subr.bf16.mxu0 0
  %4151 = vmatpush1.bf16.msra.mxu0 0
  %4152 = vmatprep.subr.bf16.mxu0 0
  %4153 = vmatpush1.bf16.msra.mxu0 0
  %4154 = vmatprep.subr.bf16.mxu0 0
  %4155 = vmatpush1.bf16.msra.mxu0 0
  %4156 = vmatprep.subr.bf16.mxu0 0
  %4157 = vmatpush1.bf16.msra.mxu0 0
  %4158 = vmatprep.subr.bf16.mxu0 0
  %4159 = vmatpush1.bf16.msra.mxu0 0
  %4160 = vmatprep.subr.bf16.mxu0 0
  %4161 = vmatpush1.bf16.msra.mxu0 0
  %4162 = vmatprep.subr.bf16.mxu0 0
  %4163 = vmatpush1.bf16.msra.mxu0 0
  %4164 = vmatprep.mubr.bf16.mxu0 0
  %4165 = vmatmul.mubr.bf16.gmra.mrb[0].mxu0 %v4124
  %v4166 = vpop.f32.mrb[0].mxu0
  %v4167 = vadd.f32 %v4110, %v4166
  %v4168 = vpop.f32.mrb[0].mxu0
  %v4169 = vpop.f32.mrb[0].mxu0
  %v4170 = vadd.f32 %v4110, %v4169
  %v4171 = vpop.f32.mrb[0].mxu0
  %4172 = vmatprep.mubr.bf16.mxu0 0
  %4173 = vmatmul.mubr.bf16.gmra.mrb[0].mxu0 %v4127
  %v4174 = vpop.f32.mrb[0].mxu0
  %v4175 = vadd.f32 %v4110, %v4174
  %v4176 = vpop.f32.mrb[0].mxu0
  %v4177 = vpop.f32.mrb[0].mxu0
  %v4178 = vadd.f32 %v4110, %v4177
  %v4179 = vpop.f32.mrb[0].mxu0
  %4180 = vmatprep.mubr.bf16.mxu0 0
  %4181 = vmatmul.mubr.bf16.gmra.mrb[0].mxu0 %v4130
  %v4182 = vpop.f32.mrb[0].mxu0
  %v4183 = vadd.f32 %v4110, %v4182
  %v4184 = vpop.f32.mrb[0].mxu0
  %v4185 = vpop.f32.mrb[0].mxu0
  %v4186 = vadd.f32 %v4110, %v4185
  %v4187 = vpop.f32.mrb[0].mxu0
  %4188 = vdwg.mxu0
  %v4189 = vmul.f32 %v4167, %v4167
  %v4190 = vmul.f32 %v4170, %v4170
  %v4191 = vmul.f32 %v4175, %v4175
  %v4192 = vmul.f32 %v4178, %v4178
  %v4193 = vmul.f32 %v4183, %v4183
  %v4194 = vmul.f32 %v4186, %v4186
  %v4195 = vmul.f32 %v4167, %v4189
  %v4196 = vmul.f32 %v4170, %v4190
  %v4197 = vmul.f32 %v4175, %v4191
  %v4198 = vmul.f32 %v4178, %v4192
  %v4199 = vmul.f32 %v4183, %v4193
  %v4200 = vmul.f32 %v4186, %v4194
  %v4201 = vmul.f32 %v4195, 0.044715
  %v4202 = vmul.f32 %v4196, 0.044715
  %v4203 = vmul.f32 %v4197, 0.044715
  %v4204 = vmul.f32 %v4198, 0.044715
  %v4205 = vmul.f32 %v4199, 0.044715
  %v4206 = vmul.f32 %v4200, 0.044715
  %v4207 = vadd.f32 %v4167, %v4201
  %v4208 = vadd.f32 %v4170, %v4202
  %v4209 = vadd.f32 %v4175, %v4203
  %v4210 = vadd.f32 %v4178, %v4204
  %v4211 = vadd.f32 %v4183, %v4205
  %v4212 = vadd.f32 %v4186, %v4206
  %v4213 = vmul.f32 %v4207, 0.7978846
  %v4214 = vmul.f32 %v4208, 0.7978846
  %v4215 = vmul.f32 %v4209, 0.7978846
  %v4216 = vmul.f32 %v4210, 0.7978846
  %v4217 = vmul.f32 %v4211, 0.7978846
  %v4218 = vmul.f32 %v4212, 0.7978846
  %v4219 = vtanh.pop %v4213
  %v4220 = vtanh.pop %v4214
  %v4221 = vtanh.pop %v4215
  %v4222 = vtanh.pop %v4216
  %v4223 = vtanh.pop %v4217
  %v4224 = vtanh.pop %v4218
  %v4225 = vadd.f32 %v4219, 1.0
  %v4226 = vadd.f32 %v4220, 1.0
  %v4227 = vadd.f32 %v4221, 1.0
  %v4228 = vadd.f32 %v4222, 1.0
  %v4229 = vadd.f32 %v4223, 1.0
  %v4230 = vadd.f32 %v4224, 1.0
  %v4231 = vmul.f32 %v4225, 0.5
  %v4232 = vmul.f32 %v4226, 0.5
  %v4233 = vmul.f32 %v4227, 0.5
  %v4234 = vmul.f32 %v4228, 0.5
  %v4235 = vmul.f32 %v4229, 0.5
  %v4236 = vmul.f32 %v4230, 0.5
  %v4237 = vmul.f32 %v4167, %v4231
  %v4238 = vmul.f32 %v4170, %v4232
  %v4239 = vmul.f32 %v4175, %v4233
  %v4240 = vmul.f32 %v4178, %v4234
  %v4241 = vmul.f32 %v4183, %v4235
  %v4242 = vmul.f32 %v4186, %v4236
  %v4243 = vpack.c.bf16 %v4238, %v4237
  %v4244 = vpack.c.bf16 %v4240, %v4239
  %v4245 = vpack.c.bf16 %v4242, %v4241
  %s4246 = scalar_lea.vmem %s6, 64
  %v4247 = vld [vmem:[%s4246] sm:$0xf]
  %v4248 = vld [vmem:[%s4246 + $0x4] sm:$0xf]
  %v4249 = vld [vmem:[%s4246 + $0x8] sm:$0xf]
  %v4250 = vld [vmem:[%s4246 + $0xc] sm:$0xf]
  %v4251 = vld [vmem:[%s4246 + $0x10] sm:$0xf]
  %v4252 = vld [vmem:[%s4246 + $0x14] sm:$0xf]
  %v4253 = vld [vmem:[%s4246 + $0x18] sm:$0xf]
  %v4254 = vld [vmem:[%s4246 + $0x1c] sm:$0xf]
  %v4255 = vld [vmem:[%s4246 + $0x20] sm:$0xf]
  %v4256 = vld [vmem:[%s4246 + $0x24] sm:$0xf]
  %v4257 = vld [vmem:[%s4246 + $0x28] sm:$0xf]
  %v4258 = vld [vmem:[%s4246 + $0x2c] sm:$0xf]
  %v4259 = vld [vmem:[%s4246 + $0x30] sm:$0xf]
  %v4260 = vld [vmem:[%s4246 + $0x34] sm:$0xf]
  %v4261 = vld [vmem:[%s4246 + $0x38] sm:$0xf]
  %v4262 = vld [vmem:[%s4246 + $0x3c] sm:$0xf]
  %v4279 = vunpack.c.l.b16 %v4247
  %v4280 = vunpack.c.l.b16 %v4248
  %v4281 = vunpack.c.l.b16 %v4249
  %v4282 = vunpack.c.l.b16 %v4250
  %v4283 = vunpack.c.l.b16 %v4251
  %v4284 = vunpack.c.l.b16 %v4252
  %v4285 = vunpack.c.l.b16 %v4253
  %v4286 = vunpack.c.l.b16 %v4254
  %v4287 = vunpack.c.l.b16 %v4255
  %v4288 = vunpack.c.l.b16 %v4256
  %v4289 = vunpack.c.l.b16 %v4257
  %v4290 = vunpack.c.l.b16 %v4258
  %v4291 = vunpack.c.l.b16 %v4259
  %v4292 = vunpack.c.l.b16 %v4260
  %v4293 = vunpack.c.l.b16 %v4261
  %v4294 = vunpack.c.l.b16 %v4262
  %v4295 = vpack.c.b16 %v4280, %v4279
  %v4296 = vpack.c.b16 %v4282, %v4281
  %v4297 = vpack.c.b16 %v4284, %v4283
  %v4298 = vpack.c.b16 %v4286, %v4285
  %v4299 = vpack.c.b16 %v4288, %v4287
  %v4300 = vpack.c.b16 %v4290, %v4289
  %v4301 = vpack.c.b16 %v4292, %v4291
  %v4302 = vpack.c.b16 %v4294, %v4293
  %4311 = vmatprep.subr.bf16.mxu0 0
  %4312 = vmatpush1.bf16.msra.mxu0 %v4295
  %4313 = vmatprep.subr.bf16.mxu0 0
  %4314 = vmatpush1.bf16.msra.mxu0 %v4296
  %4315 = vmatprep.subr.bf16.mxu0 0
  %4316 = vmatpush1.bf16.msra.mxu0 %v4297
  %4317 = vmatprep.subr.bf16.mxu0 0
  %4318 = vmatpush1.bf16.msra.mxu0 %v4298
  %4319 = vmatprep.subr.bf16.mxu0 0
  %4320 = vmatpush1.bf16.msra.mxu0 %v4299
  %4321 = vmatprep.subr.bf16.mxu0 0
  %4322 = vmatpush1.bf16.msra.mxu0 %v4300
  %4323 = vmatprep.subr.bf16.mxu0 0
  %4324 = vmatpush1.bf16.msra.mxu0 %v4301
  %4325 = vmatprep.subr.bf16.mxu0 0
  %4326 = vmatpush1.bf16.msra.mxu0 %v4302
  %4327 = vmatprep.subr.bf16.mxu0 0
  %4328 = vmatpush1.bf16.msra.mxu0 0
  %4329 = vmatprep.subr.bf16.mxu0 0
  %4330 = vmatpush1.bf16.msra.mxu0 0
  %4331 = vmatprep.subr.bf16.mxu0 0
  %4332 = vmatpush1.bf16.msra.mxu0 0
  %4333 = vmatprep.subr.bf16.mxu0 0
  %4334 = vmatpush1.bf16.msra.mxu0 0
  %4335 = vmatprep.subr.bf16.mxu0 0
  %4336 = vmatpush1.bf16.msra.mxu0 0
  %4337 = vmatprep.subr.bf16.mxu0 0
  %4338 = vmatpush1.bf16.msra.mxu0 0
  %4339 = vmatprep.subr.bf16.mxu0 0
  %4340 = vmatpush1.bf16.msra.mxu0 0
  %4341 = vmatprep.subr.bf16.mxu0 0
  %4342 = vmatpush1.bf16.msra.mxu0 0
  %4343 = vmatprep.mubr.bf16.mxu0 0
  %4344 = vmatmul.mubr.bf16.gmra.mrb[0].mxu0 %v4243
  %v4345 = vpop.f32.mrb[0].mxu0
  %v4346 = vadd.f32 0.0, %v4345
  %v4347 = vpop.f32.mrb[0].mxu0
  %v4348 = vpop.f32.mrb[0].mxu0
  %v4349 = vadd.f32 0.0, %v4348
  %v4350 = vpop.f32.mrb[0].mxu0
  %4351 = vmatprep.mubr.bf16.mxu0 0
  %4352 = vmatmul.mubr.bf16.gmra.mrb[0].mxu0 %v4244
  %v4353 = vpop.f32.mrb[0].mxu0
  %v4354 = vadd.f32 0.0, %v4353
  %v4355 = vpop.f32.mrb[0].mxu0
  %v4356 = vpop.f32.mrb[0].mxu0
  %v4357 = vadd.f32 0.0, %v4356
  %v4358 = vpop.f32.mrb[0].mxu0
  %4359 = vmatprep.mubr.bf16.mxu0 0
  %4360 = vmatmul.mubr.bf16.gmra.mrb[0].mxu0 %v4245
  %v4361 = vpop.f32.mrb[0].mxu0
  %v4362 = vadd.f32 0.0, %v4361
  %v4363 = vpop.f32.mrb[0].mxu0
  %v4364 = vpop.f32.mrb[0].mxu0
  %v4365 = vadd.f32 0.0, %v4364
  %v4366 = vpop.f32.mrb[0].mxu0
  %4367 = vdwg.mxu0
  %v4368 = vadd.f32 %v3995, %v4346
  %v4369 = vadd.f32 %v3996, %v4349
  %v4370 = vadd.f32 %v3997, %v4354
  %v4371 = vadd.f32 %v3998, %v4357
  %v4372 = vadd.f32 %v3999, %v4362
  %v4373 = vadd.f32 %v4000, %v4365
  %v4374 = vlaneseq
  %v4375 = vshrl.u32 %v4374, 7
  %v4376 = vsub.s32 5, %v4375
  %v4377 = vrot.slane %v32, %v4376
  %v4378 = vadd.f32 %v4368, %v4377
  %v4379 = vadd.f32 %v4369, %v4377
  %v4380 = vadd.f32 %v4370, %v4377
  %v4381 = vadd.f32 %v4371, %v4377
  %v4382 = vadd.f32 %v4372, %v4377
  %v4383 = vadd.f32 %v4373, %v4377
  %v4384 = vsel %vm144, %v4378, 0.0
  %4385 = vadd.xlane.f32.xlu0 %v4384
  %v4386 = vpop.xlane.xlu0 %4385
  %v4387 = vsel %vm144, %v4379, 0.0
  %4388 = vadd.xlane.f32.xlu0 %v4387
  %v4389 = vpop.xlane.xlu0 %4388
  %v4390 = vsel %vm144, %v4380, 0.0
  %4391 = vadd.xlane.f32.xlu0 %v4390
  %v4392 = vpop.xlane.xlu0 %4391
  %v4393 = vsel %vm144, %v4381, 0.0
  %4394 = vadd.xlane.f32.xlu0 %v4393
  %v4395 = vpop.xlane.xlu0 %4394
  %v4396 = vsel %vm144, %v4382, 0.0
  %4397 = vadd.xlane.f32.xlu0 %v4396
  %v4398 = vpop.xlane.xlu0 %4397
  %v4399 = vsel %vm144, %v4383, 0.0
  %4400 = vadd.xlane.f32.xlu0 %v4399
  %v4401 = vpop.xlane.xlu0 %4400
  %v4402 = vmul.f32 %v4386, %v160
  %v4403 = vmul.f32 %v4389, %v160
  %v4404 = vmul.f32 %v4392, %v160
  %v4405 = vmul.f32 %v4395, %v160
  %v4406 = vmul.f32 %v4398, %v160
  %v4407 = vmul.f32 %v4401, %v160
  %v4408 = vsub.f32 %v4378, %v4402
  %v4409 = vsub.f32 %v4379, %v4403
  %v4410 = vsub.f32 %v4380, %v4404
  %v4411 = vsub.f32 %v4381, %v4405
  %v4412 = vsub.f32 %v4382, %v4406
  %v4413 = vsub.f32 %v4383, %v4407
  %v4414 = vmul.f32 %v4408, %v4408
  %v4415 = vmul.f32 %v4409, %v4409
  %v4416 = vmul.f32 %v4410, %v4410
  %v4417 = vmul.f32 %v4411, %v4411
  %v4418 = vmul.f32 %v4412, %v4412
  %v4419 = vmul.f32 %v4413, %v4413
  %v4420 = vsel %vm144, %v4414, 0.0
  %4421 = vadd.xlane.f32.xlu0 %v4420
  %v4422 = vpop.xlane.xlu0 %4421
  %v4423 = vsel %vm144, %v4415, 0.0
  %4424 = vadd.xlane.f32.xlu0 %v4423
  %v4425 = vpop.xlane.xlu0 %4424
  %v4426 = vsel %vm144, %v4416, 0.0
  %4427 = vadd.xlane.f32.xlu0 %v4426
  %v4428 = vpop.xlane.xlu0 %4427
  %v4429 = vsel %vm144, %v4417, 0.0
  %4430 = vadd.xlane.f32.xlu0 %v4429
  %v4431 = vpop.xlane.xlu0 %4430
  %v4432 = vsel %vm144, %v4418, 0.0
  %4433 = vadd.xlane.f32.xlu0 %v4432
  %v4434 = vpop.xlane.xlu0 %4433
  %v4435 = vsel %vm144, %v4419, 0.0
  %4436 = vadd.xlane.f32.xlu0 %v4435
  %v4437 = vpop.xlane.xlu0 %4436
  %v4438 = vmul.f32 %v4422, %v160
  %v4439 = vmul.f32 %v4425, %v160
  %v4440 = vmul.f32 %v4428, %v160
  %v4441 = vmul.f32 %v4431, %v160
  %v4442 = vmul.f32 %v4434, %v160
  %v4443 = vmul.f32 %v4437, %v160
  %v4444 = vadd.f32 %v4438, 1e-06
  %v4445 = vadd.f32 %v4439, 1e-06
  %v4446 = vadd.f32 %v4440, 1e-06
  %v4447 = vadd.f32 %v4441, 1e-06
  %v4448 = vadd.f32 %v4442, 1e-06
  %v4449 = vadd.f32 %v4443, 1e-06
  %v4450 = vrsqrt.pop %v4444
  %v4451 = vrsqrt.pop %v4445
  %v4452 = vrsqrt.pop %v4446
  %v4453 = vrsqrt.pop %v4447
  %v4454 = vrsqrt.pop %v4448
  %v4455 = vrsqrt.pop %v4449
  %v4456 = vmul.f32 %v4408, %v4450
  %v4457 = vmul.f32 %v4409, %v4451
  %v4458 = vmul.f32 %v4410, %v4452
  %v4459 = vmul.f32 %v4411, %v4453
  %v4460 = vmul.f32 %v4412, %v4454
  %v4461 = vmul.f32 %v4413, %v4455
  %v4462 = vlaneseq
  %v4463 = vshrl.u32 %v4462, 7
  %v4464 = vsub.s32 4, %v4463
  %v4465 = vrot.slane %v30, %v4464
  %v4466 = vmul.f32 %v4456, %v4465
  %v4467 = vmul.f32 %v4457, %v4465
  %v4468 = vmul.f32 %v4458, %v4465
  %v4469 = vmul.f32 %v4459, %v4465
  %v4470 = vmul.f32 %v4460, %v4465
  %v4471 = vmul.f32 %v4461, %v4465
  %v4472 = vlaneseq
  %v4473 = vshrl.u32 %v4472, 7
  %v4474 = vsub.s32 5, %v4473
  %v4475 = vrot.slane %v30, %v4474
  %v4476 = vadd.f32 %v4466, %v4475
  %v4477 = vadd.f32 %v4467, %v4475
  %v4478 = vadd.f32 %v4468, %v4475
  %v4479 = vadd.f32 %v4469, %v4475
  %v4480 = vadd.f32 %v4470, %v4475
  %v4481 = vadd.f32 %v4471, %v4475
  %4482 = vst.msk [vmem:[%s7] sm:$0xff] %vm144, %v4476
  %4483 = vst.msk [vmem:[%s7 + $0x8] sm:$0xff] %vm144, %v4477
  %4484 = vst.msk [vmem:[%s7 + $0x10] sm:$0xff] %vm144, %v4478
  %4485 = vst.msk [vmem:[%s7 + $0x18] sm:$0xff] %vm144, %v4479
  %4486 = vst.msk [vmem:[%s7 + $0x20] sm:$0xff] %vm144, %v4480
  %4487 = vst.msk [vmem:[%s7 + $0x28] sm:$0xff] %vm144, %v4481
  // Predicated region
  $region30: #{encoder_forward.1} parent=0 // pred_check
    _
  $region31: #{encoder_forward.1} parent=0 // pred_check_branch
    %4489 = sbr.rel (0) target = $region33
  $region32: #{encoder_forward.1} parent=0 // pred_region
    _
  $region33: #{encoder_forward.1} parent=0 // pred_fallthru
    _
  // Predicated region
  $region34: #{encoder_forward.1} parent=0 // pred_check
    _
  $region35: #{encoder_forward.1} parent=0 // pred_check_branch
    %4491 = sbr.rel (0) target = $region37
  $region36: #{encoder_forward.1} parent=0 // pred_region
    _
  $region37: #{encoder_forward.1} parent=0 // pred_fallthru
    _

</llo_original>
